<compile_context>
chip_gen: v7x
topology: tpu7x:2x2x1
jax: 0.10.0
libtpu: 0.0.40
codegen_flags: <defaults>
</compile_context>

<pallas_src>
import jax
import jax.numpy as jnp
from jax.experimental import pallas as pl
from jax.experimental.pallas import tpu as pltpu


def _uniform_bins_kernel(near_ref, far_ref, bins_ref):
    """One ray tile, rays-major layout.

    near_ref: (TR, 1)  f32 per-ray near plane
    far_ref:  (TR, 1)  f32 per-ray far plane
    bins_ref: (TR, NB) f32 bin edges, NB = num_samples + 1
    """
    ns = bins_ref.shape[1] - 1
    inv_ns = 1.0 / float(ns)

    near = near_ref[...]            # (TR, 1)
    far = far_ref[...]              # (TR, 1)
    delta = far - near              # (TR, 1)

    # bins[r, j] = near[r] + (j / ns) * (far[r] - near[r]).
    # Iota/mul/add ride the VALU slot, which has large slack in this
    # store/DMA-bound kernel.
    j = jax.lax.broadcasted_iota(jnp.int32, bins_ref.shape, 1)   # (TR, NB)
    bins = near + j.astype(jnp.float32) * inv_ns * delta
    # Force the last edge to exactly `far` (linspace endpoint can differ by
    # one f32 ulp otherwise; downstream code may compare ends[:, -1] == far).
    bins_ref[...] = jnp.where(j == ns, far, bins)


def uniform_sampler_forward(near, far, num_samples, *, ray_tile=16384):
    """Pallas-backed uniform ray sampler (Sampler.forward semantics).

    Args:
      near: (num_rays, 1) or (num_rays,) f32 per-ray near plane
      far:  same shape as `near`, per-ray far plane
      num_samples: samples per ray
      ray_tile: max rays per grid step (sublane axis of the kernel tiles)

    Returns:
      bins: (num_rays, num_samples + 1) f32 euclidean bin edges.
        Frustum starts/ends are consumer-side slices of `bins`
        (see `frustum_starts_ends`); they are not materialized here to avoid
        ~3x redundant HBM writeback.
    """
    ns = int(num_samples)
    nb = ns + 1
    near = jnp.reshape(near, (-1, 1)).astype(jnp.float32)   # (R, 1) (no-op if already)
    far = jnp.reshape(far, (-1, 1)).astype(jnp.float32)     # (R, 1)
    num_rays = near.shape[0]

    # Balanced, sublane-aligned (multiple-of-8) ray tiles.  Single grid step
    # whenever the whole batch fits `ray_tile`; otherwise split into the
    # minimum number of near-equal tiles (keeps padding waste small and lets
    # megacore shard steps on v7x via dimension_semantics=("parallel",)).
    ray_tile = max(8, (int(ray_tile) // 8) * 8)
    steps = max(1, -(-num_rays // ray_tile))        # cdiv
    tile_r = -(-num_rays // steps)                  # balanced per-step rays
    tile_r = ((tile_r + 7) // 8) * 8                # sublane-aligned
    r_pad = steps * tile_r

    if r_pad != num_rays:
        # Padded tail rays compute with near = far = 0 (harmless), sliced off
        # below.  The common case (R multiple of 8, R <= ray_tile) skips this.
        pad = ((0, r_pad - num_rays), (0, 0))
        near_p = jnp.pad(near, pad)
        far_p = jnp.pad(far, pad)
    else:
        near_p, far_p = near, far

    bins = pl.pallas_call(
        _uniform_bins_kernel,
        out_shape=jax.ShapeDtypeStruct((r_pad, nb), jnp.float32),
        grid_spec=pltpu.PrefetchScalarGridSpec(
            num_scalar_prefetch=0,
            grid=(steps,),
            in_specs=[
                pl.BlockSpec((tile_r, 1), lambda i: (i, 0)),
                pl.BlockSpec((tile_r, 1), lambda i: (i, 0)),
            ],
            out_specs=pl.BlockSpec((tile_r, nb), lambda i: (i, 0)),
        ),
        compiler_params=pltpu.CompilerParams(
            dimension_semantics=("parallel",)
        ),
    )(near_p, far_p)

    if r_pad != num_rays:
        bins = bins[:num_rays]
    return bins


def frustum_starts_ends(bins):
    """Consumer-side slices: nerfstudio Frustums' (R, S, 1) starts/ends."""
    return bins[:, :-1, None], bins[:, 1:, None]


if __name__ == "__main__":
    key = jax.random.PRNGKey(0)
    k_near, k_span = jax.random.split(key)

    num_rays = 2048          # typical ray batch; single grid step
    num_samples = 32         # Sampler(num_samples=32)

    near = jax.random.uniform(k_near, (num_rays, 1), jnp.float32, 0.05, 0.5)
    far = near + jax.random.uniform(
        k_span, (num_rays, 1), jnp.float32, 1.0, 4.0
    )

    bins = uniform_sampler_forward(near, far, num_samples)
    jax.block_until_ready(bins)

    # Reference check against plain JAX linspace semantics.
    t_ref = jnp.linspace(0.0, 1.0, num_samples + 1, dtype=jnp.float32)[None]
    bins_ref = near + t_ref * (far - near)

    starts, ends = frustum_starts_ends(bins)
    jax.block_until_ready((starts, ends))

    assert bins.shape == (num_rays, num_samples + 1)
    assert starts.shape == (num_rays, num_samples, 1)
    assert ends.shape == (num_rays, num_samples, 1)
    assert jnp.allclose(bins, bins_ref, atol=1e-5, rtol=1e-5)
    assert jnp.allclose(starts[..., 0], bins_ref[:, :-1], atol=1e-5, rtol=1e-5)
    assert jnp.allclose(ends[..., 0], bins_ref[:, 1:], atol=1e-5, rtol=1e-5)
    # Exact endpoint: last bin edge is forced to `far` in-kernel.
    assert jnp.array_equal(bins[:, -1:], far)

    print("KERNEL_OK")
</pallas_src>

<mosaic_0001>
module attributes {stable_mosaic.version = 11 : i64} {
  func.func @_uniform_bins_kernel(%arg0: i32, %arg1: memref<2048x1xf32, #tpu.memory_space<vmem>>, %arg2: memref<2048x1xf32, #tpu.memory_space<vmem>>, %arg3: memref<2048x33xf32, #tpu.memory_space<vmem>>) attributes {dimension_semantics = [#tpu.dimension_semantics<parallel>], iteration_bounds = array<i64: 1>, scalar_prefetch = 0 : i64, scratch_operands = 0 : i64, tpu.core_type = #tpu.core_type<tc>, window_params = [{transform_indices = @transform_0, window_bounds = array<i64: 2048, 1>}, {transform_indices = @transform_1, window_bounds = array<i64: 2048, 1>}, {transform_indices = @transform_2, window_bounds = array<i64: 2048, 33>}]} {
    %c0 = arith.constant 0 : index
    %c0_0 = arith.constant 0 : index
    %0 = vector.load %arg1[%c0, %c0_0] : memref<2048x1xf32, #tpu.memory_space<vmem>>, vector<2048x1xf32>
    %c0_1 = arith.constant 0 : index
    %c0_2 = arith.constant 0 : index
    %1 = vector.load %arg2[%c0_1, %c0_2] : memref<2048x1xf32, #tpu.memory_space<vmem>>, vector<2048x1xf32>
    %2 = arith.subf %1, %0 : vector<2048x1xf32>
    %3 = tpu.iota {dimensions = array<i32: 1>} : vector<2048x33xi32>
    %4 = arith.sitofp %3 : vector<2048x33xi32> to vector<2048x33xf32>
    %cst = arith.constant 3.125000e-02 : f32
    %5 = vector.broadcast %cst : f32 to vector<2048x33xf32>
    %6 = arith.mulf %4, %5 : vector<2048x33xf32>
    %7 = vector.broadcast %2 : vector<2048x1xf32> to vector<2048x33xf32>
    %8 = arith.mulf %6, %7 : vector<2048x33xf32>
    %9 = vector.broadcast %0 : vector<2048x1xf32> to vector<2048x33xf32>
    %10 = arith.addf %9, %8 : vector<2048x33xf32>
    %c32_i32 = arith.constant 32 : i32
    %11 = vector.broadcast %c32_i32 : i32 to vector<2048x33xi32>
    %12 = arith.cmpi eq, %3, %11 : vector<2048x33xi32>
    %13 = vector.shape_cast %1 : vector<2048x1xf32> to vector<2048x1xf32>
    %14 = vector.broadcast %13 : vector<2048x1xf32> to vector<2048x33xf32>
    %15 = arith.select %12, %14, %10 : vector<2048x33xi1>, vector<2048x33xf32>
    %c0_3 = arith.constant 0 : index
    %c0_4 = arith.constant 0 : index
    %16 = vector.load %arg3[%c0_3, %c0_4] : memref<2048x33xf32, #tpu.memory_space<vmem>>, vector<2048x33xf32>
    tpu.vector_store %arg3[%c0_3, %c0_4], %15 {strides = array<i32>} : memref<2048x33xf32, #tpu.memory_space<vmem>>, vector<2048x33xf32>,
    return
  }
  func.func @transform_0(%arg0: i32) -> (i32, i32) {
    %c0_i32 = arith.constant 0 : i32
    %c0_i32_0 = arith.constant 0 : i32
    return %arg0, %c0_i32 : i32, i32
  }
  func.func @transform_1(%arg0: i32) -> (i32, i32) {
    %c0_i32 = arith.constant 0 : i32
    %c0_i32_0 = arith.constant 0 : i32
    return %arg0, %c0_i32 : i32, i32
  }
  func.func @transform_2(%arg0: i32) -> (i32, i32) {
    %c0_i32 = arith.constant 0 : i32
    %c0_i32_0 = arith.constant 0 : i32
    return %arg0, %c0_i32 : i32, i32
  }
}

</mosaic_0001>

<llo_original>
// kernel: tpu_custom_call.1
$region0: #{tpu_custom_call.1}
  #allocation0 [shape = 'u32[]', space=smem, size = 0x4, offset = 0x4, fixed_abs, tag = 'smem constant byte address 0x4 - core index']
  #allocation1 [shape = 'u32[144,128]{1,0:T(1,128)}', space=vmem, size = 0x12000, scoped, tag = 'internal scratch']
  %s0 = inlined_call_operand.vmem [shape: f32[2048,1], index: 0, kind: input, shape index: {}]
  %s1 = inlined_call_operand.vmem [shape: f32[2048,1], index: 1, kind: input, shape index: {}]
  %s2 = inlined_call_operand.vmem [shape: f32[2048,33], index: 2, kind: output, shape index: {}]
  %s3 = sld [smem:[#allocation0]]
  $region18: #{tpu_custom_call.1} parent=0
    _
  %s5 = ssub.s32 1, %s3
  %s6 = scalar_select 0, %s5, %s3
  // Predicated region
  $region2: #{tpu_custom_call.1} parent=0 // pred_check
    _
  $region3: #{tpu_custom_call.1} parent=0 // pred_check_branch
    %8 = sbr.rel (0) target = $region5
  $region4: #{tpu_custom_call.1} parent=0 // pred_region
    _
  $region5: #{tpu_custom_call.1} parent=0 // pred_fallthru
    _
  // Predicated region
  $region6: #{tpu_custom_call.1} parent=0 // pred_check
    _
  $region7: #{tpu_custom_call.1} parent=0 // pred_check_branch
    %10 = sbr.rel (0) target = $region9
  $region8: #{tpu_custom_call.1} parent=0 // pred_region
    _
  $region9: #{tpu_custom_call.1} parent=0 // pred_fallthru
    _
  %v11 = vld [vmem:[%s0] sm:$0xff]
  %v12 = vld [vmem:[%s0 + $0x8] sm:$0xff]
  %v13 = vld [vmem:[%s0 + $0x10] sm:$0xff]
  %v14 = vld [vmem:[%s0 + $0x18] sm:$0xff]
  %v15 = vld [vmem:[%s0 + $0x20] sm:$0xff]
  %v16 = vld [vmem:[%s0 + $0x28] sm:$0xff]
  %v17 = vld [vmem:[%s0 + $0x30] sm:$0xff]
  %v18 = vld [vmem:[%s0 + $0x38] sm:$0xff]
  %v19 = vld [vmem:[%s0 + $0x40] sm:$0xff]
  %v20 = vld [vmem:[%s0 + $0x48] sm:$0xff]
  %v21 = vld [vmem:[%s0 + $0x50] sm:$0xff]
  %v22 = vld [vmem:[%s0 + $0x58] sm:$0xff]
  %v23 = vld [vmem:[%s0 + $0x60] sm:$0xff]
  %v24 = vld [vmem:[%s0 + $0x68] sm:$0xff]
  %v25 = vld [vmem:[%s0 + $0x70] sm:$0xff]
  %v26 = vld [vmem:[%s0 + $0x78] sm:$0xff]
  %v27 = vld [vmem:[%s0 + $0x80] sm:$0xff]
  %v28 = vld [vmem:[%s0 + $0x88] sm:$0xff]
  %v29 = vld [vmem:[%s0 + $0x90] sm:$0xff]
  %v30 = vld [vmem:[%s0 + $0x98] sm:$0xff]
  %v31 = vld [vmem:[%s0 + $0xa0] sm:$0xff]
  %v32 = vld [vmem:[%s0 + $0xa8] sm:$0xff]
  %v33 = vld [vmem:[%s0 + $0xb0] sm:$0xff]
  %v34 = vld [vmem:[%s0 + $0xb8] sm:$0xff]
  %v35 = vld [vmem:[%s0 + $0xc0] sm:$0xff]
  %v36 = vld [vmem:[%s0 + $0xc8] sm:$0xff]
  %v37 = vld [vmem:[%s0 + $0xd0] sm:$0xff]
  %v38 = vld [vmem:[%s0 + $0xd8] sm:$0xff]
  %v39 = vld [vmem:[%s0 + $0xe0] sm:$0xff]
  %v40 = vld [vmem:[%s0 + $0xe8] sm:$0xff]
  %v41 = vld [vmem:[%s0 + $0xf0] sm:$0xff]
  %v42 = vld [vmem:[%s0 + $0xf8] sm:$0xff]
  %v43 = vld [vmem:[%s0 + $0x100] sm:$0xff]
  %v44 = vld [vmem:[%s0 + $0x108] sm:$0xff]
  %v45 = vld [vmem:[%s0 + $0x110] sm:$0xff]
  %v46 = vld [vmem:[%s0 + $0x118] sm:$0xff]
  %v47 = vld [vmem:[%s0 + $0x120] sm:$0xff]
  %v48 = vld [vmem:[%s0 + $0x128] sm:$0xff]
  %v49 = vld [vmem:[%s0 + $0x130] sm:$0xff]
  %v50 = vld [vmem:[%s0 + $0x138] sm:$0xff]
  %v51 = vld [vmem:[%s0 + $0x140] sm:$0xff]
  %v52 = vld [vmem:[%s0 + $0x148] sm:$0xff]
  %v53 = vld [vmem:[%s0 + $0x150] sm:$0xff]
  %v54 = vld [vmem:[%s0 + $0x158] sm:$0xff]
  %v55 = vld [vmem:[%s0 + $0x160] sm:$0xff]
  %v56 = vld [vmem:[%s0 + $0x168] sm:$0xff]
  %v57 = vld [vmem:[%s0 + $0x170] sm:$0xff]
  %v58 = vld [vmem:[%s0 + $0x178] sm:$0xff]
  %v59 = vld [vmem:[%s0 + $0x180] sm:$0xff]
  %v60 = vld [vmem:[%s0 + $0x188] sm:$0xff]
  %v61 = vld [vmem:[%s0 + $0x190] sm:$0xff]
  %v62 = vld [vmem:[%s0 + $0x198] sm:$0xff]
  %v63 = vld [vmem:[%s0 + $0x1a0] sm:$0xff]
  %v64 = vld [vmem:[%s0 + $0x1a8] sm:$0xff]
  %v65 = vld [vmem:[%s0 + $0x1b0] sm:$0xff]
  %v66 = vld [vmem:[%s0 + $0x1b8] sm:$0xff]
  %v67 = vld [vmem:[%s0 + $0x1c0] sm:$0xff]
  %v68 = vld [vmem:[%s0 + $0x1c8] sm:$0xff]
  %v69 = vld [vmem:[%s0 + $0x1d0] sm:$0xff]
  %v70 = vld [vmem:[%s0 + $0x1d8] sm:$0xff]
  %v71 = vld [vmem:[%s0 + $0x1e0] sm:$0xff]
  %v72 = vld [vmem:[%s0 + $0x1e8] sm:$0xff]
  %v73 = vld [vmem:[%s0 + $0x1f0] sm:$0xff]
  %v74 = vld [vmem:[%s0 + $0x1f8] sm:$0xff]
  %v75 = vld [vmem:[%s0 + $0x200] sm:$0xff]
  %v76 = vld [vmem:[%s0 + $0x208] sm:$0xff]
  %v77 = vld [vmem:[%s0 + $0x210] sm:$0xff]
  %v78 = vld [vmem:[%s0 + $0x218] sm:$0xff]
  %v79 = vld [vmem:[%s0 + $0x220] sm:$0xff]
  %v80 = vld [vmem:[%s0 + $0x228] sm:$0xff]
  %v81 = vld [vmem:[%s0 + $0x230] sm:$0xff]
  %v82 = vld [vmem:[%s0 + $0x238] sm:$0xff]
  %v83 = vld [vmem:[%s0 + $0x240] sm:$0xff]
  %v84 = vld [vmem:[%s0 + $0x248] sm:$0xff]
  %v85 = vld [vmem:[%s0 + $0x250] sm:$0xff]
  %v86 = vld [vmem:[%s0 + $0x258] sm:$0xff]
  %v87 = vld [vmem:[%s0 + $0x260] sm:$0xff]
  %v88 = vld [vmem:[%s0 + $0x268] sm:$0xff]
  %v89 = vld [vmem:[%s0 + $0x270] sm:$0xff]
  %v90 = vld [vmem:[%s0 + $0x278] sm:$0xff]
  %v91 = vld [vmem:[%s0 + $0x280] sm:$0xff]
  %v92 = vld [vmem:[%s0 + $0x288] sm:$0xff]
  %v93 = vld [vmem:[%s0 + $0x290] sm:$0xff]
  %v94 = vld [vmem:[%s0 + $0x298] sm:$0xff]
  %v95 = vld [vmem:[%s0 + $0x2a0] sm:$0xff]
  %v96 = vld [vmem:[%s0 + $0x2a8] sm:$0xff]
  %v97 = vld [vmem:[%s0 + $0x2b0] sm:$0xff]
  %v98 = vld [vmem:[%s0 + $0x2b8] sm:$0xff]
  %v99 = vld [vmem:[%s0 + $0x2c0] sm:$0xff]
  %v100 = vld [vmem:[%s0 + $0x2c8] sm:$0xff]
  %v101 = vld [vmem:[%s0 + $0x2d0] sm:$0xff]
  %v102 = vld [vmem:[%s0 + $0x2d8] sm:$0xff]
  %v103 = vld [vmem:[%s0 + $0x2e0] sm:$0xff]
  %v104 = vld [vmem:[%s0 + $0x2e8] sm:$0xff]
  %v105 = vld [vmem:[%s0 + $0x2f0] sm:$0xff]
  %v106 = vld [vmem:[%s0 + $0x2f8] sm:$0xff]
  %v107 = vld [vmem:[%s0 + $0x300] sm:$0xff]
  %v108 = vld [vmem:[%s0 + $0x308] sm:$0xff]
  %v109 = vld [vmem:[%s0 + $0x310] sm:$0xff]
  %v110 = vld [vmem:[%s0 + $0x318] sm:$0xff]
  %v111 = vld [vmem:[%s0 + $0x320] sm:$0xff]
  %v112 = vld [vmem:[%s0 + $0x328] sm:$0xff]
  %v113 = vld [vmem:[%s0 + $0x330] sm:$0xff]
  %v114 = vld [vmem:[%s0 + $0x338] sm:$0xff]
  %v115 = vld [vmem:[%s0 + $0x340] sm:$0xff]
  %v116 = vld [vmem:[%s0 + $0x348] sm:$0xff]
  %v117 = vld [vmem:[%s0 + $0x350] sm:$0xff]
  %v118 = vld [vmem:[%s0 + $0x358] sm:$0xff]
  %v119 = vld [vmem:[%s0 + $0x360] sm:$0xff]
  %v120 = vld [vmem:[%s0 + $0x368] sm:$0xff]
  %v121 = vld [vmem:[%s0 + $0x370] sm:$0xff]
  %v122 = vld [vmem:[%s0 + $0x378] sm:$0xff]
  %v123 = vld [vmem:[%s0 + $0x380] sm:$0xff]
  %v124 = vld [vmem:[%s0 + $0x388] sm:$0xff]
  %v125 = vld [vmem:[%s0 + $0x390] sm:$0xff]
  %v126 = vld [vmem:[%s0 + $0x398] sm:$0xff]
  %v127 = vld [vmem:[%s0 + $0x3a0] sm:$0xff]
  %v128 = vld [vmem:[%s0 + $0x3a8] sm:$0xff]
  %v129 = vld [vmem:[%s0 + $0x3b0] sm:$0xff]
  %v130 = vld [vmem:[%s0 + $0x3b8] sm:$0xff]
  %v131 = vld [vmem:[%s0 + $0x3c0] sm:$0xff]
  %v132 = vld [vmem:[%s0 + $0x3c8] sm:$0xff]
  %v133 = vld [vmem:[%s0 + $0x3d0] sm:$0xff]
  %v134 = vld [vmem:[%s0 + $0x3d8] sm:$0xff]
  %v135 = vld [vmem:[%s0 + $0x3e0] sm:$0xff]
  %v136 = vld [vmem:[%s0 + $0x3e8] sm:$0xff]
  %v137 = vld [vmem:[%s0 + $0x3f0] sm:$0xff]
  %v138 = vld [vmem:[%s0 + $0x3f8] sm:$0xff]
  %v139 = vld [vmem:[%s0 + $0x400] sm:$0xff]
  %v140 = vld [vmem:[%s0 + $0x408] sm:$0xff]
  %v141 = vld [vmem:[%s0 + $0x410] sm:$0xff]
  %v142 = vld [vmem:[%s0 + $0x418] sm:$0xff]
  %v143 = vld [vmem:[%s0 + $0x420] sm:$0xff]
  %v144 = vld [vmem:[%s0 + $0x428] sm:$0xff]
  %v145 = vld [vmem:[%s0 + $0x430] sm:$0xff]
  %v146 = vld [vmem:[%s0 + $0x438] sm:$0xff]
  %v147 = vld [vmem:[%s0 + $0x440] sm:$0xff]
  %v148 = vld [vmem:[%s0 + $0x448] sm:$0xff]
  %v149 = vld [vmem:[%s0 + $0x450] sm:$0xff]
  %v150 = vld [vmem:[%s0 + $0x458] sm:$0xff]
  %v151 = vld [vmem:[%s0 + $0x460] sm:$0xff]
  %v152 = vld [vmem:[%s0 + $0x468] sm:$0xff]
  %v153 = vld [vmem:[%s0 + $0x470] sm:$0xff]
  %v154 = vld [vmem:[%s0 + $0x478] sm:$0xff]
  %v155 = vld [vmem:[%s0 + $0x480] sm:$0xff]
  %v156 = vld [vmem:[%s0 + $0x488] sm:$0xff]
  %v157 = vld [vmem:[%s0 + $0x490] sm:$0xff]
  %v158 = vld [vmem:[%s0 + $0x498] sm:$0xff]
  %v159 = vld [vmem:[%s0 + $0x4a0] sm:$0xff]
  %v160 = vld [vmem:[%s0 + $0x4a8] sm:$0xff]
  %v161 = vld [vmem:[%s0 + $0x4b0] sm:$0xff]
  %v162 = vld [vmem:[%s0 + $0x4b8] sm:$0xff]
  %v163 = vld [vmem:[%s0 + $0x4c0] sm:$0xff]
  %v164 = vld [vmem:[%s0 + $0x4c8] sm:$0xff]
  %v165 = vld [vmem:[%s0 + $0x4d0] sm:$0xff]
  %v166 = vld [vmem:[%s0 + $0x4d8] sm:$0xff]
  %v167 = vld [vmem:[%s0 + $0x4e0] sm:$0xff]
  %v168 = vld [vmem:[%s0 + $0x4e8] sm:$0xff]
  %v169 = vld [vmem:[%s0 + $0x4f0] sm:$0xff]
  %v170 = vld [vmem:[%s0 + $0x4f8] sm:$0xff]
  %v171 = vld [vmem:[%s0 + $0x500] sm:$0xff]
  %v172 = vld [vmem:[%s0 + $0x508] sm:$0xff]
  %v173 = vld [vmem:[%s0 + $0x510] sm:$0xff]
  %v174 = vld [vmem:[%s0 + $0x518] sm:$0xff]
  %v175 = vld [vmem:[%s0 + $0x520] sm:$0xff]
  %v176 = vld [vmem:[%s0 + $0x528] sm:$0xff]
  %v177 = vld [vmem:[%s0 + $0x530] sm:$0xff]
  %v178 = vld [vmem:[%s0 + $0x538] sm:$0xff]
  %v179 = vld [vmem:[%s0 + $0x540] sm:$0xff]
  %v180 = vld [vmem:[%s0 + $0x548] sm:$0xff]
  %v181 = vld [vmem:[%s0 + $0x550] sm:$0xff]
  %v182 = vld [vmem:[%s0 + $0x558] sm:$0xff]
  %v183 = vld [vmem:[%s0 + $0x560] sm:$0xff]
  %v184 = vld [vmem:[%s0 + $0x568] sm:$0xff]
  %v185 = vld [vmem:[%s0 + $0x570] sm:$0xff]
  %v186 = vld [vmem:[%s0 + $0x578] sm:$0xff]
  %v187 = vld [vmem:[%s0 + $0x580] sm:$0xff]
  %v188 = vld [vmem:[%s0 + $0x588] sm:$0xff]
  %v189 = vld [vmem:[%s0 + $0x590] sm:$0xff]
  %v190 = vld [vmem:[%s0 + $0x598] sm:$0xff]
  %v191 = vld [vmem:[%s0 + $0x5a0] sm:$0xff]
  %v192 = vld [vmem:[%s0 + $0x5a8] sm:$0xff]
  %v193 = vld [vmem:[%s0 + $0x5b0] sm:$0xff]
  %v194 = vld [vmem:[%s0 + $0x5b8] sm:$0xff]
  %v195 = vld [vmem:[%s0 + $0x5c0] sm:$0xff]
  %v196 = vld [vmem:[%s0 + $0x5c8] sm:$0xff]
  %v197 = vld [vmem:[%s0 + $0x5d0] sm:$0xff]
  %v198 = vld [vmem:[%s0 + $0x5d8] sm:$0xff]
  %v199 = vld [vmem:[%s0 + $0x5e0] sm:$0xff]
  %v200 = vld [vmem:[%s0 + $0x5e8] sm:$0xff]
  %v201 = vld [vmem:[%s0 + $0x5f0] sm:$0xff]
  %v202 = vld [vmem:[%s0 + $0x5f8] sm:$0xff]
  %v203 = vld [vmem:[%s0 + $0x600] sm:$0xff]
  %v204 = vld [vmem:[%s0 + $0x608] sm:$0xff]
  %v205 = vld [vmem:[%s0 + $0x610] sm:$0xff]
  %v206 = vld [vmem:[%s0 + $0x618] sm:$0xff]
  %v207 = vld [vmem:[%s0 + $0x620] sm:$0xff]
  %v208 = vld [vmem:[%s0 + $0x628] sm:$0xff]
  %v209 = vld [vmem:[%s0 + $0x630] sm:$0xff]
  %v210 = vld [vmem:[%s0 + $0x638] sm:$0xff]
  %v211 = vld [vmem:[%s0 + $0x640] sm:$0xff]
  %v212 = vld [vmem:[%s0 + $0x648] sm:$0xff]
  %v213 = vld [vmem:[%s0 + $0x650] sm:$0xff]
  %v214 = vld [vmem:[%s0 + $0x658] sm:$0xff]
  %v215 = vld [vmem:[%s0 + $0x660] sm:$0xff]
  %v216 = vld [vmem:[%s0 + $0x668] sm:$0xff]
  %v217 = vld [vmem:[%s0 + $0x670] sm:$0xff]
  %v218 = vld [vmem:[%s0 + $0x678] sm:$0xff]
  %v219 = vld [vmem:[%s0 + $0x680] sm:$0xff]
  %v220 = vld [vmem:[%s0 + $0x688] sm:$0xff]
  %v221 = vld [vmem:[%s0 + $0x690] sm:$0xff]
  %v222 = vld [vmem:[%s0 + $0x698] sm:$0xff]
  %v223 = vld [vmem:[%s0 + $0x6a0] sm:$0xff]
  %v224 = vld [vmem:[%s0 + $0x6a8] sm:$0xff]
  %v225 = vld [vmem:[%s0 + $0x6b0] sm:$0xff]
  %v226 = vld [vmem:[%s0 + $0x6b8] sm:$0xff]
  %v227 = vld [vmem:[%s0 + $0x6c0] sm:$0xff]
  %v228 = vld [vmem:[%s0 + $0x6c8] sm:$0xff]
  %v229 = vld [vmem:[%s0 + $0x6d0] sm:$0xff]
  %v230 = vld [vmem:[%s0 + $0x6d8] sm:$0xff]
  %v231 = vld [vmem:[%s0 + $0x6e0] sm:$0xff]
  %v232 = vld [vmem:[%s0 + $0x6e8] sm:$0xff]
  %v233 = vld [vmem:[%s0 + $0x6f0] sm:$0xff]
  %v234 = vld [vmem:[%s0 + $0x6f8] sm:$0xff]
  %v235 = vld [vmem:[%s0 + $0x700] sm:$0xff]
  %v236 = vld [vmem:[%s0 + $0x708] sm:$0xff]
  %v237 = vld [vmem:[%s0 + $0x710] sm:$0xff]
  %v238 = vld [vmem:[%s0 + $0x718] sm:$0xff]
  %v239 = vld [vmem:[%s0 + $0x720] sm:$0xff]
  %v240 = vld [vmem:[%s0 + $0x728] sm:$0xff]
  %v241 = vld [vmem:[%s0 + $0x730] sm:$0xff]
  %v242 = vld [vmem:[%s0 + $0x738] sm:$0xff]
  %v243 = vld [vmem:[%s0 + $0x740] sm:$0xff]
  %v244 = vld [vmem:[%s0 + $0x748] sm:$0xff]
  %v245 = vld [vmem:[%s0 + $0x750] sm:$0xff]
  %v246 = vld [vmem:[%s0 + $0x758] sm:$0xff]
  %v247 = vld [vmem:[%s0 + $0x760] sm:$0xff]
  %v248 = vld [vmem:[%s0 + $0x768] sm:$0xff]
  %v249 = vld [vmem:[%s0 + $0x770] sm:$0xff]
  %v250 = vld [vmem:[%s0 + $0x778] sm:$0xff]
  %v251 = vld [vmem:[%s0 + $0x780] sm:$0xff]
  %v252 = vld [vmem:[%s0 + $0x788] sm:$0xff]
  %v253 = vld [vmem:[%s0 + $0x790] sm:$0xff]
  %v254 = vld [vmem:[%s0 + $0x798] sm:$0xff]
  %v255 = vld [vmem:[%s0 + $0x7a0] sm:$0xff]
  %v256 = vld [vmem:[%s0 + $0x7a8] sm:$0xff]
  %v257 = vld [vmem:[%s0 + $0x7b0] sm:$0xff]
  %v258 = vld [vmem:[%s0 + $0x7b8] sm:$0xff]
  %v259 = vld [vmem:[%s0 + $0x7c0] sm:$0xff]
  %v260 = vld [vmem:[%s0 + $0x7c8] sm:$0xff]
  %v261 = vld [vmem:[%s0 + $0x7d0] sm:$0xff]
  %v262 = vld [vmem:[%s0 + $0x7d8] sm:$0xff]
  %v263 = vld [vmem:[%s0 + $0x7e0] sm:$0xff]
  %v264 = vld [vmem:[%s0 + $0x7e8] sm:$0xff]
  %v265 = vld [vmem:[%s0 + $0x7f0] sm:$0xff]
  %v266 = vld [vmem:[%s0 + $0x7f8] sm:$0xff]
  %v267 = vld [vmem:[%s1] sm:$0xff]
  %v268 = vld [vmem:[%s1 + $0x8] sm:$0xff]
  %v269 = vld [vmem:[%s1 + $0x10] sm:$0xff]
  %v270 = vld [vmem:[%s1 + $0x18] sm:$0xff]
  %v271 = vld [vmem:[%s1 + $0x20] sm:$0xff]
  %v272 = vld [vmem:[%s1 + $0x28] sm:$0xff]
  %v273 = vld [vmem:[%s1 + $0x30] sm:$0xff]
  %v274 = vld [vmem:[%s1 + $0x38] sm:$0xff]
  %v275 = vld [vmem:[%s1 + $0x40] sm:$0xff]
  %v276 = vld [vmem:[%s1 + $0x48] sm:$0xff]
  %v277 = vld [vmem:[%s1 + $0x50] sm:$0xff]
  %v278 = vld [vmem:[%s1 + $0x58] sm:$0xff]
  %v279 = vld [vmem:[%s1 + $0x60] sm:$0xff]
  %v280 = vld [vmem:[%s1 + $0x68] sm:$0xff]
  %v281 = vld [vmem:[%s1 + $0x70] sm:$0xff]
  %v282 = vld [vmem:[%s1 + $0x78] sm:$0xff]
  %v283 = vld [vmem:[%s1 + $0x80] sm:$0xff]
  %v284 = vld [vmem:[%s1 + $0x88] sm:$0xff]
  %v285 = vld [vmem:[%s1 + $0x90] sm:$0xff]
  %v286 = vld [vmem:[%s1 + $0x98] sm:$0xff]
  %v287 = vld [vmem:[%s1 + $0xa0] sm:$0xff]
  %v288 = vld [vmem:[%s1 + $0xa8] sm:$0xff]
  %v289 = vld [vmem:[%s1 + $0xb0] sm:$0xff]
  %v290 = vld [vmem:[%s1 + $0xb8] sm:$0xff]
  %v291 = vld [vmem:[%s1 + $0xc0] sm:$0xff]
  %v292 = vld [vmem:[%s1 + $0xc8] sm:$0xff]
  %v293 = vld [vmem:[%s1 + $0xd0] sm:$0xff]
  %v294 = vld [vmem:[%s1 + $0xd8] sm:$0xff]
  %v295 = vld [vmem:[%s1 + $0xe0] sm:$0xff]
  %v296 = vld [vmem:[%s1 + $0xe8] sm:$0xff]
  %v297 = vld [vmem:[%s1 + $0xf0] sm:$0xff]
  %v298 = vld [vmem:[%s1 + $0xf8] sm:$0xff]
  %v299 = vld [vmem:[%s1 + $0x100] sm:$0xff]
  %v300 = vld [vmem:[%s1 + $0x108] sm:$0xff]
  %v301 = vld [vmem:[%s1 + $0x110] sm:$0xff]
  %v302 = vld [vmem:[%s1 + $0x118] sm:$0xff]
  %v303 = vld [vmem:[%s1 + $0x120] sm:$0xff]
  %v304 = vld [vmem:[%s1 + $0x128] sm:$0xff]
  %v305 = vld [vmem:[%s1 + $0x130] sm:$0xff]
  %v306 = vld [vmem:[%s1 + $0x138] sm:$0xff]
  %v307 = vld [vmem:[%s1 + $0x140] sm:$0xff]
  %v308 = vld [vmem:[%s1 + $0x148] sm:$0xff]
  %v309 = vld [vmem:[%s1 + $0x150] sm:$0xff]
  %v310 = vld [vmem:[%s1 + $0x158] sm:$0xff]
  %v311 = vld [vmem:[%s1 + $0x160] sm:$0xff]
  %v312 = vld [vmem:[%s1 + $0x168] sm:$0xff]
  %v313 = vld [vmem:[%s1 + $0x170] sm:$0xff]
  %v314 = vld [vmem:[%s1 + $0x178] sm:$0xff]
  %v315 = vld [vmem:[%s1 + $0x180] sm:$0xff]
  %v316 = vld [vmem:[%s1 + $0x188] sm:$0xff]
  %v317 = vld [vmem:[%s1 + $0x190] sm:$0xff]
  %v318 = vld [vmem:[%s1 + $0x198] sm:$0xff]
  %v319 = vld [vmem:[%s1 + $0x1a0] sm:$0xff]
  %v320 = vld [vmem:[%s1 + $0x1a8] sm:$0xff]
  %v321 = vld [vmem:[%s1 + $0x1b0] sm:$0xff]
  %v322 = vld [vmem:[%s1 + $0x1b8] sm:$0xff]
  %v323 = vld [vmem:[%s1 + $0x1c0] sm:$0xff]
  %v324 = vld [vmem:[%s1 + $0x1c8] sm:$0xff]
  %v325 = vld [vmem:[%s1 + $0x1d0] sm:$0xff]
  %v326 = vld [vmem:[%s1 + $0x1d8] sm:$0xff]
  %v327 = vld [vmem:[%s1 + $0x1e0] sm:$0xff]
  %v328 = vld [vmem:[%s1 + $0x1e8] sm:$0xff]
  %v329 = vld [vmem:[%s1 + $0x1f0] sm:$0xff]
  %v330 = vld [vmem:[%s1 + $0x1f8] sm:$0xff]
  %v331 = vld [vmem:[%s1 + $0x200] sm:$0xff]
  %v332 = vld [vmem:[%s1 + $0x208] sm:$0xff]
  %v333 = vld [vmem:[%s1 + $0x210] sm:$0xff]
  %v334 = vld [vmem:[%s1 + $0x218] sm:$0xff]
  %v335 = vld [vmem:[%s1 + $0x220] sm:$0xff]
  %v336 = vld [vmem:[%s1 + $0x228] sm:$0xff]
  %v337 = vld [vmem:[%s1 + $0x230] sm:$0xff]
  %v338 = vld [vmem:[%s1 + $0x238] sm:$0xff]
  %v339 = vld [vmem:[%s1 + $0x240] sm:$0xff]
  %v340 = vld [vmem:[%s1 + $0x248] sm:$0xff]
  %v341 = vld [vmem:[%s1 + $0x250] sm:$0xff]
  %v342 = vld [vmem:[%s1 + $0x258] sm:$0xff]
  %v343 = vld [vmem:[%s1 + $0x260] sm:$0xff]
  %v344 = vld [vmem:[%s1 + $0x268] sm:$0xff]
  %v345 = vld [vmem:[%s1 + $0x270] sm:$0xff]
  %v346 = vld [vmem:[%s1 + $0x278] sm:$0xff]
  %v347 = vld [vmem:[%s1 + $0x280] sm:$0xff]
  %v348 = vld [vmem:[%s1 + $0x288] sm:$0xff]
  %v349 = vld [vmem:[%s1 + $0x290] sm:$0xff]
  %v350 = vld [vmem:[%s1 + $0x298] sm:$0xff]
  %v351 = vld [vmem:[%s1 + $0x2a0] sm:$0xff]
  %v352 = vld [vmem:[%s1 + $0x2a8] sm:$0xff]
  %v353 = vld [vmem:[%s1 + $0x2b0] sm:$0xff]
  %v354 = vld [vmem:[%s1 + $0x2b8] sm:$0xff]
  %v355 = vld [vmem:[%s1 + $0x2c0] sm:$0xff]
  %v356 = vld [vmem:[%s1 + $0x2c8] sm:$0xff]
  %v357 = vld [vmem:[%s1 + $0x2d0] sm:$0xff]
  %v358 = vld [vmem:[%s1 + $0x2d8] sm:$0xff]
  %v359 = vld [vmem:[%s1 + $0x2e0] sm:$0xff]
  %v360 = vld [vmem:[%s1 + $0x2e8] sm:$0xff]
  %v361 = vld [vmem:[%s1 + $0x2f0] sm:$0xff]
  %v362 = vld [vmem:[%s1 + $0x2f8] sm:$0xff]
  %v363 = vld [vmem:[%s1 + $0x300] sm:$0xff]
  %v364 = vld [vmem:[%s1 + $0x308] sm:$0xff]
  %v365 = vld [vmem:[%s1 + $0x310] sm:$0xff]
  %v366 = vld [vmem:[%s1 + $0x318] sm:$0xff]
  %v367 = vld [vmem:[%s1 + $0x320] sm:$0xff]
  %v368 = vld [vmem:[%s1 + $0x328] sm:$0xff]
  %v369 = vld [vmem:[%s1 + $0x330] sm:$0xff]
  %v370 = vld [vmem:[%s1 + $0x338] sm:$0xff]
  %v371 = vld [vmem:[%s1 + $0x340] sm:$0xff]
  %v372 = vld [vmem:[%s1 + $0x348] sm:$0xff]
  %v373 = vld [vmem:[%s1 + $0x350] sm:$0xff]
  %v374 = vld [vmem:[%s1 + $0x358] sm:$0xff]
  %v375 = vld [vmem:[%s1 + $0x360] sm:$0xff]
  %v376 = vld [vmem:[%s1 + $0x368] sm:$0xff]
  %v377 = vld [vmem:[%s1 + $0x370] sm:$0xff]
  %v378 = vld [vmem:[%s1 + $0x378] sm:$0xff]
  %v379 = vld [vmem:[%s1 + $0x380] sm:$0xff]
  %v380 = vld [vmem:[%s1 + $0x388] sm:$0xff]
  %v381 = vld [vmem:[%s1 + $0x390] sm:$0xff]
  %v382 = vld [vmem:[%s1 + $0x398] sm:$0xff]
  %v383 = vld [vmem:[%s1 + $0x3a0] sm:$0xff]
  %v384 = vld [vmem:[%s1 + $0x3a8] sm:$0xff]
  %v385 = vld [vmem:[%s1 + $0x3b0] sm:$0xff]
  %v386 = vld [vmem:[%s1 + $0x3b8] sm:$0xff]
  %v387 = vld [vmem:[%s1 + $0x3c0] sm:$0xff]
  %v388 = vld [vmem:[%s1 + $0x3c8] sm:$0xff]
  %v389 = vld [vmem:[%s1 + $0x3d0] sm:$0xff]
  %v390 = vld [vmem:[%s1 + $0x3d8] sm:$0xff]
  %v391 = vld [vmem:[%s1 + $0x3e0] sm:$0xff]
  %v392 = vld [vmem:[%s1 + $0x3e8] sm:$0xff]
  %v393 = vld [vmem:[%s1 + $0x3f0] sm:$0xff]
  %v394 = vld [vmem:[%s1 + $0x3f8] sm:$0xff]
  %v395 = vld [vmem:[%s1 + $0x400] sm:$0xff]
  %v396 = vld [vmem:[%s1 + $0x408] sm:$0xff]
  %v397 = vld [vmem:[%s1 + $0x410] sm:$0xff]
  %v398 = vld [vmem:[%s1 + $0x418] sm:$0xff]
  %v399 = vld [vmem:[%s1 + $0x420] sm:$0xff]
  %v400 = vld [vmem:[%s1 + $0x428] sm:$0xff]
  %v401 = vld [vmem:[%s1 + $0x430] sm:$0xff]
  %v402 = vld [vmem:[%s1 + $0x438] sm:$0xff]
  %v403 = vld [vmem:[%s1 + $0x440] sm:$0xff]
  %v404 = vld [vmem:[%s1 + $0x448] sm:$0xff]
  %v405 = vld [vmem:[%s1 + $0x450] sm:$0xff]
  %v406 = vld [vmem:[%s1 + $0x458] sm:$0xff]
  %v407 = vld [vmem:[%s1 + $0x460] sm:$0xff]
  %v408 = vld [vmem:[%s1 + $0x468] sm:$0xff]
  %v409 = vld [vmem:[%s1 + $0x470] sm:$0xff]
  %v410 = vld [vmem:[%s1 + $0x478] sm:$0xff]
  %v411 = vld [vmem:[%s1 + $0x480] sm:$0xff]
  %v412 = vld [vmem:[%s1 + $0x488] sm:$0xff]
  %v413 = vld [vmem:[%s1 + $0x490] sm:$0xff]
  %v414 = vld [vmem:[%s1 + $0x498] sm:$0xff]
  %v415 = vld [vmem:[%s1 + $0x4a0] sm:$0xff]
  %v416 = vld [vmem:[%s1 + $0x4a8] sm:$0xff]
  %v417 = vld [vmem:[%s1 + $0x4b0] sm:$0xff]
  %v418 = vld [vmem:[%s1 + $0x4b8] sm:$0xff]
  %v419 = vld [vmem:[%s1 + $0x4c0] sm:$0xff]
  %v420 = vld [vmem:[%s1 + $0x4c8] sm:$0xff]
  %v421 = vld [vmem:[%s1 + $0x4d0] sm:$0xff]
  %v422 = vld [vmem:[%s1 + $0x4d8] sm:$0xff]
  %v423 = vld [vmem:[%s1 + $0x4e0] sm:$0xff]
  %v424 = vld [vmem:[%s1 + $0x4e8] sm:$0xff]
  %v425 = vld [vmem:[%s1 + $0x4f0] sm:$0xff]
  %v426 = vld [vmem:[%s1 + $0x4f8] sm:$0xff]
  %v427 = vld [vmem:[%s1 + $0x500] sm:$0xff]
  %v428 = vld [vmem:[%s1 + $0x508] sm:$0xff]
  %v429 = vld [vmem:[%s1 + $0x510] sm:$0xff]
  %v430 = vld [vmem:[%s1 + $0x518] sm:$0xff]
  %v431 = vld [vmem:[%s1 + $0x520] sm:$0xff]
  %v432 = vld [vmem:[%s1 + $0x528] sm:$0xff]
  %v433 = vld [vmem:[%s1 + $0x530] sm:$0xff]
  %v434 = vld [vmem:[%s1 + $0x538] sm:$0xff]
  %v435 = vld [vmem:[%s1 + $0x540] sm:$0xff]
  %v436 = vld [vmem:[%s1 + $0x548] sm:$0xff]
  %v437 = vld [vmem:[%s1 + $0x550] sm:$0xff]
  %v438 = vld [vmem:[%s1 + $0x558] sm:$0xff]
  %v439 = vld [vmem:[%s1 + $0x560] sm:$0xff]
  %v440 = vld [vmem:[%s1 + $0x568] sm:$0xff]
  %v441 = vld [vmem:[%s1 + $0x570] sm:$0xff]
  %v442 = vld [vmem:[%s1 + $0x578] sm:$0xff]
  %v443 = vld [vmem:[%s1 + $0x580] sm:$0xff]
  %v444 = vld [vmem:[%s1 + $0x588] sm:$0xff]
  %v445 = vld [vmem:[%s1 + $0x590] sm:$0xff]
  %v446 = vld [vmem:[%s1 + $0x598] sm:$0xff]
  %v447 = vld [vmem:[%s1 + $0x5a0] sm:$0xff]
  %v448 = vld [vmem:[%s1 + $0x5a8] sm:$0xff]
  %v449 = vld [vmem:[%s1 + $0x5b0] sm:$0xff]
  %v450 = vld [vmem:[%s1 + $0x5b8] sm:$0xff]
  %v451 = vld [vmem:[%s1 + $0x5c0] sm:$0xff]
  %v452 = vld [vmem:[%s1 + $0x5c8] sm:$0xff]
  %v453 = vld [vmem:[%s1 + $0x5d0] sm:$0xff]
  %v454 = vld [vmem:[%s1 + $0x5d8] sm:$0xff]
  %v455 = vld [vmem:[%s1 + $0x5e0] sm:$0xff]
  %v456 = vld [vmem:[%s1 + $0x5e8] sm:$0xff]
  %v457 = vld [vmem:[%s1 + $0x5f0] sm:$0xff]
  %v458 = vld [vmem:[%s1 + $0x5f8] sm:$0xff]
  %v459 = vld [vmem:[%s1 + $0x600] sm:$0xff]
  %v460 = vld [vmem:[%s1 + $0x608] sm:$0xff]
  %v461 = vld [vmem:[%s1 + $0x610] sm:$0xff]
  %v462 = vld [vmem:[%s1 + $0x618] sm:$0xff]
  %v463 = vld [vmem:[%s1 + $0x620] sm:$0xff]
  %v464 = vld [vmem:[%s1 + $0x628] sm:$0xff]
  %v465 = vld [vmem:[%s1 + $0x630] sm:$0xff]
  %v466 = vld [vmem:[%s1 + $0x638] sm:$0xff]
  %v467 = vld [vmem:[%s1 + $0x640] sm:$0xff]
  %v468 = vld [vmem:[%s1 + $0x648] sm:$0xff]
  %v469 = vld [vmem:[%s1 + $0x650] sm:$0xff]
  %v470 = vld [vmem:[%s1 + $0x658] sm:$0xff]
  %v471 = vld [vmem:[%s1 + $0x660] sm:$0xff]
  %v472 = vld [vmem:[%s1 + $0x668] sm:$0xff]
  %v473 = vld [vmem:[%s1 + $0x670] sm:$0xff]
  %v474 = vld [vmem:[%s1 + $0x678] sm:$0xff]
  %v475 = vld [vmem:[%s1 + $0x680] sm:$0xff]
  %v476 = vld [vmem:[%s1 + $0x688] sm:$0xff]
  %v477 = vld [vmem:[%s1 + $0x690] sm:$0xff]
  %v478 = vld [vmem:[%s1 + $0x698] sm:$0xff]
  %v479 = vld [vmem:[%s1 + $0x6a0] sm:$0xff]
  %v480 = vld [vmem:[%s1 + $0x6a8] sm:$0xff]
  %v481 = vld [vmem:[%s1 + $0x6b0] sm:$0xff]
  %v482 = vld [vmem:[%s1 + $0x6b8] sm:$0xff]
  %v483 = vld [vmem:[%s1 + $0x6c0] sm:$0xff]
  %v484 = vld [vmem:[%s1 + $0x6c8] sm:$0xff]
  %v485 = vld [vmem:[%s1 + $0x6d0] sm:$0xff]
  %v486 = vld [vmem:[%s1 + $0x6d8] sm:$0xff]
  %v487 = vld [vmem:[%s1 + $0x6e0] sm:$0xff]
  %v488 = vld [vmem:[%s1 + $0x6e8] sm:$0xff]
  %v489 = vld [vmem:[%s1 + $0x6f0] sm:$0xff]
  %v490 = vld [vmem:[%s1 + $0x6f8] sm:$0xff]
  %v491 = vld [vmem:[%s1 + $0x700] sm:$0xff]
  %v492 = vld [vmem:[%s1 + $0x708] sm:$0xff]
  %v493 = vld [vmem:[%s1 + $0x710] sm:$0xff]
  %v494 = vld [vmem:[%s1 + $0x718] sm:$0xff]
  %v495 = vld [vmem:[%s1 + $0x720] sm:$0xff]
  %v496 = vld [vmem:[%s1 + $0x728] sm:$0xff]
  %v497 = vld [vmem:[%s1 + $0x730] sm:$0xff]
  %v498 = vld [vmem:[%s1 + $0x738] sm:$0xff]
  %v499 = vld [vmem:[%s1 + $0x740] sm:$0xff]
  %v500 = vld [vmem:[%s1 + $0x748] sm:$0xff]
  %v501 = vld [vmem:[%s1 + $0x750] sm:$0xff]
  %v502 = vld [vmem:[%s1 + $0x758] sm:$0xff]
  %v503 = vld [vmem:[%s1 + $0x760] sm:$0xff]
  %v504 = vld [vmem:[%s1 + $0x768] sm:$0xff]
  %v505 = vld [vmem:[%s1 + $0x770] sm:$0xff]
  %v506 = vld [vmem:[%s1 + $0x778] sm:$0xff]
  %v507 = vld [vmem:[%s1 + $0x780] sm:$0xff]
  %v508 = vld [vmem:[%s1 + $0x788] sm:$0xff]
  %v509 = vld [vmem:[%s1 + $0x790] sm:$0xff]
  %v510 = vld [vmem:[%s1 + $0x798] sm:$0xff]
  %v511 = vld [vmem:[%s1 + $0x7a0] sm:$0xff]
  %v512 = vld [vmem:[%s1 + $0x7a8] sm:$0xff]
  %v513 = vld [vmem:[%s1 + $0x7b0] sm:$0xff]
  %v514 = vld [vmem:[%s1 + $0x7b8] sm:$0xff]
  %v515 = vld [vmem:[%s1 + $0x7c0] sm:$0xff]
  %v516 = vld [vmem:[%s1 + $0x7c8] sm:$0xff]
  %v517 = vld [vmem:[%s1 + $0x7d0] sm:$0xff]
  %v518 = vld [vmem:[%s1 + $0x7d8] sm:$0xff]
  %v519 = vld [vmem:[%s1 + $0x7e0] sm:$0xff]
  %v520 = vld [vmem:[%s1 + $0x7e8] sm:$0xff]
  %v521 = vld [vmem:[%s1 + $0x7f0] sm:$0xff]
  %v522 = vld [vmem:[%s1 + $0x7f8] sm:$0xff]
  %v523 = vsub.f32 %v267, %v11
  %v524 = vsub.f32 %v268, %v12
  %v525 = vsub.f32 %v269, %v13
  %v526 = vsub.f32 %v270, %v14
  %v527 = vsub.f32 %v271, %v15
  %v528 = vsub.f32 %v272, %v16
  %v529 = vsub.f32 %v273, %v17
  %v530 = vsub.f32 %v274, %v18
  %v531 = vsub.f32 %v275, %v19
  %v532 = vsub.f32 %v276, %v20
  %v533 = vsub.f32 %v277, %v21
  %v534 = vsub.f32 %v278, %v22
  %v535 = vsub.f32 %v279, %v23
  %v536 = vsub.f32 %v280, %v24
  %v537 = vsub.f32 %v281, %v25
  %v538 = vsub.f32 %v282, %v26
  %v539 = vsub.f32 %v283, %v27
  %v540 = vsub.f32 %v284, %v28
  %v541 = vsub.f32 %v285, %v29
  %v542 = vsub.f32 %v286, %v30
  %v543 = vsub.f32 %v287, %v31
  %v544 = vsub.f32 %v288, %v32
  %v545 = vsub.f32 %v289, %v33
  %v546 = vsub.f32 %v290, %v34
  %v547 = vsub.f32 %v291, %v35
  %v548 = vsub.f32 %v292, %v36
  %v549 = vsub.f32 %v293, %v37
  %v550 = vsub.f32 %v294, %v38
  %v551 = vsub.f32 %v295, %v39
  %v552 = vsub.f32 %v296, %v40
  %v553 = vsub.f32 %v297, %v41
  %v554 = vsub.f32 %v298, %v42
  %v555 = vsub.f32 %v299, %v43
  %v556 = vsub.f32 %v300, %v44
  %v557 = vsub.f32 %v301, %v45
  %v558 = vsub.f32 %v302, %v46
  %v559 = vsub.f32 %v303, %v47
  %v560 = vsub.f32 %v304, %v48
  %v561 = vsub.f32 %v305, %v49
  %v562 = vsub.f32 %v306, %v50
  %v563 = vsub.f32 %v307, %v51
  %v564 = vsub.f32 %v308, %v52
  %v565 = vsub.f32 %v309, %v53
  %v566 = vsub.f32 %v310, %v54
  %v567 = vsub.f32 %v311, %v55
  %v568 = vsub.f32 %v312, %v56
  %v569 = vsub.f32 %v313, %v57
  %v570 = vsub.f32 %v314, %v58
  %v571 = vsub.f32 %v315, %v59
  %v572 = vsub.f32 %v316, %v60
  %v573 = vsub.f32 %v317, %v61
  %v574 = vsub.f32 %v318, %v62
  %v575 = vsub.f32 %v319, %v63
  %v576 = vsub.f32 %v320, %v64
  %v577 = vsub.f32 %v321, %v65
  %v578 = vsub.f32 %v322, %v66
  %v579 = vsub.f32 %v323, %v67
  %v580 = vsub.f32 %v324, %v68
  %v581 = vsub.f32 %v325, %v69
  %v582 = vsub.f32 %v326, %v70
  %v583 = vsub.f32 %v327, %v71
  %v584 = vsub.f32 %v328, %v72
  %v585 = vsub.f32 %v329, %v73
  %v586 = vsub.f32 %v330, %v74
  %v587 = vsub.f32 %v331, %v75
  %v588 = vsub.f32 %v332, %v76
  %v589 = vsub.f32 %v333, %v77
  %v590 = vsub.f32 %v334, %v78
  %v591 = vsub.f32 %v335, %v79
  %v592 = vsub.f32 %v336, %v80
  %v593 = vsub.f32 %v337, %v81
  %v594 = vsub.f32 %v338, %v82
  %v595 = vsub.f32 %v339, %v83
  %v596 = vsub.f32 %v340, %v84
  %v597 = vsub.f32 %v341, %v85
  %v598 = vsub.f32 %v342, %v86
  %v599 = vsub.f32 %v343, %v87
  %v600 = vsub.f32 %v344, %v88
  %v601 = vsub.f32 %v345, %v89
  %v602 = vsub.f32 %v346, %v90
  %v603 = vsub.f32 %v347, %v91
  %v604 = vsub.f32 %v348, %v92
  %v605 = vsub.f32 %v349, %v93
  %v606 = vsub.f32 %v350, %v94
  %v607 = vsub.f32 %v351, %v95
  %v608 = vsub.f32 %v352, %v96
  %v609 = vsub.f32 %v353, %v97
  %v610 = vsub.f32 %v354, %v98
  %v611 = vsub.f32 %v355, %v99
  %v612 = vsub.f32 %v356, %v100
  %v613 = vsub.f32 %v357, %v101
  %v614 = vsub.f32 %v358, %v102
  %v615 = vsub.f32 %v359, %v103
  %v616 = vsub.f32 %v360, %v104
  %v617 = vsub.f32 %v361, %v105
  %v618 = vsub.f32 %v362, %v106
  %v619 = vsub.f32 %v363, %v107
  %v620 = vsub.f32 %v364, %v108
  %v621 = vsub.f32 %v365, %v109
  %v622 = vsub.f32 %v366, %v110
  %v623 = vsub.f32 %v367, %v111
  %v624 = vsub.f32 %v368, %v112
  %v625 = vsub.f32 %v369, %v113
  %v626 = vsub.f32 %v370, %v114
  %v627 = vsub.f32 %v371, %v115
  %v628 = vsub.f32 %v372, %v116
  %v629 = vsub.f32 %v373, %v117
  %v630 = vsub.f32 %v374, %v118
  %v631 = vsub.f32 %v375, %v119
  %v632 = vsub.f32 %v376, %v120
  %v633 = vsub.f32 %v377, %v121
  %v634 = vsub.f32 %v378, %v122
  %v635 = vsub.f32 %v379, %v123
  %v636 = vsub.f32 %v380, %v124
  %v637 = vsub.f32 %v381, %v125
  %v638 = vsub.f32 %v382, %v126
  %v639 = vsub.f32 %v383, %v127
  %v640 = vsub.f32 %v384, %v128
  %v641 = vsub.f32 %v385, %v129
  %v642 = vsub.f32 %v386, %v130
  %v643 = vsub.f32 %v387, %v131
  %v644 = vsub.f32 %v388, %v132
  %v645 = vsub.f32 %v389, %v133
  %v646 = vsub.f32 %v390, %v134
  %v647 = vsub.f32 %v391, %v135
  %v648 = vsub.f32 %v392, %v136
  %v649 = vsub.f32 %v393, %v137
  %v650 = vsub.f32 %v394, %v138
  %v651 = vsub.f32 %v395, %v139
  %v652 = vsub.f32 %v396, %v140
  %v653 = vsub.f32 %v397, %v141
  %v654 = vsub.f32 %v398, %v142
  %v655 = vsub.f32 %v399, %v143
  %v656 = vsub.f32 %v400, %v144
  %v657 = vsub.f32 %v401, %v145
  %v658 = vsub.f32 %v402, %v146
  %v659 = vsub.f32 %v403, %v147
  %v660 = vsub.f32 %v404, %v148
  %v661 = vsub.f32 %v405, %v149
  %v662 = vsub.f32 %v406, %v150
  %v663 = vsub.f32 %v407, %v151
  %v664 = vsub.f32 %v408, %v152
  %v665 = vsub.f32 %v409, %v153
  %v666 = vsub.f32 %v410, %v154
  %v667 = vsub.f32 %v411, %v155
  %v668 = vsub.f32 %v412, %v156
  %v669 = vsub.f32 %v413, %v157
  %v670 = vsub.f32 %v414, %v158
  %v671 = vsub.f32 %v415, %v159
  %v672 = vsub.f32 %v416, %v160
  %v673 = vsub.f32 %v417, %v161
  %v674 = vsub.f32 %v418, %v162
  %v675 = vsub.f32 %v419, %v163
  %v676 = vsub.f32 %v420, %v164
  %v677 = vsub.f32 %v421, %v165
  %v678 = vsub.f32 %v422, %v166
  %v679 = vsub.f32 %v423, %v167
  %v680 = vsub.f32 %v424, %v168
  %v681 = vsub.f32 %v425, %v169
  %v682 = vsub.f32 %v426, %v170
  %v683 = vsub.f32 %v427, %v171
  %v684 = vsub.f32 %v428, %v172
  %v685 = vsub.f32 %v429, %v173
  %v686 = vsub.f32 %v430, %v174
  %v687 = vsub.f32 %v431, %v175
  %v688 = vsub.f32 %v432, %v176
  %v689 = vsub.f32 %v433, %v177
  %v690 = vsub.f32 %v434, %v178
  %v691 = vsub.f32 %v435, %v179
  %v692 = vsub.f32 %v436, %v180
  %v693 = vsub.f32 %v437, %v181
  %v694 = vsub.f32 %v438, %v182
  %v695 = vsub.f32 %v439, %v183
  %v696 = vsub.f32 %v440, %v184
  %v697 = vsub.f32 %v441, %v185
  %v698 = vsub.f32 %v442, %v186
  %v699 = vsub.f32 %v443, %v187
  %v700 = vsub.f32 %v444, %v188
  %v701 = vsub.f32 %v445, %v189
  %v702 = vsub.f32 %v446, %v190
  %v703 = vsub.f32 %v447, %v191
  %v704 = vsub.f32 %v448, %v192
  %v705 = vsub.f32 %v449, %v193
  %v706 = vsub.f32 %v450, %v194
  %v707 = vsub.f32 %v451, %v195
  %v708 = vsub.f32 %v452, %v196
  %v709 = vsub.f32 %v453, %v197
  %v710 = vsub.f32 %v454, %v198
  %v711 = vsub.f32 %v455, %v199
  %v712 = vsub.f32 %v456, %v200
  %v713 = vsub.f32 %v457, %v201
  %v714 = vsub.f32 %v458, %v202
  %v715 = vsub.f32 %v459, %v203
  %v716 = vsub.f32 %v460, %v204
  %v717 = vsub.f32 %v461, %v205
  %v718 = vsub.f32 %v462, %v206
  %v719 = vsub.f32 %v463, %v207
  %v720 = vsub.f32 %v464, %v208
  %v721 = vsub.f32 %v465, %v209
  %v722 = vsub.f32 %v466, %v210
  %v723 = vsub.f32 %v467, %v211
  %v724 = vsub.f32 %v468, %v212
  %v725 = vsub.f32 %v469, %v213
  %v726 = vsub.f32 %v470, %v214
  %v727 = vsub.f32 %v471, %v215
  %v728 = vsub.f32 %v472, %v216
  %v729 = vsub.f32 %v473, %v217
  %v730 = vsub.f32 %v474, %v218
  %v731 = vsub.f32 %v475, %v219
  %v732 = vsub.f32 %v476, %v220
  %v733 = vsub.f32 %v477, %v221
  %v734 = vsub.f32 %v478, %v222
  %v735 = vsub.f32 %v479, %v223
  %v736 = vsub.f32 %v480, %v224
  %v737 = vsub.f32 %v481, %v225
  %v738 = vsub.f32 %v482, %v226
  %v739 = vsub.f32 %v483, %v227
  %v740 = vsub.f32 %v484, %v228
  %v741 = vsub.f32 %v485, %v229
  %v742 = vsub.f32 %v486, %v230
  %v743 = vsub.f32 %v487, %v231
  %v744 = vsub.f32 %v488, %v232
  %v745 = vsub.f32 %v489, %v233
  %v746 = vsub.f32 %v490, %v234
  %v747 = vsub.f32 %v491, %v235
  %v748 = vsub.f32 %v492, %v236
  %v749 = vsub.f32 %v493, %v237
  %v750 = vsub.f32 %v494, %v238
  %v751 = vsub.f32 %v495, %v239
  %v752 = vsub.f32 %v496, %v240
  %v753 = vsub.f32 %v497, %v241
  %v754 = vsub.f32 %v498, %v242
  %v755 = vsub.f32 %v499, %v243
  %v756 = vsub.f32 %v500, %v244
  %v757 = vsub.f32 %v501, %v245
  %v758 = vsub.f32 %v502, %v246
  %v759 = vsub.f32 %v503, %v247
  %v760 = vsub.f32 %v504, %v248
  %v761 = vsub.f32 %v505, %v249
  %v762 = vsub.f32 %v506, %v250
  %v763 = vsub.f32 %v507, %v251
  %v764 = vsub.f32 %v508, %v252
  %v765 = vsub.f32 %v509, %v253
  %v766 = vsub.f32 %v510, %v254
  %v767 = vsub.f32 %v511, %v255
  %v768 = vsub.f32 %v512, %v256
  %v769 = vsub.f32 %v513, %v257
  %v770 = vsub.f32 %v514, %v258
  %v771 = vsub.f32 %v515, %v259
  %v772 = vsub.f32 %v516, %v260
  %v773 = vsub.f32 %v517, %v261
  %v774 = vsub.f32 %v518, %v262
  %v775 = vsub.f32 %v519, %v263
  %v776 = vsub.f32 %v520, %v264
  %v777 = vsub.f32 %v521, %v265
  %v778 = vsub.f32 %v522, %v266
  %v779 = vlaneseq
  %v780 = vand.u32 %v779, 127
  %v781 = vcvt.s32.f32 %v780
  %v782 = vmul.f32 %v781, 0.03125
  %784 = vset.pattern.permute.xlu0 0
  %785 = vperm.xlu0 %784, %v523
  %v786 = vpop.permute.xlu0 %785
  %789 = vset.pattern.permute.xlu0 0
  %790 = vperm.xlu0 %789, %v524
  %v791 = vpop.permute.xlu0 %790
  %794 = vset.pattern.permute.xlu0 0
  %795 = vperm.xlu0 %794, %v525
  %v796 = vpop.permute.xlu0 %795
  %799 = vset.pattern.permute.xlu0 0
  %800 = vperm.xlu0 %799, %v526
  %v801 = vpop.permute.xlu0 %800
  %804 = vset.pattern.permute.xlu0 0
  %805 = vperm.xlu0 %804, %v527
  %v806 = vpop.permute.xlu0 %805
  %809 = vset.pattern.permute.xlu0 0
  %810 = vperm.xlu0 %809, %v528
  %v811 = vpop.permute.xlu0 %810
  %814 = vset.pattern.permute.xlu0 0
  %815 = vperm.xlu0 %814, %v529
  %v816 = vpop.permute.xlu0 %815
  %819 = vset.pattern.permute.xlu0 0
  %820 = vperm.xlu0 %819, %v530
  %v821 = vpop.permute.xlu0 %820
  %824 = vset.pattern.permute.xlu0 0
  %825 = vperm.xlu0 %824, %v531
  %v826 = vpop.permute.xlu0 %825
  %829 = vset.pattern.permute.xlu0 0
  %830 = vperm.xlu0 %829, %v532
  %v831 = vpop.permute.xlu0 %830
  %834 = vset.pattern.permute.xlu0 0
  %835 = vperm.xlu0 %834, %v533
  %v836 = vpop.permute.xlu0 %835
  %839 = vset.pattern.permute.xlu0 0
  %840 = vperm.xlu0 %839, %v534
  %v841 = vpop.permute.xlu0 %840
  %844 = vset.pattern.permute.xlu0 0
  %845 = vperm.xlu0 %844, %v535
  %v846 = vpop.permute.xlu0 %845
  %849 = vset.pattern.permute.xlu0 0
  %850 = vperm.xlu0 %849, %v536
  %v851 = vpop.permute.xlu0 %850
  %854 = vset.pattern.permute.xlu0 0
  %855 = vperm.xlu0 %854, %v537
  %v856 = vpop.permute.xlu0 %855
  %859 = vset.pattern.permute.xlu0 0
  %860 = vperm.xlu0 %859, %v538
  %v861 = vpop.permute.xlu0 %860
  %864 = vset.pattern.permute.xlu0 0
  %865 = vperm.xlu0 %864, %v539
  %v866 = vpop.permute.xlu0 %865
  %869 = vset.pattern.permute.xlu0 0
  %870 = vperm.xlu0 %869, %v540
  %v871 = vpop.permute.xlu0 %870
  %874 = vset.pattern.permute.xlu0 0
  %875 = vperm.xlu0 %874, %v541
  %v876 = vpop.permute.xlu0 %875
  %879 = vset.pattern.permute.xlu0 0
  %880 = vperm.xlu0 %879, %v542
  %v881 = vpop.permute.xlu0 %880
  %884 = vset.pattern.permute.xlu0 0
  %885 = vperm.xlu0 %884, %v543
  %v886 = vpop.permute.xlu0 %885
  %889 = vset.pattern.permute.xlu0 0
  %890 = vperm.xlu0 %889, %v544
  %v891 = vpop.permute.xlu0 %890
  %894 = vset.pattern.permute.xlu0 0
  %895 = vperm.xlu0 %894, %v545
  %v896 = vpop.permute.xlu0 %895
  %899 = vset.pattern.permute.xlu0 0
  %900 = vperm.xlu0 %899, %v546
  %v901 = vpop.permute.xlu0 %900
  %904 = vset.pattern.permute.xlu0 0
  %905 = vperm.xlu0 %904, %v547
  %v906 = vpop.permute.xlu0 %905
  %909 = vset.pattern.permute.xlu0 0
  %910 = vperm.xlu0 %909, %v548
  %v911 = vpop.permute.xlu0 %910
  %914 = vset.pattern.permute.xlu0 0
  %915 = vperm.xlu0 %914, %v549
  %v916 = vpop.permute.xlu0 %915
  %919 = vset.pattern.permute.xlu0 0
  %920 = vperm.xlu0 %919, %v550
  %v921 = vpop.permute.xlu0 %920
  %924 = vset.pattern.permute.xlu0 0
  %925 = vperm.xlu0 %924, %v551
  %v926 = vpop.permute.xlu0 %925
  %929 = vset.pattern.permute.xlu0 0
  %930 = vperm.xlu0 %929, %v552
  %v931 = vpop.permute.xlu0 %930
  %934 = vset.pattern.permute.xlu0 0
  %935 = vperm.xlu0 %934, %v553
  %v936 = vpop.permute.xlu0 %935
  %939 = vset.pattern.permute.xlu0 0
  %940 = vperm.xlu0 %939, %v554
  %v941 = vpop.permute.xlu0 %940
  %944 = vset.pattern.permute.xlu0 0
  %945 = vperm.xlu0 %944, %v555
  %v946 = vpop.permute.xlu0 %945
  %949 = vset.pattern.permute.xlu0 0
  %950 = vperm.xlu0 %949, %v556
  %v951 = vpop.permute.xlu0 %950
  %954 = vset.pattern.permute.xlu0 0
  %955 = vperm.xlu0 %954, %v557
  %v956 = vpop.permute.xlu0 %955
  %959 = vset.pattern.permute.xlu0 0
  %960 = vperm.xlu0 %959, %v558
  %v961 = vpop.permute.xlu0 %960
  %964 = vset.pattern.permute.xlu0 0
  %965 = vperm.xlu0 %964, %v559
  %v966 = vpop.permute.xlu0 %965
  %969 = vset.pattern.permute.xlu0 0
  %970 = vperm.xlu0 %969, %v560
  %v971 = vpop.permute.xlu0 %970
  %974 = vset.pattern.permute.xlu0 0
  %975 = vperm.xlu0 %974, %v561
  %v976 = vpop.permute.xlu0 %975
  %979 = vset.pattern.permute.xlu0 0
  %980 = vperm.xlu0 %979, %v562
  %v981 = vpop.permute.xlu0 %980
  %984 = vset.pattern.permute.xlu0 0
  %985 = vperm.xlu0 %984, %v563
  %v986 = vpop.permute.xlu0 %985
  %989 = vset.pattern.permute.xlu0 0
  %990 = vperm.xlu0 %989, %v564
  %v991 = vpop.permute.xlu0 %990
  %994 = vset.pattern.permute.xlu0 0
  %995 = vperm.xlu0 %994, %v565
  %v996 = vpop.permute.xlu0 %995
  %999 = vset.pattern.permute.xlu0 0
  %1000 = vperm.xlu0 %999, %v566
  %v1001 = vpop.permute.xlu0 %1000
  %1004 = vset.pattern.permute.xlu0 0
  %1005 = vperm.xlu0 %1004, %v567
  %v1006 = vpop.permute.xlu0 %1005
  %1009 = vset.pattern.permute.xlu0 0
  %1010 = vperm.xlu0 %1009, %v568
  %v1011 = vpop.permute.xlu0 %1010
  %1014 = vset.pattern.permute.xlu0 0
  %1015 = vperm.xlu0 %1014, %v569
  %v1016 = vpop.permute.xlu0 %1015
  %1019 = vset.pattern.permute.xlu0 0
  %1020 = vperm.xlu0 %1019, %v570
  %v1021 = vpop.permute.xlu0 %1020
  %1024 = vset.pattern.permute.xlu0 0
  %1025 = vperm.xlu0 %1024, %v571
  %v1026 = vpop.permute.xlu0 %1025
  %1029 = vset.pattern.permute.xlu0 0
  %1030 = vperm.xlu0 %1029, %v572
  %v1031 = vpop.permute.xlu0 %1030
  %1034 = vset.pattern.permute.xlu0 0
  %1035 = vperm.xlu0 %1034, %v573
  %v1036 = vpop.permute.xlu0 %1035
  %1039 = vset.pattern.permute.xlu0 0
  %1040 = vperm.xlu0 %1039, %v574
  %v1041 = vpop.permute.xlu0 %1040
  %1044 = vset.pattern.permute.xlu0 0
  %1045 = vperm.xlu0 %1044, %v575
  %v1046 = vpop.permute.xlu0 %1045
  %1049 = vset.pattern.permute.xlu0 0
  %1050 = vperm.xlu0 %1049, %v576
  %v1051 = vpop.permute.xlu0 %1050
  %1054 = vset.pattern.permute.xlu0 0
  %1055 = vperm.xlu0 %1054, %v577
  %v1056 = vpop.permute.xlu0 %1055
  %1059 = vset.pattern.permute.xlu0 0
  %1060 = vperm.xlu0 %1059, %v578
  %v1061 = vpop.permute.xlu0 %1060
  %1064 = vset.pattern.permute.xlu0 0
  %1065 = vperm.xlu0 %1064, %v579
  %v1066 = vpop.permute.xlu0 %1065
  %1069 = vset.pattern.permute.xlu0 0
  %1070 = vperm.xlu0 %1069, %v580
  %v1071 = vpop.permute.xlu0 %1070
  %1074 = vset.pattern.permute.xlu0 0
  %1075 = vperm.xlu0 %1074, %v581
  %v1076 = vpop.permute.xlu0 %1075
  %1079 = vset.pattern.permute.xlu0 0
  %1080 = vperm.xlu0 %1079, %v582
  %v1081 = vpop.permute.xlu0 %1080
  %1084 = vset.pattern.permute.xlu0 0
  %1085 = vperm.xlu0 %1084, %v583
  %v1086 = vpop.permute.xlu0 %1085
  %1089 = vset.pattern.permute.xlu0 0
  %1090 = vperm.xlu0 %1089, %v584
  %v1091 = vpop.permute.xlu0 %1090
  %1094 = vset.pattern.permute.xlu0 0
  %1095 = vperm.xlu0 %1094, %v585
  %v1096 = vpop.permute.xlu0 %1095
  %1099 = vset.pattern.permute.xlu0 0
  %1100 = vperm.xlu0 %1099, %v586
  %v1101 = vpop.permute.xlu0 %1100
  %1104 = vset.pattern.permute.xlu0 0
  %1105 = vperm.xlu0 %1104, %v587
  %v1106 = vpop.permute.xlu0 %1105
  %1109 = vset.pattern.permute.xlu0 0
  %1110 = vperm.xlu0 %1109, %v588
  %v1111 = vpop.permute.xlu0 %1110
  %1114 = vset.pattern.permute.xlu0 0
  %1115 = vperm.xlu0 %1114, %v589
  %v1116 = vpop.permute.xlu0 %1115
  %1119 = vset.pattern.permute.xlu0 0
  %1120 = vperm.xlu0 %1119, %v590
  %v1121 = vpop.permute.xlu0 %1120
  %1124 = vset.pattern.permute.xlu0 0
  %1125 = vperm.xlu0 %1124, %v591
  %v1126 = vpop.permute.xlu0 %1125
  %1129 = vset.pattern.permute.xlu0 0
  %1130 = vperm.xlu0 %1129, %v592
  %v1131 = vpop.permute.xlu0 %1130
  %1134 = vset.pattern.permute.xlu0 0
  %1135 = vperm.xlu0 %1134, %v593
  %v1136 = vpop.permute.xlu0 %1135
  %1139 = vset.pattern.permute.xlu0 0
  %1140 = vperm.xlu0 %1139, %v594
  %v1141 = vpop.permute.xlu0 %1140
  %1144 = vset.pattern.permute.xlu0 0
  %1145 = vperm.xlu0 %1144, %v595
  %v1146 = vpop.permute.xlu0 %1145
  %1149 = vset.pattern.permute.xlu0 0
  %1150 = vperm.xlu0 %1149, %v596
  %v1151 = vpop.permute.xlu0 %1150
  %1154 = vset.pattern.permute.xlu0 0
  %1155 = vperm.xlu0 %1154, %v597
  %v1156 = vpop.permute.xlu0 %1155
  %1159 = vset.pattern.permute.xlu0 0
  %1160 = vperm.xlu0 %1159, %v598
  %v1161 = vpop.permute.xlu0 %1160
  %1164 = vset.pattern.permute.xlu0 0
  %1165 = vperm.xlu0 %1164, %v599
  %v1166 = vpop.permute.xlu0 %1165
  %1169 = vset.pattern.permute.xlu0 0
  %1170 = vperm.xlu0 %1169, %v600
  %v1171 = vpop.permute.xlu0 %1170
  %1174 = vset.pattern.permute.xlu0 0
  %1175 = vperm.xlu0 %1174, %v601
  %v1176 = vpop.permute.xlu0 %1175
  %1179 = vset.pattern.permute.xlu0 0
  %1180 = vperm.xlu0 %1179, %v602
  %v1181 = vpop.permute.xlu0 %1180
  %1184 = vset.pattern.permute.xlu0 0
  %1185 = vperm.xlu0 %1184, %v603
  %v1186 = vpop.permute.xlu0 %1185
  %1189 = vset.pattern.permute.xlu0 0
  %1190 = vperm.xlu0 %1189, %v604
  %v1191 = vpop.permute.xlu0 %1190
  %1194 = vset.pattern.permute.xlu0 0
  %1195 = vperm.xlu0 %1194, %v605
  %v1196 = vpop.permute.xlu0 %1195
  %1199 = vset.pattern.permute.xlu0 0
  %1200 = vperm.xlu0 %1199, %v606
  %v1201 = vpop.permute.xlu0 %1200
  %1204 = vset.pattern.permute.xlu0 0
  %1205 = vperm.xlu0 %1204, %v607
  %v1206 = vpop.permute.xlu0 %1205
  %1209 = vset.pattern.permute.xlu0 0
  %1210 = vperm.xlu0 %1209, %v608
  %v1211 = vpop.permute.xlu0 %1210
  %1214 = vset.pattern.permute.xlu0 0
  %1215 = vperm.xlu0 %1214, %v609
  %v1216 = vpop.permute.xlu0 %1215
  %1219 = vset.pattern.permute.xlu0 0
  %1220 = vperm.xlu0 %1219, %v610
  %v1221 = vpop.permute.xlu0 %1220
  %1224 = vset.pattern.permute.xlu0 0
  %1225 = vperm.xlu0 %1224, %v611
  %v1226 = vpop.permute.xlu0 %1225
  %1229 = vset.pattern.permute.xlu0 0
  %1230 = vperm.xlu0 %1229, %v612
  %v1231 = vpop.permute.xlu0 %1230
  %1234 = vset.pattern.permute.xlu0 0
  %1235 = vperm.xlu0 %1234, %v613
  %v1236 = vpop.permute.xlu0 %1235
  %1239 = vset.pattern.permute.xlu0 0
  %1240 = vperm.xlu0 %1239, %v614
  %v1241 = vpop.permute.xlu0 %1240
  %1244 = vset.pattern.permute.xlu0 0
  %1245 = vperm.xlu0 %1244, %v615
  %v1246 = vpop.permute.xlu0 %1245
  %1249 = vset.pattern.permute.xlu0 0
  %1250 = vperm.xlu0 %1249, %v616
  %v1251 = vpop.permute.xlu0 %1250
  %1254 = vset.pattern.permute.xlu0 0
  %1255 = vperm.xlu0 %1254, %v617
  %v1256 = vpop.permute.xlu0 %1255
  %1259 = vset.pattern.permute.xlu0 0
  %1260 = vperm.xlu0 %1259, %v618
  %v1261 = vpop.permute.xlu0 %1260
  %1264 = vset.pattern.permute.xlu0 0
  %1265 = vperm.xlu0 %1264, %v619
  %v1266 = vpop.permute.xlu0 %1265
  %1269 = vset.pattern.permute.xlu0 0
  %1270 = vperm.xlu0 %1269, %v620
  %v1271 = vpop.permute.xlu0 %1270
  %1274 = vset.pattern.permute.xlu0 0
  %1275 = vperm.xlu0 %1274, %v621
  %v1276 = vpop.permute.xlu0 %1275
  %1279 = vset.pattern.permute.xlu0 0
  %1280 = vperm.xlu0 %1279, %v622
  %v1281 = vpop.permute.xlu0 %1280
  %1284 = vset.pattern.permute.xlu0 0
  %1285 = vperm.xlu0 %1284, %v623
  %v1286 = vpop.permute.xlu0 %1285
  %1289 = vset.pattern.permute.xlu0 0
  %1290 = vperm.xlu0 %1289, %v624
  %v1291 = vpop.permute.xlu0 %1290
  %1294 = vset.pattern.permute.xlu0 0
  %1295 = vperm.xlu0 %1294, %v625
  %v1296 = vpop.permute.xlu0 %1295
  %1299 = vset.pattern.permute.xlu0 0
  %1300 = vperm.xlu0 %1299, %v626
  %v1301 = vpop.permute.xlu0 %1300
  %1304 = vset.pattern.permute.xlu0 0
  %1305 = vperm.xlu0 %1304, %v627
  %v1306 = vpop.permute.xlu0 %1305
  %1309 = vset.pattern.permute.xlu0 0
  %1310 = vperm.xlu0 %1309, %v628
  %v1311 = vpop.permute.xlu0 %1310
  %1314 = vset.pattern.permute.xlu0 0
  %1315 = vperm.xlu0 %1314, %v629
  %v1316 = vpop.permute.xlu0 %1315
  %1319 = vset.pattern.permute.xlu0 0
  %1320 = vperm.xlu0 %1319, %v630
  %v1321 = vpop.permute.xlu0 %1320
  %1324 = vset.pattern.permute.xlu0 0
  %1325 = vperm.xlu0 %1324, %v631
  %v1326 = vpop.permute.xlu0 %1325
  %1329 = vset.pattern.permute.xlu0 0
  %1330 = vperm.xlu0 %1329, %v632
  %v1331 = vpop.permute.xlu0 %1330
  %1334 = vset.pattern.permute.xlu0 0
  %1335 = vperm.xlu0 %1334, %v633
  %v1336 = vpop.permute.xlu0 %1335
  %1339 = vset.pattern.permute.xlu0 0
  %1340 = vperm.xlu0 %1339, %v634
  %v1341 = vpop.permute.xlu0 %1340
  %1344 = vset.pattern.permute.xlu0 0
  %1345 = vperm.xlu0 %1344, %v635
  %v1346 = vpop.permute.xlu0 %1345
  %1349 = vset.pattern.permute.xlu0 0
  %1350 = vperm.xlu0 %1349, %v636
  %v1351 = vpop.permute.xlu0 %1350
  %1354 = vset.pattern.permute.xlu0 0
  %1355 = vperm.xlu0 %1354, %v637
  %v1356 = vpop.permute.xlu0 %1355
  %1359 = vset.pattern.permute.xlu0 0
  %1360 = vperm.xlu0 %1359, %v638
  %v1361 = vpop.permute.xlu0 %1360
  %1364 = vset.pattern.permute.xlu0 0
  %1365 = vperm.xlu0 %1364, %v639
  %v1366 = vpop.permute.xlu0 %1365
  %1369 = vset.pattern.permute.xlu0 0
  %1370 = vperm.xlu0 %1369, %v640
  %v1371 = vpop.permute.xlu0 %1370
  %1374 = vset.pattern.permute.xlu0 0
  %1375 = vperm.xlu0 %1374, %v641
  %v1376 = vpop.permute.xlu0 %1375
  %1379 = vset.pattern.permute.xlu0 0
  %1380 = vperm.xlu0 %1379, %v642
  %v1381 = vpop.permute.xlu0 %1380
  %1384 = vset.pattern.permute.xlu0 0
  %1385 = vperm.xlu0 %1384, %v643
  %v1386 = vpop.permute.xlu0 %1385
  %1389 = vset.pattern.permute.xlu0 0
  %1390 = vperm.xlu0 %1389, %v644
  %v1391 = vpop.permute.xlu0 %1390
  %1394 = vset.pattern.permute.xlu0 0
  %1395 = vperm.xlu0 %1394, %v645
  %v1396 = vpop.permute.xlu0 %1395
  %1399 = vset.pattern.permute.xlu0 0
  %1400 = vperm.xlu0 %1399, %v646
  %v1401 = vpop.permute.xlu0 %1400
  %1404 = vset.pattern.permute.xlu0 0
  %1405 = vperm.xlu0 %1404, %v647
  %v1406 = vpop.permute.xlu0 %1405
  %1409 = vset.pattern.permute.xlu0 0
  %1410 = vperm.xlu0 %1409, %v648
  %v1411 = vpop.permute.xlu0 %1410
  %1414 = vset.pattern.permute.xlu0 0
  %1415 = vperm.xlu0 %1414, %v649
  %v1416 = vpop.permute.xlu0 %1415
  %1419 = vset.pattern.permute.xlu0 0
  %1420 = vperm.xlu0 %1419, %v650
  %v1421 = vpop.permute.xlu0 %1420
  %1424 = vset.pattern.permute.xlu0 0
  %1425 = vperm.xlu0 %1424, %v651
  %v1426 = vpop.permute.xlu0 %1425
  %1429 = vset.pattern.permute.xlu0 0
  %1430 = vperm.xlu0 %1429, %v652
  %v1431 = vpop.permute.xlu0 %1430
  %1434 = vset.pattern.permute.xlu0 0
  %1435 = vperm.xlu0 %1434, %v653
  %v1436 = vpop.permute.xlu0 %1435
  %1439 = vset.pattern.permute.xlu0 0
  %1440 = vperm.xlu0 %1439, %v654
  %v1441 = vpop.permute.xlu0 %1440
  %1444 = vset.pattern.permute.xlu0 0
  %1445 = vperm.xlu0 %1444, %v655
  %v1446 = vpop.permute.xlu0 %1445
  %1449 = vset.pattern.permute.xlu0 0
  %1450 = vperm.xlu0 %1449, %v656
  %v1451 = vpop.permute.xlu0 %1450
  %1454 = vset.pattern.permute.xlu0 0
  %1455 = vperm.xlu0 %1454, %v657
  %v1456 = vpop.permute.xlu0 %1455
  %1459 = vset.pattern.permute.xlu0 0
  %1460 = vperm.xlu0 %1459, %v658
  %v1461 = vpop.permute.xlu0 %1460
  %1464 = vset.pattern.permute.xlu0 0
  %1465 = vperm.xlu0 %1464, %v659
  %v1466 = vpop.permute.xlu0 %1465
  %1469 = vset.pattern.permute.xlu0 0
  %1470 = vperm.xlu0 %1469, %v660
  %v1471 = vpop.permute.xlu0 %1470
  %1474 = vset.pattern.permute.xlu0 0
  %1475 = vperm.xlu0 %1474, %v661
  %v1476 = vpop.permute.xlu0 %1475
  %1479 = vset.pattern.permute.xlu0 0
  %1480 = vperm.xlu0 %1479, %v662
  %v1481 = vpop.permute.xlu0 %1480
  %1484 = vset.pattern.permute.xlu0 0
  %1485 = vperm.xlu0 %1484, %v663
  %v1486 = vpop.permute.xlu0 %1485
  %1489 = vset.pattern.permute.xlu0 0
  %1490 = vperm.xlu0 %1489, %v664
  %v1491 = vpop.permute.xlu0 %1490
  %1494 = vset.pattern.permute.xlu0 0
  %1495 = vperm.xlu0 %1494, %v665
  %v1496 = vpop.permute.xlu0 %1495
  %1499 = vset.pattern.permute.xlu0 0
  %1500 = vperm.xlu0 %1499, %v666
  %v1501 = vpop.permute.xlu0 %1500
  %1504 = vset.pattern.permute.xlu0 0
  %1505 = vperm.xlu0 %1504, %v667
  %v1506 = vpop.permute.xlu0 %1505
  %1509 = vset.pattern.permute.xlu0 0
  %1510 = vperm.xlu0 %1509, %v668
  %v1511 = vpop.permute.xlu0 %1510
  %1514 = vset.pattern.permute.xlu0 0
  %1515 = vperm.xlu0 %1514, %v669
  %v1516 = vpop.permute.xlu0 %1515
  %1519 = vset.pattern.permute.xlu0 0
  %1520 = vperm.xlu0 %1519, %v670
  %v1521 = vpop.permute.xlu0 %1520
  %1524 = vset.pattern.permute.xlu0 0
  %1525 = vperm.xlu0 %1524, %v671
  %v1526 = vpop.permute.xlu0 %1525
  %1529 = vset.pattern.permute.xlu0 0
  %1530 = vperm.xlu0 %1529, %v672
  %v1531 = vpop.permute.xlu0 %1530
  %1534 = vset.pattern.permute.xlu0 0
  %1535 = vperm.xlu0 %1534, %v673
  %v1536 = vpop.permute.xlu0 %1535
  %1539 = vset.pattern.permute.xlu0 0
  %1540 = vperm.xlu0 %1539, %v674
  %v1541 = vpop.permute.xlu0 %1540
  %1544 = vset.pattern.permute.xlu0 0
  %1545 = vperm.xlu0 %1544, %v675
  %v1546 = vpop.permute.xlu0 %1545
  %1549 = vset.pattern.permute.xlu0 0
  %1550 = vperm.xlu0 %1549, %v676
  %v1551 = vpop.permute.xlu0 %1550
  %1554 = vset.pattern.permute.xlu0 0
  %1555 = vperm.xlu0 %1554, %v677
  %v1556 = vpop.permute.xlu0 %1555
  %1559 = vset.pattern.permute.xlu0 0
  %1560 = vperm.xlu0 %1559, %v678
  %v1561 = vpop.permute.xlu0 %1560
  %1564 = vset.pattern.permute.xlu0 0
  %1565 = vperm.xlu0 %1564, %v679
  %v1566 = vpop.permute.xlu0 %1565
  %1569 = vset.pattern.permute.xlu0 0
  %1570 = vperm.xlu0 %1569, %v680
  %v1571 = vpop.permute.xlu0 %1570
  %1574 = vset.pattern.permute.xlu0 0
  %1575 = vperm.xlu0 %1574, %v681
  %v1576 = vpop.permute.xlu0 %1575
  %1579 = vset.pattern.permute.xlu0 0
  %1580 = vperm.xlu0 %1579, %v682
  %v1581 = vpop.permute.xlu0 %1580
  %1584 = vset.pattern.permute.xlu0 0
  %1585 = vperm.xlu0 %1584, %v683
  %v1586 = vpop.permute.xlu0 %1585
  %1589 = vset.pattern.permute.xlu0 0
  %1590 = vperm.xlu0 %1589, %v684
  %v1591 = vpop.permute.xlu0 %1590
  %1594 = vset.pattern.permute.xlu0 0
  %1595 = vperm.xlu0 %1594, %v685
  %v1596 = vpop.permute.xlu0 %1595
  %1599 = vset.pattern.permute.xlu0 0
  %1600 = vperm.xlu0 %1599, %v686
  %v1601 = vpop.permute.xlu0 %1600
  %1604 = vset.pattern.permute.xlu0 0
  %1605 = vperm.xlu0 %1604, %v687
  %v1606 = vpop.permute.xlu0 %1605
  %1609 = vset.pattern.permute.xlu0 0
  %1610 = vperm.xlu0 %1609, %v688
  %v1611 = vpop.permute.xlu0 %1610
  %1614 = vset.pattern.permute.xlu0 0
  %1615 = vperm.xlu0 %1614, %v689
  %v1616 = vpop.permute.xlu0 %1615
  %1619 = vset.pattern.permute.xlu0 0
  %1620 = vperm.xlu0 %1619, %v690
  %v1621 = vpop.permute.xlu0 %1620
  %1624 = vset.pattern.permute.xlu0 0
  %1625 = vperm.xlu0 %1624, %v691
  %v1626 = vpop.permute.xlu0 %1625
  %1629 = vset.pattern.permute.xlu0 0
  %1630 = vperm.xlu0 %1629, %v692
  %v1631 = vpop.permute.xlu0 %1630
  %1634 = vset.pattern.permute.xlu0 0
  %1635 = vperm.xlu0 %1634, %v693
  %v1636 = vpop.permute.xlu0 %1635
  %1639 = vset.pattern.permute.xlu0 0
  %1640 = vperm.xlu0 %1639, %v694
  %v1641 = vpop.permute.xlu0 %1640
  %1644 = vset.pattern.permute.xlu0 0
  %1645 = vperm.xlu0 %1644, %v695
  %v1646 = vpop.permute.xlu0 %1645
  %1649 = vset.pattern.permute.xlu0 0
  %1650 = vperm.xlu0 %1649, %v696
  %v1651 = vpop.permute.xlu0 %1650
  %1654 = vset.pattern.permute.xlu0 0
  %1655 = vperm.xlu0 %1654, %v697
  %v1656 = vpop.permute.xlu0 %1655
  %1659 = vset.pattern.permute.xlu0 0
  %1660 = vperm.xlu0 %1659, %v698
  %v1661 = vpop.permute.xlu0 %1660
  %1664 = vset.pattern.permute.xlu0 0
  %1665 = vperm.xlu0 %1664, %v699
  %v1666 = vpop.permute.xlu0 %1665
  %1669 = vset.pattern.permute.xlu0 0
  %1670 = vperm.xlu0 %1669, %v700
  %v1671 = vpop.permute.xlu0 %1670
  %1674 = vset.pattern.permute.xlu0 0
  %1675 = vperm.xlu0 %1674, %v701
  %v1676 = vpop.permute.xlu0 %1675
  %1679 = vset.pattern.permute.xlu0 0
  %1680 = vperm.xlu0 %1679, %v702
  %v1681 = vpop.permute.xlu0 %1680
  %1684 = vset.pattern.permute.xlu0 0
  %1685 = vperm.xlu0 %1684, %v703
  %v1686 = vpop.permute.xlu0 %1685
  %1689 = vset.pattern.permute.xlu0 0
  %1690 = vperm.xlu0 %1689, %v704
  %v1691 = vpop.permute.xlu0 %1690
  %1694 = vset.pattern.permute.xlu0 0
  %1695 = vperm.xlu0 %1694, %v705
  %v1696 = vpop.permute.xlu0 %1695
  %1699 = vset.pattern.permute.xlu0 0
  %1700 = vperm.xlu0 %1699, %v706
  %v1701 = vpop.permute.xlu0 %1700
  %1704 = vset.pattern.permute.xlu0 0
  %1705 = vperm.xlu0 %1704, %v707
  %v1706 = vpop.permute.xlu0 %1705
  %1709 = vset.pattern.permute.xlu0 0
  %1710 = vperm.xlu0 %1709, %v708
  %v1711 = vpop.permute.xlu0 %1710
  %1714 = vset.pattern.permute.xlu0 0
  %1715 = vperm.xlu0 %1714, %v709
  %v1716 = vpop.permute.xlu0 %1715
  %1719 = vset.pattern.permute.xlu0 0
  %1720 = vperm.xlu0 %1719, %v710
  %v1721 = vpop.permute.xlu0 %1720
  %1724 = vset.pattern.permute.xlu0 0
  %1725 = vperm.xlu0 %1724, %v711
  %v1726 = vpop.permute.xlu0 %1725
  %1729 = vset.pattern.permute.xlu0 0
  %1730 = vperm.xlu0 %1729, %v712
  %v1731 = vpop.permute.xlu0 %1730
  %1734 = vset.pattern.permute.xlu0 0
  %1735 = vperm.xlu0 %1734, %v713
  %v1736 = vpop.permute.xlu0 %1735
  %1739 = vset.pattern.permute.xlu0 0
  %1740 = vperm.xlu0 %1739, %v714
  %v1741 = vpop.permute.xlu0 %1740
  %1744 = vset.pattern.permute.xlu0 0
  %1745 = vperm.xlu0 %1744, %v715
  %v1746 = vpop.permute.xlu0 %1745
  %1749 = vset.pattern.permute.xlu0 0
  %1750 = vperm.xlu0 %1749, %v716
  %v1751 = vpop.permute.xlu0 %1750
  %1754 = vset.pattern.permute.xlu0 0
  %1755 = vperm.xlu0 %1754, %v717
  %v1756 = vpop.permute.xlu0 %1755
  %1759 = vset.pattern.permute.xlu0 0
  %1760 = vperm.xlu0 %1759, %v718
  %v1761 = vpop.permute.xlu0 %1760
  %1764 = vset.pattern.permute.xlu0 0
  %1765 = vperm.xlu0 %1764, %v719
  %v1766 = vpop.permute.xlu0 %1765
  %1769 = vset.pattern.permute.xlu0 0
  %1770 = vperm.xlu0 %1769, %v720
  %v1771 = vpop.permute.xlu0 %1770
  %1774 = vset.pattern.permute.xlu0 0
  %1775 = vperm.xlu0 %1774, %v721
  %v1776 = vpop.permute.xlu0 %1775
  %1779 = vset.pattern.permute.xlu0 0
  %1780 = vperm.xlu0 %1779, %v722
  %v1781 = vpop.permute.xlu0 %1780
  %1784 = vset.pattern.permute.xlu0 0
  %1785 = vperm.xlu0 %1784, %v723
  %v1786 = vpop.permute.xlu0 %1785
  %1789 = vset.pattern.permute.xlu0 0
  %1790 = vperm.xlu0 %1789, %v724
  %v1791 = vpop.permute.xlu0 %1790
  %1794 = vset.pattern.permute.xlu0 0
  %1795 = vperm.xlu0 %1794, %v725
  %v1796 = vpop.permute.xlu0 %1795
  %1799 = vset.pattern.permute.xlu0 0
  %1800 = vperm.xlu0 %1799, %v726
  %v1801 = vpop.permute.xlu0 %1800
  %1804 = vset.pattern.permute.xlu0 0
  %1805 = vperm.xlu0 %1804, %v727
  %v1806 = vpop.permute.xlu0 %1805
  %1809 = vset.pattern.permute.xlu0 0
  %1810 = vperm.xlu0 %1809, %v728
  %v1811 = vpop.permute.xlu0 %1810
  %1814 = vset.pattern.permute.xlu0 0
  %1815 = vperm.xlu0 %1814, %v729
  %v1816 = vpop.permute.xlu0 %1815
  %1819 = vset.pattern.permute.xlu0 0
  %1820 = vperm.xlu0 %1819, %v730
  %v1821 = vpop.permute.xlu0 %1820
  %1824 = vset.pattern.permute.xlu0 0
  %1825 = vperm.xlu0 %1824, %v731
  %v1826 = vpop.permute.xlu0 %1825
  %1829 = vset.pattern.permute.xlu0 0
  %1830 = vperm.xlu0 %1829, %v732
  %v1831 = vpop.permute.xlu0 %1830
  %1834 = vset.pattern.permute.xlu0 0
  %1835 = vperm.xlu0 %1834, %v733
  %v1836 = vpop.permute.xlu0 %1835
  %1839 = vset.pattern.permute.xlu0 0
  %1840 = vperm.xlu0 %1839, %v734
  %v1841 = vpop.permute.xlu0 %1840
  %1844 = vset.pattern.permute.xlu0 0
  %1845 = vperm.xlu0 %1844, %v735
  %v1846 = vpop.permute.xlu0 %1845
  %1849 = vset.pattern.permute.xlu0 0
  %1850 = vperm.xlu0 %1849, %v736
  %v1851 = vpop.permute.xlu0 %1850
  %1854 = vset.pattern.permute.xlu0 0
  %1855 = vperm.xlu0 %1854, %v737
  %v1856 = vpop.permute.xlu0 %1855
  %1859 = vset.pattern.permute.xlu0 0
  %1860 = vperm.xlu0 %1859, %v738
  %v1861 = vpop.permute.xlu0 %1860
  %1864 = vset.pattern.permute.xlu0 0
  %1865 = vperm.xlu0 %1864, %v739
  %v1866 = vpop.permute.xlu0 %1865
  %1869 = vset.pattern.permute.xlu0 0
  %1870 = vperm.xlu0 %1869, %v740
  %v1871 = vpop.permute.xlu0 %1870
  %1874 = vset.pattern.permute.xlu0 0
  %1875 = vperm.xlu0 %1874, %v741
  %v1876 = vpop.permute.xlu0 %1875
  %1879 = vset.pattern.permute.xlu0 0
  %1880 = vperm.xlu0 %1879, %v742
  %v1881 = vpop.permute.xlu0 %1880
  %1884 = vset.pattern.permute.xlu0 0
  %1885 = vperm.xlu0 %1884, %v743
  %v1886 = vpop.permute.xlu0 %1885
  %1889 = vset.pattern.permute.xlu0 0
  %1890 = vperm.xlu0 %1889, %v744
  %v1891 = vpop.permute.xlu0 %1890
  %1894 = vset.pattern.permute.xlu0 0
  %1895 = vperm.xlu0 %1894, %v745
  %v1896 = vpop.permute.xlu0 %1895
  %1899 = vset.pattern.permute.xlu0 0
  %1900 = vperm.xlu0 %1899, %v746
  %v1901 = vpop.permute.xlu0 %1900
  %1904 = vset.pattern.permute.xlu0 0
  %1905 = vperm.xlu0 %1904, %v747
  %v1906 = vpop.permute.xlu0 %1905
  %1909 = vset.pattern.permute.xlu0 0
  %1910 = vperm.xlu0 %1909, %v748
  %v1911 = vpop.permute.xlu0 %1910
  %1914 = vset.pattern.permute.xlu0 0
  %1915 = vperm.xlu0 %1914, %v749
  %v1916 = vpop.permute.xlu0 %1915
  %1919 = vset.pattern.permute.xlu0 0
  %1920 = vperm.xlu0 %1919, %v750
  %v1921 = vpop.permute.xlu0 %1920
  %1924 = vset.pattern.permute.xlu0 0
  %1925 = vperm.xlu0 %1924, %v751
  %v1926 = vpop.permute.xlu0 %1925
  %1929 = vset.pattern.permute.xlu0 0
  %1930 = vperm.xlu0 %1929, %v752
  %v1931 = vpop.permute.xlu0 %1930
  %1934 = vset.pattern.permute.xlu0 0
  %1935 = vperm.xlu0 %1934, %v753
  %v1936 = vpop.permute.xlu0 %1935
  %1939 = vset.pattern.permute.xlu0 0
  %1940 = vperm.xlu0 %1939, %v754
  %v1941 = vpop.permute.xlu0 %1940
  %1944 = vset.pattern.permute.xlu0 0
  %1945 = vperm.xlu0 %1944, %v755
  %v1946 = vpop.permute.xlu0 %1945
  %1949 = vset.pattern.permute.xlu0 0
  %1950 = vperm.xlu0 %1949, %v756
  %v1951 = vpop.permute.xlu0 %1950
  %1954 = vset.pattern.permute.xlu0 0
  %1955 = vperm.xlu0 %1954, %v757
  %v1956 = vpop.permute.xlu0 %1955
  %1959 = vset.pattern.permute.xlu0 0
  %1960 = vperm.xlu0 %1959, %v758
  %v1961 = vpop.permute.xlu0 %1960
  %1964 = vset.pattern.permute.xlu0 0
  %1965 = vperm.xlu0 %1964, %v759
  %v1966 = vpop.permute.xlu0 %1965
  %1969 = vset.pattern.permute.xlu0 0
  %1970 = vperm.xlu0 %1969, %v760
  %v1971 = vpop.permute.xlu0 %1970
  %1974 = vset.pattern.permute.xlu0 0
  %1975 = vperm.xlu0 %1974, %v761
  %v1976 = vpop.permute.xlu0 %1975
  %1979 = vset.pattern.permute.xlu0 0
  %1980 = vperm.xlu0 %1979, %v762
  %v1981 = vpop.permute.xlu0 %1980
  %1984 = vset.pattern.permute.xlu0 0
  %1985 = vperm.xlu0 %1984, %v763
  %v1986 = vpop.permute.xlu0 %1985
  %1989 = vset.pattern.permute.xlu0 0
  %1990 = vperm.xlu0 %1989, %v764
  %v1991 = vpop.permute.xlu0 %1990
  %1994 = vset.pattern.permute.xlu0 0
  %1995 = vperm.xlu0 %1994, %v765
  %v1996 = vpop.permute.xlu0 %1995
  %1999 = vset.pattern.permute.xlu0 0
  %2000 = vperm.xlu0 %1999, %v766
  %v2001 = vpop.permute.xlu0 %2000
  %2004 = vset.pattern.permute.xlu0 0
  %2005 = vperm.xlu0 %2004, %v767
  %v2006 = vpop.permute.xlu0 %2005
  %2009 = vset.pattern.permute.xlu0 0
  %2010 = vperm.xlu0 %2009, %v768
  %v2011 = vpop.permute.xlu0 %2010
  %2014 = vset.pattern.permute.xlu0 0
  %2015 = vperm.xlu0 %2014, %v769
  %v2016 = vpop.permute.xlu0 %2015
  %2019 = vset.pattern.permute.xlu0 0
  %2020 = vperm.xlu0 %2019, %v770
  %v2021 = vpop.permute.xlu0 %2020
  %2024 = vset.pattern.permute.xlu0 0
  %2025 = vperm.xlu0 %2024, %v771
  %v2026 = vpop.permute.xlu0 %2025
  %2029 = vset.pattern.permute.xlu0 0
  %2030 = vperm.xlu0 %2029, %v772
  %v2031 = vpop.permute.xlu0 %2030
  %2034 = vset.pattern.permute.xlu0 0
  %2035 = vperm.xlu0 %2034, %v773
  %v2036 = vpop.permute.xlu0 %2035
  %2039 = vset.pattern.permute.xlu0 0
  %2040 = vperm.xlu0 %2039, %v774
  %v2041 = vpop.permute.xlu0 %2040
  %2044 = vset.pattern.permute.xlu0 0
  %2045 = vperm.xlu0 %2044, %v775
  %v2046 = vpop.permute.xlu0 %2045
  %2049 = vset.pattern.permute.xlu0 0
  %2050 = vperm.xlu0 %2049, %v776
  %v2051 = vpop.permute.xlu0 %2050
  %2054 = vset.pattern.permute.xlu0 0
  %2055 = vperm.xlu0 %2054, %v777
  %v2056 = vpop.permute.xlu0 %2055
  %2059 = vset.pattern.permute.xlu0 0
  %2060 = vperm.xlu0 %2059, %v778
  %v2061 = vpop.permute.xlu0 %2060
  %v2063 = vmul.f32 %v782, %v786
  %v2064 = vmul.f32 %v782, %v791
  %v2065 = vmul.f32 %v782, %v796
  %v2066 = vmul.f32 %v782, %v801
  %v2067 = vmul.f32 %v782, %v806
  %v2068 = vmul.f32 %v782, %v811
  %v2069 = vmul.f32 %v782, %v816
  %v2070 = vmul.f32 %v782, %v821
  %v2071 = vmul.f32 %v782, %v826
  %v2072 = vmul.f32 %v782, %v831
  %v2073 = vmul.f32 %v782, %v836
  %v2074 = vmul.f32 %v782, %v841
  %v2075 = vmul.f32 %v782, %v846
  %v2076 = vmul.f32 %v782, %v851
  %v2077 = vmul.f32 %v782, %v856
  %v2078 = vmul.f32 %v782, %v861
  %v2079 = vmul.f32 %v782, %v866
  %v2080 = vmul.f32 %v782, %v871
  %v2081 = vmul.f32 %v782, %v876
  %v2082 = vmul.f32 %v782, %v881
  %v2083 = vmul.f32 %v782, %v886
  %v2084 = vmul.f32 %v782, %v891
  %v2085 = vmul.f32 %v782, %v896
  %v2086 = vmul.f32 %v782, %v901
  %v2087 = vmul.f32 %v782, %v906
  %v2088 = vmul.f32 %v782, %v911
  %v2089 = vmul.f32 %v782, %v916
  %v2090 = vmul.f32 %v782, %v921
  %v2091 = vmul.f32 %v782, %v926
  %v2092 = vmul.f32 %v782, %v931
  %v2093 = vmul.f32 %v782, %v936
  %v2094 = vmul.f32 %v782, %v941
  %v2095 = vmul.f32 %v782, %v946
  %v2096 = vmul.f32 %v782, %v951
  %v2097 = vmul.f32 %v782, %v956
  %v2098 = vmul.f32 %v782, %v961
  %v2099 = vmul.f32 %v782, %v966
  %v2100 = vmul.f32 %v782, %v971
  %v2101 = vmul.f32 %v782, %v976
  %v2102 = vmul.f32 %v782, %v981
  %v2103 = vmul.f32 %v782, %v986
  %v2104 = vmul.f32 %v782, %v991
  %v2105 = vmul.f32 %v782, %v996
  %v2106 = vmul.f32 %v782, %v1001
  %v2107 = vmul.f32 %v782, %v1006
  %v2108 = vmul.f32 %v782, %v1011
  %v2109 = vmul.f32 %v782, %v1016
  %v2110 = vmul.f32 %v782, %v1021
  %v2111 = vmul.f32 %v782, %v1026
  %v2112 = vmul.f32 %v782, %v1031
  %v2113 = vmul.f32 %v782, %v1036
  %v2114 = vmul.f32 %v782, %v1041
  %v2115 = vmul.f32 %v782, %v1046
  %v2116 = vmul.f32 %v782, %v1051
  %v2117 = vmul.f32 %v782, %v1056
  %v2118 = vmul.f32 %v782, %v1061
  %v2119 = vmul.f32 %v782, %v1066
  %v2120 = vmul.f32 %v782, %v1071
  %v2121 = vmul.f32 %v782, %v1076
  %v2122 = vmul.f32 %v782, %v1081
  %v2123 = vmul.f32 %v782, %v1086
  %v2124 = vmul.f32 %v782, %v1091
  %v2125 = vmul.f32 %v782, %v1096
  %v2126 = vmul.f32 %v782, %v1101
  %v2127 = vmul.f32 %v782, %v1106
  %v2128 = vmul.f32 %v782, %v1111
  %v2129 = vmul.f32 %v782, %v1116
  %v2130 = vmul.f32 %v782, %v1121
  %v2131 = vmul.f32 %v782, %v1126
  %v2132 = vmul.f32 %v782, %v1131
  %v2133 = vmul.f32 %v782, %v1136
  %v2134 = vmul.f32 %v782, %v1141
  %v2135 = vmul.f32 %v782, %v1146
  %v2136 = vmul.f32 %v782, %v1151
  %v2137 = vmul.f32 %v782, %v1156
  %v2138 = vmul.f32 %v782, %v1161
  %v2139 = vmul.f32 %v782, %v1166
  %v2140 = vmul.f32 %v782, %v1171
  %v2141 = vmul.f32 %v782, %v1176
  %v2142 = vmul.f32 %v782, %v1181
  %v2143 = vmul.f32 %v782, %v1186
  %v2144 = vmul.f32 %v782, %v1191
  %v2145 = vmul.f32 %v782, %v1196
  %v2146 = vmul.f32 %v782, %v1201
  %v2147 = vmul.f32 %v782, %v1206
  %v2148 = vmul.f32 %v782, %v1211
  %v2149 = vmul.f32 %v782, %v1216
  %v2150 = vmul.f32 %v782, %v1221
  %v2151 = vmul.f32 %v782, %v1226
  %v2152 = vmul.f32 %v782, %v1231
  %v2153 = vmul.f32 %v782, %v1236
  %v2154 = vmul.f32 %v782, %v1241
  %v2155 = vmul.f32 %v782, %v1246
  %v2156 = vmul.f32 %v782, %v1251
  %v2157 = vmul.f32 %v782, %v1256
  %v2158 = vmul.f32 %v782, %v1261
  %v2159 = vmul.f32 %v782, %v1266
  %v2160 = vmul.f32 %v782, %v1271
  %v2161 = vmul.f32 %v782, %v1276
  %v2162 = vmul.f32 %v782, %v1281
  %v2163 = vmul.f32 %v782, %v1286
  %v2164 = vmul.f32 %v782, %v1291
  %v2165 = vmul.f32 %v782, %v1296
  %v2166 = vmul.f32 %v782, %v1301
  %v2167 = vmul.f32 %v782, %v1306
  %v2168 = vmul.f32 %v782, %v1311
  %v2169 = vmul.f32 %v782, %v1316
  %v2170 = vmul.f32 %v782, %v1321
  %v2171 = vmul.f32 %v782, %v1326
  %v2172 = vmul.f32 %v782, %v1331
  %v2173 = vmul.f32 %v782, %v1336
  %v2174 = vmul.f32 %v782, %v1341
  %v2175 = vmul.f32 %v782, %v1346
  %v2176 = vmul.f32 %v782, %v1351
  %v2177 = vmul.f32 %v782, %v1356
  %v2178 = vmul.f32 %v782, %v1361
  %v2179 = vmul.f32 %v782, %v1366
  %v2180 = vmul.f32 %v782, %v1371
  %v2181 = vmul.f32 %v782, %v1376
  %v2182 = vmul.f32 %v782, %v1381
  %v2183 = vmul.f32 %v782, %v1386
  %v2184 = vmul.f32 %v782, %v1391
  %v2185 = vmul.f32 %v782, %v1396
  %v2186 = vmul.f32 %v782, %v1401
  %v2187 = vmul.f32 %v782, %v1406
  %v2188 = vmul.f32 %v782, %v1411
  %v2189 = vmul.f32 %v782, %v1416
  %v2190 = vmul.f32 %v782, %v1421
  %v2191 = vmul.f32 %v782, %v1426
  %v2192 = vmul.f32 %v782, %v1431
  %v2193 = vmul.f32 %v782, %v1436
  %v2194 = vmul.f32 %v782, %v1441
  %v2195 = vmul.f32 %v782, %v1446
  %v2196 = vmul.f32 %v782, %v1451
  %v2197 = vmul.f32 %v782, %v1456
  %v2198 = vmul.f32 %v782, %v1461
  %v2199 = vmul.f32 %v782, %v1466
  %v2200 = vmul.f32 %v782, %v1471
  %v2201 = vmul.f32 %v782, %v1476
  %v2202 = vmul.f32 %v782, %v1481
  %v2203 = vmul.f32 %v782, %v1486
  %v2204 = vmul.f32 %v782, %v1491
  %v2205 = vmul.f32 %v782, %v1496
  %v2206 = vmul.f32 %v782, %v1501
  %v2207 = vmul.f32 %v782, %v1506
  %v2208 = vmul.f32 %v782, %v1511
  %v2209 = vmul.f32 %v782, %v1516
  %v2210 = vmul.f32 %v782, %v1521
  %v2211 = vmul.f32 %v782, %v1526
  %v2212 = vmul.f32 %v782, %v1531
  %v2213 = vmul.f32 %v782, %v1536
  %v2214 = vmul.f32 %v782, %v1541
  %v2215 = vmul.f32 %v782, %v1546
  %v2216 = vmul.f32 %v782, %v1551
  %v2217 = vmul.f32 %v782, %v1556
  %v2218 = vmul.f32 %v782, %v1561
  %v2219 = vmul.f32 %v782, %v1566
  %v2220 = vmul.f32 %v782, %v1571
  %v2221 = vmul.f32 %v782, %v1576
  %v2222 = vmul.f32 %v782, %v1581
  %v2223 = vmul.f32 %v782, %v1586
  %v2224 = vmul.f32 %v782, %v1591
  %v2225 = vmul.f32 %v782, %v1596
  %v2226 = vmul.f32 %v782, %v1601
  %v2227 = vmul.f32 %v782, %v1606
  %v2228 = vmul.f32 %v782, %v1611
  %v2229 = vmul.f32 %v782, %v1616
  %v2230 = vmul.f32 %v782, %v1621
  %v2231 = vmul.f32 %v782, %v1626
  %v2232 = vmul.f32 %v782, %v1631
  %v2233 = vmul.f32 %v782, %v1636
  %v2234 = vmul.f32 %v782, %v1641
  %v2235 = vmul.f32 %v782, %v1646
  %v2236 = vmul.f32 %v782, %v1651
  %v2237 = vmul.f32 %v782, %v1656
  %v2238 = vmul.f32 %v782, %v1661
  %v2239 = vmul.f32 %v782, %v1666
  %v2240 = vmul.f32 %v782, %v1671
  %v2241 = vmul.f32 %v782, %v1676
  %v2242 = vmul.f32 %v782, %v1681
  %v2243 = vmul.f32 %v782, %v1686
  %v2244 = vmul.f32 %v782, %v1691
  %v2245 = vmul.f32 %v782, %v1696
  %v2246 = vmul.f32 %v782, %v1701
  %v2247 = vmul.f32 %v782, %v1706
  %v2248 = vmul.f32 %v782, %v1711
  %v2249 = vmul.f32 %v782, %v1716
  %v2250 = vmul.f32 %v782, %v1721
  %v2251 = vmul.f32 %v782, %v1726
  %v2252 = vmul.f32 %v782, %v1731
  %v2253 = vmul.f32 %v782, %v1736
  %v2254 = vmul.f32 %v782, %v1741
  %v2255 = vmul.f32 %v782, %v1746
  %v2256 = vmul.f32 %v782, %v1751
  %v2257 = vmul.f32 %v782, %v1756
  %v2258 = vmul.f32 %v782, %v1761
  %v2259 = vmul.f32 %v782, %v1766
  %v2260 = vmul.f32 %v782, %v1771
  %v2261 = vmul.f32 %v782, %v1776
  %v2262 = vmul.f32 %v782, %v1781
  %v2263 = vmul.f32 %v782, %v1786
  %v2264 = vmul.f32 %v782, %v1791
  %v2265 = vmul.f32 %v782, %v1796
  %v2266 = vmul.f32 %v782, %v1801
  %v2267 = vmul.f32 %v782, %v1806
  %v2268 = vmul.f32 %v782, %v1811
  %v2269 = vmul.f32 %v782, %v1816
  %v2270 = vmul.f32 %v782, %v1821
  %v2271 = vmul.f32 %v782, %v1826
  %v2272 = vmul.f32 %v782, %v1831
  %v2273 = vmul.f32 %v782, %v1836
  %v2274 = vmul.f32 %v782, %v1841
  %v2275 = vmul.f32 %v782, %v1846
  %v2276 = vmul.f32 %v782, %v1851
  %v2277 = vmul.f32 %v782, %v1856
  %v2278 = vmul.f32 %v782, %v1861
  %v2279 = vmul.f32 %v782, %v1866
  %v2280 = vmul.f32 %v782, %v1871
  %v2281 = vmul.f32 %v782, %v1876
  %v2282 = vmul.f32 %v782, %v1881
  %v2283 = vmul.f32 %v782, %v1886
  %v2284 = vmul.f32 %v782, %v1891
  %v2285 = vmul.f32 %v782, %v1896
  %v2286 = vmul.f32 %v782, %v1901
  %v2287 = vmul.f32 %v782, %v1906
  %v2288 = vmul.f32 %v782, %v1911
  %v2289 = vmul.f32 %v782, %v1916
  %v2290 = vmul.f32 %v782, %v1921
  %v2291 = vmul.f32 %v782, %v1926
  %v2292 = vmul.f32 %v782, %v1931
  %v2293 = vmul.f32 %v782, %v1936
  %v2294 = vmul.f32 %v782, %v1941
  %v2295 = vmul.f32 %v782, %v1946
  %v2296 = vmul.f32 %v782, %v1951
  %v2297 = vmul.f32 %v782, %v1956
  %v2298 = vmul.f32 %v782, %v1961
  %v2299 = vmul.f32 %v782, %v1966
  %v2300 = vmul.f32 %v782, %v1971
  %v2301 = vmul.f32 %v782, %v1976
  %v2302 = vmul.f32 %v782, %v1981
  %v2303 = vmul.f32 %v782, %v1986
  %v2304 = vmul.f32 %v782, %v1991
  %v2305 = vmul.f32 %v782, %v1996
  %v2306 = vmul.f32 %v782, %v2001
  %v2307 = vmul.f32 %v782, %v2006
  %v2308 = vmul.f32 %v782, %v2011
  %v2309 = vmul.f32 %v782, %v2016
  %v2310 = vmul.f32 %v782, %v2021
  %v2311 = vmul.f32 %v782, %v2026
  %v2312 = vmul.f32 %v782, %v2031
  %v2313 = vmul.f32 %v782, %v2036
  %v2314 = vmul.f32 %v782, %v2041
  %v2315 = vmul.f32 %v782, %v2046
  %v2316 = vmul.f32 %v782, %v2051
  %v2317 = vmul.f32 %v782, %v2056
  %v2318 = vmul.f32 %v782, %v2061
  %2320 = vset.pattern.permute.xlu0 0
  %2321 = vperm.xlu0 %2320, %v11
  %v2322 = vpop.permute.xlu0 %2321
  %2325 = vset.pattern.permute.xlu0 0
  %2326 = vperm.xlu0 %2325, %v12
  %v2327 = vpop.permute.xlu0 %2326
  %2330 = vset.pattern.permute.xlu0 0
  %2331 = vperm.xlu0 %2330, %v13
  %v2332 = vpop.permute.xlu0 %2331
  %2335 = vset.pattern.permute.xlu0 0
  %2336 = vperm.xlu0 %2335, %v14
  %v2337 = vpop.permute.xlu0 %2336
  %2340 = vset.pattern.permute.xlu0 0
  %2341 = vperm.xlu0 %2340, %v15
  %v2342 = vpop.permute.xlu0 %2341
  %2345 = vset.pattern.permute.xlu0 0
  %2346 = vperm.xlu0 %2345, %v16
  %v2347 = vpop.permute.xlu0 %2346
  %2350 = vset.pattern.permute.xlu0 0
  %2351 = vperm.xlu0 %2350, %v17
  %v2352 = vpop.permute.xlu0 %2351
  %2355 = vset.pattern.permute.xlu0 0
  %2356 = vperm.xlu0 %2355, %v18
  %v2357 = vpop.permute.xlu0 %2356
  %2360 = vset.pattern.permute.xlu0 0
  %2361 = vperm.xlu0 %2360, %v19
  %v2362 = vpop.permute.xlu0 %2361
  %2365 = vset.pattern.permute.xlu0 0
  %2366 = vperm.xlu0 %2365, %v20
  %v2367 = vpop.permute.xlu0 %2366
  %2370 = vset.pattern.permute.xlu0 0
  %2371 = vperm.xlu0 %2370, %v21
  %v2372 = vpop.permute.xlu0 %2371
  %2375 = vset.pattern.permute.xlu0 0
  %2376 = vperm.xlu0 %2375, %v22
  %v2377 = vpop.permute.xlu0 %2376
  %2380 = vset.pattern.permute.xlu0 0
  %2381 = vperm.xlu0 %2380, %v23
  %v2382 = vpop.permute.xlu0 %2381
  %2385 = vset.pattern.permute.xlu0 0
  %2386 = vperm.xlu0 %2385, %v24
  %v2387 = vpop.permute.xlu0 %2386
  %2390 = vset.pattern.permute.xlu0 0
  %2391 = vperm.xlu0 %2390, %v25
  %v2392 = vpop.permute.xlu0 %2391
  %2395 = vset.pattern.permute.xlu0 0
  %2396 = vperm.xlu0 %2395, %v26
  %v2397 = vpop.permute.xlu0 %2396
  %2400 = vset.pattern.permute.xlu0 0
  %2401 = vperm.xlu0 %2400, %v27
  %v2402 = vpop.permute.xlu0 %2401
  %2405 = vset.pattern.permute.xlu0 0
  %2406 = vperm.xlu0 %2405, %v28
  %v2407 = vpop.permute.xlu0 %2406
  %2410 = vset.pattern.permute.xlu0 0
  %2411 = vperm.xlu0 %2410, %v29
  %v2412 = vpop.permute.xlu0 %2411
  %2415 = vset.pattern.permute.xlu0 0
  %2416 = vperm.xlu0 %2415, %v30
  %v2417 = vpop.permute.xlu0 %2416
  %2420 = vset.pattern.permute.xlu0 0
  %2421 = vperm.xlu0 %2420, %v31
  %v2422 = vpop.permute.xlu0 %2421
  %2425 = vset.pattern.permute.xlu0 0
  %2426 = vperm.xlu0 %2425, %v32
  %v2427 = vpop.permute.xlu0 %2426
  %2430 = vset.pattern.permute.xlu0 0
  %2431 = vperm.xlu0 %2430, %v33
  %v2432 = vpop.permute.xlu0 %2431
  %2435 = vset.pattern.permute.xlu0 0
  %2436 = vperm.xlu0 %2435, %v34
  %v2437 = vpop.permute.xlu0 %2436
  %2440 = vset.pattern.permute.xlu0 0
  %2441 = vperm.xlu0 %2440, %v35
  %v2442 = vpop.permute.xlu0 %2441
  %2445 = vset.pattern.permute.xlu0 0
  %2446 = vperm.xlu0 %2445, %v36
  %v2447 = vpop.permute.xlu0 %2446
  %2450 = vset.pattern.permute.xlu0 0
  %2451 = vperm.xlu0 %2450, %v37
  %v2452 = vpop.permute.xlu0 %2451
  %2455 = vset.pattern.permute.xlu0 0
  %2456 = vperm.xlu0 %2455, %v38
  %v2457 = vpop.permute.xlu0 %2456
  %2460 = vset.pattern.permute.xlu0 0
  %2461 = vperm.xlu0 %2460, %v39
  %v2462 = vpop.permute.xlu0 %2461
  %2465 = vset.pattern.permute.xlu0 0
  %2466 = vperm.xlu0 %2465, %v40
  %v2467 = vpop.permute.xlu0 %2466
  %2470 = vset.pattern.permute.xlu0 0
  %2471 = vperm.xlu0 %2470, %v41
  %v2472 = vpop.permute.xlu0 %2471
  %2475 = vset.pattern.permute.xlu0 0
  %2476 = vperm.xlu0 %2475, %v42
  %v2477 = vpop.permute.xlu0 %2476
  %2480 = vset.pattern.permute.xlu0 0
  %2481 = vperm.xlu0 %2480, %v43
  %v2482 = vpop.permute.xlu0 %2481
  %2485 = vset.pattern.permute.xlu0 0
  %2486 = vperm.xlu0 %2485, %v44
  %v2487 = vpop.permute.xlu0 %2486
  %2490 = vset.pattern.permute.xlu0 0
  %2491 = vperm.xlu0 %2490, %v45
  %v2492 = vpop.permute.xlu0 %2491
  %2495 = vset.pattern.permute.xlu0 0
  %2496 = vperm.xlu0 %2495, %v46
  %v2497 = vpop.permute.xlu0 %2496
  %2500 = vset.pattern.permute.xlu0 0
  %2501 = vperm.xlu0 %2500, %v47
  %v2502 = vpop.permute.xlu0 %2501
  %2505 = vset.pattern.permute.xlu0 0
  %2506 = vperm.xlu0 %2505, %v48
  %v2507 = vpop.permute.xlu0 %2506
  %2510 = vset.pattern.permute.xlu0 0
  %2511 = vperm.xlu0 %2510, %v49
  %v2512 = vpop.permute.xlu0 %2511
  %2515 = vset.pattern.permute.xlu0 0
  %2516 = vperm.xlu0 %2515, %v50
  %v2517 = vpop.permute.xlu0 %2516
  %2520 = vset.pattern.permute.xlu0 0
  %2521 = vperm.xlu0 %2520, %v51
  %v2522 = vpop.permute.xlu0 %2521
  %2525 = vset.pattern.permute.xlu0 0
  %2526 = vperm.xlu0 %2525, %v52
  %v2527 = vpop.permute.xlu0 %2526
  %2530 = vset.pattern.permute.xlu0 0
  %2531 = vperm.xlu0 %2530, %v53
  %v2532 = vpop.permute.xlu0 %2531
  %2535 = vset.pattern.permute.xlu0 0
  %2536 = vperm.xlu0 %2535, %v54
  %v2537 = vpop.permute.xlu0 %2536
  %2540 = vset.pattern.permute.xlu0 0
  %2541 = vperm.xlu0 %2540, %v55
  %v2542 = vpop.permute.xlu0 %2541
  %2545 = vset.pattern.permute.xlu0 0
  %2546 = vperm.xlu0 %2545, %v56
  %v2547 = vpop.permute.xlu0 %2546
  %2550 = vset.pattern.permute.xlu0 0
  %2551 = vperm.xlu0 %2550, %v57
  %v2552 = vpop.permute.xlu0 %2551
  %2555 = vset.pattern.permute.xlu0 0
  %2556 = vperm.xlu0 %2555, %v58
  %v2557 = vpop.permute.xlu0 %2556
  %2560 = vset.pattern.permute.xlu0 0
  %2561 = vperm.xlu0 %2560, %v59
  %v2562 = vpop.permute.xlu0 %2561
  %2565 = vset.pattern.permute.xlu0 0
  %2566 = vperm.xlu0 %2565, %v60
  %v2567 = vpop.permute.xlu0 %2566
  %2570 = vset.pattern.permute.xlu0 0
  %2571 = vperm.xlu0 %2570, %v61
  %v2572 = vpop.permute.xlu0 %2571
  %2575 = vset.pattern.permute.xlu0 0
  %2576 = vperm.xlu0 %2575, %v62
  %v2577 = vpop.permute.xlu0 %2576
  %2580 = vset.pattern.permute.xlu0 0
  %2581 = vperm.xlu0 %2580, %v63
  %v2582 = vpop.permute.xlu0 %2581
  %2585 = vset.pattern.permute.xlu0 0
  %2586 = vperm.xlu0 %2585, %v64
  %v2587 = vpop.permute.xlu0 %2586
  %2590 = vset.pattern.permute.xlu0 0
  %2591 = vperm.xlu0 %2590, %v65
  %v2592 = vpop.permute.xlu0 %2591
  %2595 = vset.pattern.permute.xlu0 0
  %2596 = vperm.xlu0 %2595, %v66
  %v2597 = vpop.permute.xlu0 %2596
  %2600 = vset.pattern.permute.xlu0 0
  %2601 = vperm.xlu0 %2600, %v67
  %v2602 = vpop.permute.xlu0 %2601
  %2605 = vset.pattern.permute.xlu0 0
  %2606 = vperm.xlu0 %2605, %v68
  %v2607 = vpop.permute.xlu0 %2606
  %2610 = vset.pattern.permute.xlu0 0
  %2611 = vperm.xlu0 %2610, %v69
  %v2612 = vpop.permute.xlu0 %2611
  %2615 = vset.pattern.permute.xlu0 0
  %2616 = vperm.xlu0 %2615, %v70
  %v2617 = vpop.permute.xlu0 %2616
  %2620 = vset.pattern.permute.xlu0 0
  %2621 = vperm.xlu0 %2620, %v71
  %v2622 = vpop.permute.xlu0 %2621
  %2625 = vset.pattern.permute.xlu0 0
  %2626 = vperm.xlu0 %2625, %v72
  %v2627 = vpop.permute.xlu0 %2626
  %2630 = vset.pattern.permute.xlu0 0
  %2631 = vperm.xlu0 %2630, %v73
  %v2632 = vpop.permute.xlu0 %2631
  %2635 = vset.pattern.permute.xlu0 0
  %2636 = vperm.xlu0 %2635, %v74
  %v2637 = vpop.permute.xlu0 %2636
  %2640 = vset.pattern.permute.xlu0 0
  %2641 = vperm.xlu0 %2640, %v75
  %v2642 = vpop.permute.xlu0 %2641
  %2645 = vset.pattern.permute.xlu0 0
  %2646 = vperm.xlu0 %2645, %v76
  %v2647 = vpop.permute.xlu0 %2646
  %2650 = vset.pattern.permute.xlu0 0
  %2651 = vperm.xlu0 %2650, %v77
  %v2652 = vpop.permute.xlu0 %2651
  %2655 = vset.pattern.permute.xlu0 0
  %2656 = vperm.xlu0 %2655, %v78
  %v2657 = vpop.permute.xlu0 %2656
  %2660 = vset.pattern.permute.xlu0 0
  %2661 = vperm.xlu0 %2660, %v79
  %v2662 = vpop.permute.xlu0 %2661
  %2665 = vset.pattern.permute.xlu0 0
  %2666 = vperm.xlu0 %2665, %v80
  %v2667 = vpop.permute.xlu0 %2666
  %2670 = vset.pattern.permute.xlu0 0
  %2671 = vperm.xlu0 %2670, %v81
  %v2672 = vpop.permute.xlu0 %2671
  %2675 = vset.pattern.permute.xlu0 0
  %2676 = vperm.xlu0 %2675, %v82
  %v2677 = vpop.permute.xlu0 %2676
  %2680 = vset.pattern.permute.xlu0 0
  %2681 = vperm.xlu0 %2680, %v83
  %v2682 = vpop.permute.xlu0 %2681
  %2685 = vset.pattern.permute.xlu0 0
  %2686 = vperm.xlu0 %2685, %v84
  %v2687 = vpop.permute.xlu0 %2686
  %2690 = vset.pattern.permute.xlu0 0
  %2691 = vperm.xlu0 %2690, %v85
  %v2692 = vpop.permute.xlu0 %2691
  %2695 = vset.pattern.permute.xlu0 0
  %2696 = vperm.xlu0 %2695, %v86
  %v2697 = vpop.permute.xlu0 %2696
  %2700 = vset.pattern.permute.xlu0 0
  %2701 = vperm.xlu0 %2700, %v87
  %v2702 = vpop.permute.xlu0 %2701
  %2705 = vset.pattern.permute.xlu0 0
  %2706 = vperm.xlu0 %2705, %v88
  %v2707 = vpop.permute.xlu0 %2706
  %2710 = vset.pattern.permute.xlu0 0
  %2711 = vperm.xlu0 %2710, %v89
  %v2712 = vpop.permute.xlu0 %2711
  %2715 = vset.pattern.permute.xlu0 0
  %2716 = vperm.xlu0 %2715, %v90
  %v2717 = vpop.permute.xlu0 %2716
  %2720 = vset.pattern.permute.xlu0 0
  %2721 = vperm.xlu0 %2720, %v91
  %v2722 = vpop.permute.xlu0 %2721
  %2725 = vset.pattern.permute.xlu0 0
  %2726 = vperm.xlu0 %2725, %v92
  %v2727 = vpop.permute.xlu0 %2726
  %2730 = vset.pattern.permute.xlu0 0
  %2731 = vperm.xlu0 %2730, %v93
  %v2732 = vpop.permute.xlu0 %2731
  %2735 = vset.pattern.permute.xlu0 0
  %2736 = vperm.xlu0 %2735, %v94
  %v2737 = vpop.permute.xlu0 %2736
  %2740 = vset.pattern.permute.xlu0 0
  %2741 = vperm.xlu0 %2740, %v95
  %v2742 = vpop.permute.xlu0 %2741
  %2745 = vset.pattern.permute.xlu0 0
  %2746 = vperm.xlu0 %2745, %v96
  %v2747 = vpop.permute.xlu0 %2746
  %2750 = vset.pattern.permute.xlu0 0
  %2751 = vperm.xlu0 %2750, %v97
  %v2752 = vpop.permute.xlu0 %2751
  %2755 = vset.pattern.permute.xlu0 0
  %2756 = vperm.xlu0 %2755, %v98
  %v2757 = vpop.permute.xlu0 %2756
  %2760 = vset.pattern.permute.xlu0 0
  %2761 = vperm.xlu0 %2760, %v99
  %v2762 = vpop.permute.xlu0 %2761
  %2765 = vset.pattern.permute.xlu0 0
  %2766 = vperm.xlu0 %2765, %v100
  %v2767 = vpop.permute.xlu0 %2766
  %2770 = vset.pattern.permute.xlu0 0
  %2771 = vperm.xlu0 %2770, %v101
  %v2772 = vpop.permute.xlu0 %2771
  %2775 = vset.pattern.permute.xlu0 0
  %2776 = vperm.xlu0 %2775, %v102
  %v2777 = vpop.permute.xlu0 %2776
  %2780 = vset.pattern.permute.xlu0 0
  %2781 = vperm.xlu0 %2780, %v103
  %v2782 = vpop.permute.xlu0 %2781
  %2785 = vset.pattern.permute.xlu0 0
  %2786 = vperm.xlu0 %2785, %v104
  %v2787 = vpop.permute.xlu0 %2786
  %2790 = vset.pattern.permute.xlu0 0
  %2791 = vperm.xlu0 %2790, %v105
  %v2792 = vpop.permute.xlu0 %2791
  %2795 = vset.pattern.permute.xlu0 0
  %2796 = vperm.xlu0 %2795, %v106
  %v2797 = vpop.permute.xlu0 %2796
  %2800 = vset.pattern.permute.xlu0 0
  %2801 = vperm.xlu0 %2800, %v107
  %v2802 = vpop.permute.xlu0 %2801
  %2805 = vset.pattern.permute.xlu0 0
  %2806 = vperm.xlu0 %2805, %v108
  %v2807 = vpop.permute.xlu0 %2806
  %2810 = vset.pattern.permute.xlu0 0
  %2811 = vperm.xlu0 %2810, %v109
  %v2812 = vpop.permute.xlu0 %2811
  %2815 = vset.pattern.permute.xlu0 0
  %2816 = vperm.xlu0 %2815, %v110
  %v2817 = vpop.permute.xlu0 %2816
  %2820 = vset.pattern.permute.xlu0 0
  %2821 = vperm.xlu0 %2820, %v111
  %v2822 = vpop.permute.xlu0 %2821
  %2825 = vset.pattern.permute.xlu0 0
  %2826 = vperm.xlu0 %2825, %v112
  %v2827 = vpop.permute.xlu0 %2826
  %2830 = vset.pattern.permute.xlu0 0
  %2831 = vperm.xlu0 %2830, %v113
  %v2832 = vpop.permute.xlu0 %2831
  %2835 = vset.pattern.permute.xlu0 0
  %2836 = vperm.xlu0 %2835, %v114
  %v2837 = vpop.permute.xlu0 %2836
  %2840 = vset.pattern.permute.xlu0 0
  %2841 = vperm.xlu0 %2840, %v115
  %v2842 = vpop.permute.xlu0 %2841
  %2845 = vset.pattern.permute.xlu0 0
  %2846 = vperm.xlu0 %2845, %v116
  %v2847 = vpop.permute.xlu0 %2846
  %2850 = vset.pattern.permute.xlu0 0
  %2851 = vperm.xlu0 %2850, %v117
  %v2852 = vpop.permute.xlu0 %2851
  %2855 = vset.pattern.permute.xlu0 0
  %2856 = vperm.xlu0 %2855, %v118
  %v2857 = vpop.permute.xlu0 %2856
  %2860 = vset.pattern.permute.xlu0 0
  %2861 = vperm.xlu0 %2860, %v119
  %v2862 = vpop.permute.xlu0 %2861
  %2865 = vset.pattern.permute.xlu0 0
  %2866 = vperm.xlu0 %2865, %v120
  %v2867 = vpop.permute.xlu0 %2866
  %2870 = vset.pattern.permute.xlu0 0
  %2871 = vperm.xlu0 %2870, %v121
  %v2872 = vpop.permute.xlu0 %2871
  %2875 = vset.pattern.permute.xlu0 0
  %2876 = vperm.xlu0 %2875, %v122
  %v2877 = vpop.permute.xlu0 %2876
  %2880 = vset.pattern.permute.xlu0 0
  %2881 = vperm.xlu0 %2880, %v123
  %v2882 = vpop.permute.xlu0 %2881
  %2885 = vset.pattern.permute.xlu0 0
  %2886 = vperm.xlu0 %2885, %v124
  %v2887 = vpop.permute.xlu0 %2886
  %2890 = vset.pattern.permute.xlu0 0
  %2891 = vperm.xlu0 %2890, %v125
  %v2892 = vpop.permute.xlu0 %2891
  %2895 = vset.pattern.permute.xlu0 0
  %2896 = vperm.xlu0 %2895, %v126
  %v2897 = vpop.permute.xlu0 %2896
  %2900 = vset.pattern.permute.xlu0 0
  %2901 = vperm.xlu0 %2900, %v127
  %v2902 = vpop.permute.xlu0 %2901
  %2905 = vset.pattern.permute.xlu0 0
  %2906 = vperm.xlu0 %2905, %v128
  %v2907 = vpop.permute.xlu0 %2906
  %2910 = vset.pattern.permute.xlu0 0
  %2911 = vperm.xlu0 %2910, %v129
  %v2912 = vpop.permute.xlu0 %2911
  %2915 = vset.pattern.permute.xlu0 0
  %2916 = vperm.xlu0 %2915, %v130
  %v2917 = vpop.permute.xlu0 %2916
  %2920 = vset.pattern.permute.xlu0 0
  %2921 = vperm.xlu0 %2920, %v131
  %v2922 = vpop.permute.xlu0 %2921
  %2925 = vset.pattern.permute.xlu0 0
  %2926 = vperm.xlu0 %2925, %v132
  %v2927 = vpop.permute.xlu0 %2926
  %2930 = vset.pattern.permute.xlu0 0
  %2931 = vperm.xlu0 %2930, %v133
  %v2932 = vpop.permute.xlu0 %2931
  %2935 = vset.pattern.permute.xlu0 0
  %2936 = vperm.xlu0 %2935, %v134
  %v2937 = vpop.permute.xlu0 %2936
  %2940 = vset.pattern.permute.xlu0 0
  %2941 = vperm.xlu0 %2940, %v135
  %v2942 = vpop.permute.xlu0 %2941
  %2945 = vset.pattern.permute.xlu0 0
  %2946 = vperm.xlu0 %2945, %v136
  %v2947 = vpop.permute.xlu0 %2946
  %2950 = vset.pattern.permute.xlu0 0
  %2951 = vperm.xlu0 %2950, %v137
  %v2952 = vpop.permute.xlu0 %2951
  %2955 = vset.pattern.permute.xlu0 0
  %2956 = vperm.xlu0 %2955, %v138
  %v2957 = vpop.permute.xlu0 %2956
  %2960 = vset.pattern.permute.xlu0 0
  %2961 = vperm.xlu0 %2960, %v139
  %v2962 = vpop.permute.xlu0 %2961
  %2965 = vset.pattern.permute.xlu0 0
  %2966 = vperm.xlu0 %2965, %v140
  %v2967 = vpop.permute.xlu0 %2966
  %2970 = vset.pattern.permute.xlu0 0
  %2971 = vperm.xlu0 %2970, %v141
  %v2972 = vpop.permute.xlu0 %2971
  %2975 = vset.pattern.permute.xlu0 0
  %2976 = vperm.xlu0 %2975, %v142
  %v2977 = vpop.permute.xlu0 %2976
  %2980 = vset.pattern.permute.xlu0 0
  %2981 = vperm.xlu0 %2980, %v143
  %v2982 = vpop.permute.xlu0 %2981
  %2985 = vset.pattern.permute.xlu0 0
  %2986 = vperm.xlu0 %2985, %v144
  %v2987 = vpop.permute.xlu0 %2986
  %2990 = vset.pattern.permute.xlu0 0
  %2991 = vperm.xlu0 %2990, %v145
  %v2992 = vpop.permute.xlu0 %2991
  %2995 = vset.pattern.permute.xlu0 0
  %2996 = vperm.xlu0 %2995, %v146
  %v2997 = vpop.permute.xlu0 %2996
  %3000 = vset.pattern.permute.xlu0 0
  %3001 = vperm.xlu0 %3000, %v147
  %v3002 = vpop.permute.xlu0 %3001
  %3005 = vset.pattern.permute.xlu0 0
  %3006 = vperm.xlu0 %3005, %v148
  %v3007 = vpop.permute.xlu0 %3006
  %3010 = vset.pattern.permute.xlu0 0
  %3011 = vperm.xlu0 %3010, %v149
  %v3012 = vpop.permute.xlu0 %3011
  %3015 = vset.pattern.permute.xlu0 0
  %3016 = vperm.xlu0 %3015, %v150
  %v3017 = vpop.permute.xlu0 %3016
  %3020 = vset.pattern.permute.xlu0 0
  %3021 = vperm.xlu0 %3020, %v151
  %v3022 = vpop.permute.xlu0 %3021
  %3025 = vset.pattern.permute.xlu0 0
  %3026 = vperm.xlu0 %3025, %v152
  %v3027 = vpop.permute.xlu0 %3026
  %3030 = vset.pattern.permute.xlu0 0
  %3031 = vperm.xlu0 %3030, %v153
  %v3032 = vpop.permute.xlu0 %3031
  %3035 = vset.pattern.permute.xlu0 0
  %3036 = vperm.xlu0 %3035, %v154
  %v3037 = vpop.permute.xlu0 %3036
  %3040 = vset.pattern.permute.xlu0 0
  %3041 = vperm.xlu0 %3040, %v155
  %v3042 = vpop.permute.xlu0 %3041
  %3045 = vset.pattern.permute.xlu0 0
  %3046 = vperm.xlu0 %3045, %v156
  %v3047 = vpop.permute.xlu0 %3046
  %3050 = vset.pattern.permute.xlu0 0
  %3051 = vperm.xlu0 %3050, %v157
  %v3052 = vpop.permute.xlu0 %3051
  %3055 = vset.pattern.permute.xlu0 0
  %3056 = vperm.xlu0 %3055, %v158
  %v3057 = vpop.permute.xlu0 %3056
  %3060 = vset.pattern.permute.xlu0 0
  %3061 = vperm.xlu0 %3060, %v159
  %v3062 = vpop.permute.xlu0 %3061
  %3065 = vset.pattern.permute.xlu0 0
  %3066 = vperm.xlu0 %3065, %v160
  %v3067 = vpop.permute.xlu0 %3066
  %3070 = vset.pattern.permute.xlu0 0
  %3071 = vperm.xlu0 %3070, %v161
  %v3072 = vpop.permute.xlu0 %3071
  %3075 = vset.pattern.permute.xlu0 0
  %3076 = vperm.xlu0 %3075, %v162
  %v3077 = vpop.permute.xlu0 %3076
  %3080 = vset.pattern.permute.xlu0 0
  %3081 = vperm.xlu0 %3080, %v163
  %v3082 = vpop.permute.xlu0 %3081
  %3085 = vset.pattern.permute.xlu0 0
  %3086 = vperm.xlu0 %3085, %v164
  %v3087 = vpop.permute.xlu0 %3086
  %3090 = vset.pattern.permute.xlu0 0
  %3091 = vperm.xlu0 %3090, %v165
  %v3092 = vpop.permute.xlu0 %3091
  %3095 = vset.pattern.permute.xlu0 0
  %3096 = vperm.xlu0 %3095, %v166
  %v3097 = vpop.permute.xlu0 %3096
  %3100 = vset.pattern.permute.xlu0 0
  %3101 = vperm.xlu0 %3100, %v167
  %v3102 = vpop.permute.xlu0 %3101
  %3105 = vset.pattern.permute.xlu0 0
  %3106 = vperm.xlu0 %3105, %v168
  %v3107 = vpop.permute.xlu0 %3106
  %3110 = vset.pattern.permute.xlu0 0
  %3111 = vperm.xlu0 %3110, %v169
  %v3112 = vpop.permute.xlu0 %3111
  %3115 = vset.pattern.permute.xlu0 0
  %3116 = vperm.xlu0 %3115, %v170
  %v3117 = vpop.permute.xlu0 %3116
  %3120 = vset.pattern.permute.xlu0 0
  %3121 = vperm.xlu0 %3120, %v171
  %v3122 = vpop.permute.xlu0 %3121
  %3125 = vset.pattern.permute.xlu0 0
  %3126 = vperm.xlu0 %3125, %v172
  %v3127 = vpop.permute.xlu0 %3126
  %3130 = vset.pattern.permute.xlu0 0
  %3131 = vperm.xlu0 %3130, %v173
  %v3132 = vpop.permute.xlu0 %3131
  %3135 = vset.pattern.permute.xlu0 0
  %3136 = vperm.xlu0 %3135, %v174
  %v3137 = vpop.permute.xlu0 %3136
  %3140 = vset.pattern.permute.xlu0 0
  %3141 = vperm.xlu0 %3140, %v175
  %v3142 = vpop.permute.xlu0 %3141
  %3145 = vset.pattern.permute.xlu0 0
  %3146 = vperm.xlu0 %3145, %v176
  %v3147 = vpop.permute.xlu0 %3146
  %3150 = vset.pattern.permute.xlu0 0
  %3151 = vperm.xlu0 %3150, %v177
  %v3152 = vpop.permute.xlu0 %3151
  %3155 = vset.pattern.permute.xlu0 0
  %3156 = vperm.xlu0 %3155, %v178
  %v3157 = vpop.permute.xlu0 %3156
  %3160 = vset.pattern.permute.xlu0 0
  %3161 = vperm.xlu0 %3160, %v179
  %v3162 = vpop.permute.xlu0 %3161
  %3165 = vset.pattern.permute.xlu0 0
  %3166 = vperm.xlu0 %3165, %v180
  %v3167 = vpop.permute.xlu0 %3166
  %3170 = vset.pattern.permute.xlu0 0
  %3171 = vperm.xlu0 %3170, %v181
  %v3172 = vpop.permute.xlu0 %3171
  %3175 = vset.pattern.permute.xlu0 0
  %3176 = vperm.xlu0 %3175, %v182
  %v3177 = vpop.permute.xlu0 %3176
  %3180 = vset.pattern.permute.xlu0 0
  %3181 = vperm.xlu0 %3180, %v183
  %v3182 = vpop.permute.xlu0 %3181
  %3185 = vset.pattern.permute.xlu0 0
  %3186 = vperm.xlu0 %3185, %v184
  %v3187 = vpop.permute.xlu0 %3186
  %3190 = vset.pattern.permute.xlu0 0
  %3191 = vperm.xlu0 %3190, %v185
  %v3192 = vpop.permute.xlu0 %3191
  %3195 = vset.pattern.permute.xlu0 0
  %3196 = vperm.xlu0 %3195, %v186
  %v3197 = vpop.permute.xlu0 %3196
  %3200 = vset.pattern.permute.xlu0 0
  %3201 = vperm.xlu0 %3200, %v187
  %v3202 = vpop.permute.xlu0 %3201
  %3205 = vset.pattern.permute.xlu0 0
  %3206 = vperm.xlu0 %3205, %v188
  %v3207 = vpop.permute.xlu0 %3206
  %3210 = vset.pattern.permute.xlu0 0
  %3211 = vperm.xlu0 %3210, %v189
  %v3212 = vpop.permute.xlu0 %3211
  %3215 = vset.pattern.permute.xlu0 0
  %3216 = vperm.xlu0 %3215, %v190
  %v3217 = vpop.permute.xlu0 %3216
  %3220 = vset.pattern.permute.xlu0 0
  %3221 = vperm.xlu0 %3220, %v191
  %v3222 = vpop.permute.xlu0 %3221
  %3225 = vset.pattern.permute.xlu0 0
  %3226 = vperm.xlu0 %3225, %v192
  %v3227 = vpop.permute.xlu0 %3226
  %3230 = vset.pattern.permute.xlu0 0
  %3231 = vperm.xlu0 %3230, %v193
  %v3232 = vpop.permute.xlu0 %3231
  %3235 = vset.pattern.permute.xlu0 0
  %3236 = vperm.xlu0 %3235, %v194
  %v3237 = vpop.permute.xlu0 %3236
  %3240 = vset.pattern.permute.xlu0 0
  %3241 = vperm.xlu0 %3240, %v195
  %v3242 = vpop.permute.xlu0 %3241
  %3245 = vset.pattern.permute.xlu0 0
  %3246 = vperm.xlu0 %3245, %v196
  %v3247 = vpop.permute.xlu0 %3246
  %3250 = vset.pattern.permute.xlu0 0
  %3251 = vperm.xlu0 %3250, %v197
  %v3252 = vpop.permute.xlu0 %3251
  %3255 = vset.pattern.permute.xlu0 0
  %3256 = vperm.xlu0 %3255, %v198
  %v3257 = vpop.permute.xlu0 %3256
  %3260 = vset.pattern.permute.xlu0 0
  %3261 = vperm.xlu0 %3260, %v199
  %v3262 = vpop.permute.xlu0 %3261
  %3265 = vset.pattern.permute.xlu0 0
  %3266 = vperm.xlu0 %3265, %v200
  %v3267 = vpop.permute.xlu0 %3266
  %3270 = vset.pattern.permute.xlu0 0
  %3271 = vperm.xlu0 %3270, %v201
  %v3272 = vpop.permute.xlu0 %3271
  %3275 = vset.pattern.permute.xlu0 0
  %3276 = vperm.xlu0 %3275, %v202
  %v3277 = vpop.permute.xlu0 %3276
  %3280 = vset.pattern.permute.xlu0 0
  %3281 = vperm.xlu0 %3280, %v203
  %v3282 = vpop.permute.xlu0 %3281
  %3285 = vset.pattern.permute.xlu0 0
  %3286 = vperm.xlu0 %3285, %v204
  %v3287 = vpop.permute.xlu0 %3286
  %3290 = vset.pattern.permute.xlu0 0
  %3291 = vperm.xlu0 %3290, %v205
  %v3292 = vpop.permute.xlu0 %3291
  %3295 = vset.pattern.permute.xlu0 0
  %3296 = vperm.xlu0 %3295, %v206
  %v3297 = vpop.permute.xlu0 %3296
  %3300 = vset.pattern.permute.xlu0 0
  %3301 = vperm.xlu0 %3300, %v207
  %v3302 = vpop.permute.xlu0 %3301
  %3305 = vset.pattern.permute.xlu0 0
  %3306 = vperm.xlu0 %3305, %v208
  %v3307 = vpop.permute.xlu0 %3306
  %3310 = vset.pattern.permute.xlu0 0
  %3311 = vperm.xlu0 %3310, %v209
  %v3312 = vpop.permute.xlu0 %3311
  %3315 = vset.pattern.permute.xlu0 0
  %3316 = vperm.xlu0 %3315, %v210
  %v3317 = vpop.permute.xlu0 %3316
  %3320 = vset.pattern.permute.xlu0 0
  %3321 = vperm.xlu0 %3320, %v211
  %v3322 = vpop.permute.xlu0 %3321
  %3325 = vset.pattern.permute.xlu0 0
  %3326 = vperm.xlu0 %3325, %v212
  %v3327 = vpop.permute.xlu0 %3326
  %3330 = vset.pattern.permute.xlu0 0
  %3331 = vperm.xlu0 %3330, %v213
  %v3332 = vpop.permute.xlu0 %3331
  %3335 = vset.pattern.permute.xlu0 0
  %3336 = vperm.xlu0 %3335, %v214
  %v3337 = vpop.permute.xlu0 %3336
  %3340 = vset.pattern.permute.xlu0 0
  %3341 = vperm.xlu0 %3340, %v215
  %v3342 = vpop.permute.xlu0 %3341
  %3345 = vset.pattern.permute.xlu0 0
  %3346 = vperm.xlu0 %3345, %v216
  %v3347 = vpop.permute.xlu0 %3346
  %3350 = vset.pattern.permute.xlu0 0
  %3351 = vperm.xlu0 %3350, %v217
  %v3352 = vpop.permute.xlu0 %3351
  %3355 = vset.pattern.permute.xlu0 0
  %3356 = vperm.xlu0 %3355, %v218
  %v3357 = vpop.permute.xlu0 %3356
  %3360 = vset.pattern.permute.xlu0 0
  %3361 = vperm.xlu0 %3360, %v219
  %v3362 = vpop.permute.xlu0 %3361
  %3365 = vset.pattern.permute.xlu0 0
  %3366 = vperm.xlu0 %3365, %v220
  %v3367 = vpop.permute.xlu0 %3366
  %3370 = vset.pattern.permute.xlu0 0
  %3371 = vperm.xlu0 %3370, %v221
  %v3372 = vpop.permute.xlu0 %3371
  %3375 = vset.pattern.permute.xlu0 0
  %3376 = vperm.xlu0 %3375, %v222
  %v3377 = vpop.permute.xlu0 %3376
  %3380 = vset.pattern.permute.xlu0 0
  %3381 = vperm.xlu0 %3380, %v223
  %v3382 = vpop.permute.xlu0 %3381
  %3385 = vset.pattern.permute.xlu0 0
  %3386 = vperm.xlu0 %3385, %v224
  %v3387 = vpop.permute.xlu0 %3386
  %3390 = vset.pattern.permute.xlu0 0
  %3391 = vperm.xlu0 %3390, %v225
  %v3392 = vpop.permute.xlu0 %3391
  %3395 = vset.pattern.permute.xlu0 0
  %3396 = vperm.xlu0 %3395, %v226
  %v3397 = vpop.permute.xlu0 %3396
  %3400 = vset.pattern.permute.xlu0 0
  %3401 = vperm.xlu0 %3400, %v227
  %v3402 = vpop.permute.xlu0 %3401
  %3405 = vset.pattern.permute.xlu0 0
  %3406 = vperm.xlu0 %3405, %v228
  %v3407 = vpop.permute.xlu0 %3406
  %3410 = vset.pattern.permute.xlu0 0
  %3411 = vperm.xlu0 %3410, %v229
  %v3412 = vpop.permute.xlu0 %3411
  %3415 = vset.pattern.permute.xlu0 0
  %3416 = vperm.xlu0 %3415, %v230
  %v3417 = vpop.permute.xlu0 %3416
  %3420 = vset.pattern.permute.xlu0 0
  %3421 = vperm.xlu0 %3420, %v231
  %v3422 = vpop.permute.xlu0 %3421
  %3425 = vset.pattern.permute.xlu0 0
  %3426 = vperm.xlu0 %3425, %v232
  %v3427 = vpop.permute.xlu0 %3426
  %3430 = vset.pattern.permute.xlu0 0
  %3431 = vperm.xlu0 %3430, %v233
  %v3432 = vpop.permute.xlu0 %3431
  %3435 = vset.pattern.permute.xlu0 0
  %3436 = vperm.xlu0 %3435, %v234
  %v3437 = vpop.permute.xlu0 %3436
  %3440 = vset.pattern.permute.xlu0 0
  %3441 = vperm.xlu0 %3440, %v235
  %v3442 = vpop.permute.xlu0 %3441
  %3445 = vset.pattern.permute.xlu0 0
  %3446 = vperm.xlu0 %3445, %v236
  %v3447 = vpop.permute.xlu0 %3446
  %3450 = vset.pattern.permute.xlu0 0
  %3451 = vperm.xlu0 %3450, %v237
  %v3452 = vpop.permute.xlu0 %3451
  %3455 = vset.pattern.permute.xlu0 0
  %3456 = vperm.xlu0 %3455, %v238
  %v3457 = vpop.permute.xlu0 %3456
  %3460 = vset.pattern.permute.xlu0 0
  %3461 = vperm.xlu0 %3460, %v239
  %v3462 = vpop.permute.xlu0 %3461
  %3465 = vset.pattern.permute.xlu0 0
  %3466 = vperm.xlu0 %3465, %v240
  %v3467 = vpop.permute.xlu0 %3466
  %3470 = vset.pattern.permute.xlu0 0
  %3471 = vperm.xlu0 %3470, %v241
  %v3472 = vpop.permute.xlu0 %3471
  %3475 = vset.pattern.permute.xlu0 0
  %3476 = vperm.xlu0 %3475, %v242
  %v3477 = vpop.permute.xlu0 %3476
  %3480 = vset.pattern.permute.xlu0 0
  %3481 = vperm.xlu0 %3480, %v243
  %v3482 = vpop.permute.xlu0 %3481
  %3485 = vset.pattern.permute.xlu0 0
  %3486 = vperm.xlu0 %3485, %v244
  %v3487 = vpop.permute.xlu0 %3486
  %3490 = vset.pattern.permute.xlu0 0
  %3491 = vperm.xlu0 %3490, %v245
  %v3492 = vpop.permute.xlu0 %3491
  %3495 = vset.pattern.permute.xlu0 0
  %3496 = vperm.xlu0 %3495, %v246
  %v3497 = vpop.permute.xlu0 %3496
  %3500 = vset.pattern.permute.xlu0 0
  %3501 = vperm.xlu0 %3500, %v247
  %v3502 = vpop.permute.xlu0 %3501
  %3505 = vset.pattern.permute.xlu0 0
  %3506 = vperm.xlu0 %3505, %v248
  %v3507 = vpop.permute.xlu0 %3506
  %3510 = vset.pattern.permute.xlu0 0
  %3511 = vperm.xlu0 %3510, %v249
  %v3512 = vpop.permute.xlu0 %3511
  %3515 = vset.pattern.permute.xlu0 0
  %3516 = vperm.xlu0 %3515, %v250
  %v3517 = vpop.permute.xlu0 %3516
  %3520 = vset.pattern.permute.xlu0 0
  %3521 = vperm.xlu0 %3520, %v251
  %v3522 = vpop.permute.xlu0 %3521
  %3525 = vset.pattern.permute.xlu0 0
  %3526 = vperm.xlu0 %3525, %v252
  %v3527 = vpop.permute.xlu0 %3526
  %3530 = vset.pattern.permute.xlu0 0
  %3531 = vperm.xlu0 %3530, %v253
  %v3532 = vpop.permute.xlu0 %3531
  %3535 = vset.pattern.permute.xlu0 0
  %3536 = vperm.xlu0 %3535, %v254
  %v3537 = vpop.permute.xlu0 %3536
  %3540 = vset.pattern.permute.xlu0 0
  %3541 = vperm.xlu0 %3540, %v255
  %v3542 = vpop.permute.xlu0 %3541
  %3545 = vset.pattern.permute.xlu0 0
  %3546 = vperm.xlu0 %3545, %v256
  %v3547 = vpop.permute.xlu0 %3546
  %3550 = vset.pattern.permute.xlu0 0
  %3551 = vperm.xlu0 %3550, %v257
  %v3552 = vpop.permute.xlu0 %3551
  %3555 = vset.pattern.permute.xlu0 0
  %3556 = vperm.xlu0 %3555, %v258
  %v3557 = vpop.permute.xlu0 %3556
  %3560 = vset.pattern.permute.xlu0 0
  %3561 = vperm.xlu0 %3560, %v259
  %v3562 = vpop.permute.xlu0 %3561
  %3565 = vset.pattern.permute.xlu0 0
  %3566 = vperm.xlu0 %3565, %v260
  %v3567 = vpop.permute.xlu0 %3566
  %3570 = vset.pattern.permute.xlu0 0
  %3571 = vperm.xlu0 %3570, %v261
  %v3572 = vpop.permute.xlu0 %3571
  %3575 = vset.pattern.permute.xlu0 0
  %3576 = vperm.xlu0 %3575, %v262
  %v3577 = vpop.permute.xlu0 %3576
  %3580 = vset.pattern.permute.xlu0 0
  %3581 = vperm.xlu0 %3580, %v263
  %v3582 = vpop.permute.xlu0 %3581
  %3585 = vset.pattern.permute.xlu0 0
  %3586 = vperm.xlu0 %3585, %v264
  %v3587 = vpop.permute.xlu0 %3586
  %3590 = vset.pattern.permute.xlu0 0
  %3591 = vperm.xlu0 %3590, %v265
  %v3592 = vpop.permute.xlu0 %3591
  %3595 = vset.pattern.permute.xlu0 0
  %3596 = vperm.xlu0 %3595, %v266
  %v3597 = vpop.permute.xlu0 %3596
  %v3599 = vadd.f32 %v2322, %v2063
  %v3600 = vadd.f32 %v2327, %v2064
  %v3601 = vadd.f32 %v2332, %v2065
  %v3602 = vadd.f32 %v2337, %v2066
  %v3603 = vadd.f32 %v2342, %v2067
  %v3604 = vadd.f32 %v2347, %v2068
  %v3605 = vadd.f32 %v2352, %v2069
  %v3606 = vadd.f32 %v2357, %v2070
  %v3607 = vadd.f32 %v2362, %v2071
  %v3608 = vadd.f32 %v2367, %v2072
  %v3609 = vadd.f32 %v2372, %v2073
  %v3610 = vadd.f32 %v2377, %v2074
  %v3611 = vadd.f32 %v2382, %v2075
  %v3612 = vadd.f32 %v2387, %v2076
  %v3613 = vadd.f32 %v2392, %v2077
  %v3614 = vadd.f32 %v2397, %v2078
  %v3615 = vadd.f32 %v2402, %v2079
  %v3616 = vadd.f32 %v2407, %v2080
  %v3617 = vadd.f32 %v2412, %v2081
  %v3618 = vadd.f32 %v2417, %v2082
  %v3619 = vadd.f32 %v2422, %v2083
  %v3620 = vadd.f32 %v2427, %v2084
  %v3621 = vadd.f32 %v2432, %v2085
  %v3622 = vadd.f32 %v2437, %v2086
  %v3623 = vadd.f32 %v2442, %v2087
  %v3624 = vadd.f32 %v2447, %v2088
  %v3625 = vadd.f32 %v2452, %v2089
  %v3626 = vadd.f32 %v2457, %v2090
  %v3627 = vadd.f32 %v2462, %v2091
  %v3628 = vadd.f32 %v2467, %v2092
  %v3629 = vadd.f32 %v2472, %v2093
  %v3630 = vadd.f32 %v2477, %v2094
  %v3631 = vadd.f32 %v2482, %v2095
  %v3632 = vadd.f32 %v2487, %v2096
  %v3633 = vadd.f32 %v2492, %v2097
  %v3634 = vadd.f32 %v2497, %v2098
  %v3635 = vadd.f32 %v2502, %v2099
  %v3636 = vadd.f32 %v2507, %v2100
  %v3637 = vadd.f32 %v2512, %v2101
  %v3638 = vadd.f32 %v2517, %v2102
  %v3639 = vadd.f32 %v2522, %v2103
  %v3640 = vadd.f32 %v2527, %v2104
  %v3641 = vadd.f32 %v2532, %v2105
  %v3642 = vadd.f32 %v2537, %v2106
  %v3643 = vadd.f32 %v2542, %v2107
  %v3644 = vadd.f32 %v2547, %v2108
  %v3645 = vadd.f32 %v2552, %v2109
  %v3646 = vadd.f32 %v2557, %v2110
  %v3647 = vadd.f32 %v2562, %v2111
  %v3648 = vadd.f32 %v2567, %v2112
  %v3649 = vadd.f32 %v2572, %v2113
  %v3650 = vadd.f32 %v2577, %v2114
  %v3651 = vadd.f32 %v2582, %v2115
  %v3652 = vadd.f32 %v2587, %v2116
  %v3653 = vadd.f32 %v2592, %v2117
  %v3654 = vadd.f32 %v2597, %v2118
  %v3655 = vadd.f32 %v2602, %v2119
  %v3656 = vadd.f32 %v2607, %v2120
  %v3657 = vadd.f32 %v2612, %v2121
  %v3658 = vadd.f32 %v2617, %v2122
  %v3659 = vadd.f32 %v2622, %v2123
  %v3660 = vadd.f32 %v2627, %v2124
  %v3661 = vadd.f32 %v2632, %v2125
  %v3662 = vadd.f32 %v2637, %v2126
  %v3663 = vadd.f32 %v2642, %v2127
  %v3664 = vadd.f32 %v2647, %v2128
  %v3665 = vadd.f32 %v2652, %v2129
  %v3666 = vadd.f32 %v2657, %v2130
  %v3667 = vadd.f32 %v2662, %v2131
  %v3668 = vadd.f32 %v2667, %v2132
  %v3669 = vadd.f32 %v2672, %v2133
  %v3670 = vadd.f32 %v2677, %v2134
  %v3671 = vadd.f32 %v2682, %v2135
  %v3672 = vadd.f32 %v2687, %v2136
  %v3673 = vadd.f32 %v2692, %v2137
  %v3674 = vadd.f32 %v2697, %v2138
  %v3675 = vadd.f32 %v2702, %v2139
  %v3676 = vadd.f32 %v2707, %v2140
  %v3677 = vadd.f32 %v2712, %v2141
  %v3678 = vadd.f32 %v2717, %v2142
  %v3679 = vadd.f32 %v2722, %v2143
  %v3680 = vadd.f32 %v2727, %v2144
  %v3681 = vadd.f32 %v2732, %v2145
  %v3682 = vadd.f32 %v2737, %v2146
  %v3683 = vadd.f32 %v2742, %v2147
  %v3684 = vadd.f32 %v2747, %v2148
  %v3685 = vadd.f32 %v2752, %v2149
  %v3686 = vadd.f32 %v2757, %v2150
  %v3687 = vadd.f32 %v2762, %v2151
  %v3688 = vadd.f32 %v2767, %v2152
  %v3689 = vadd.f32 %v2772, %v2153
  %v3690 = vadd.f32 %v2777, %v2154
  %v3691 = vadd.f32 %v2782, %v2155
  %v3692 = vadd.f32 %v2787, %v2156
  %v3693 = vadd.f32 %v2792, %v2157
  %v3694 = vadd.f32 %v2797, %v2158
  %v3695 = vadd.f32 %v2802, %v2159
  %v3696 = vadd.f32 %v2807, %v2160
  %v3697 = vadd.f32 %v2812, %v2161
  %v3698 = vadd.f32 %v2817, %v2162
  %v3699 = vadd.f32 %v2822, %v2163
  %v3700 = vadd.f32 %v2827, %v2164
  %v3701 = vadd.f32 %v2832, %v2165
  %v3702 = vadd.f32 %v2837, %v2166
  %v3703 = vadd.f32 %v2842, %v2167
  %v3704 = vadd.f32 %v2847, %v2168
  %v3705 = vadd.f32 %v2852, %v2169
  %v3706 = vadd.f32 %v2857, %v2170
  %v3707 = vadd.f32 %v2862, %v2171
  %v3708 = vadd.f32 %v2867, %v2172
  %v3709 = vadd.f32 %v2872, %v2173
  %v3710 = vadd.f32 %v2877, %v2174
  %v3711 = vadd.f32 %v2882, %v2175
  %v3712 = vadd.f32 %v2887, %v2176
  %v3713 = vadd.f32 %v2892, %v2177
  %v3714 = vadd.f32 %v2897, %v2178
  %v3715 = vadd.f32 %v2902, %v2179
  %v3716 = vadd.f32 %v2907, %v2180
  %v3717 = vadd.f32 %v2912, %v2181
  %v3718 = vadd.f32 %v2917, %v2182
  %v3719 = vadd.f32 %v2922, %v2183
  %v3720 = vadd.f32 %v2927, %v2184
  %v3721 = vadd.f32 %v2932, %v2185
  %v3722 = vadd.f32 %v2937, %v2186
  %v3723 = vadd.f32 %v2942, %v2187
  %v3724 = vadd.f32 %v2947, %v2188
  %v3725 = vadd.f32 %v2952, %v2189
  %v3726 = vadd.f32 %v2957, %v2190
  %v3727 = vadd.f32 %v2962, %v2191
  %v3728 = vadd.f32 %v2967, %v2192
  %v3729 = vadd.f32 %v2972, %v2193
  %v3730 = vadd.f32 %v2977, %v2194
  %v3731 = vadd.f32 %v2982, %v2195
  %v3732 = vadd.f32 %v2987, %v2196
  %v3733 = vadd.f32 %v2992, %v2197
  %v3734 = vadd.f32 %v2997, %v2198
  %v3735 = vadd.f32 %v3002, %v2199
  %v3736 = vadd.f32 %v3007, %v2200
  %v3737 = vadd.f32 %v3012, %v2201
  %v3738 = vadd.f32 %v3017, %v2202
  %v3739 = vadd.f32 %v3022, %v2203
  %v3740 = vadd.f32 %v3027, %v2204
  %v3741 = vadd.f32 %v3032, %v2205
  %v3742 = vadd.f32 %v3037, %v2206
  %v3743 = vadd.f32 %v3042, %v2207
  %v3744 = vadd.f32 %v3047, %v2208
  %v3745 = vadd.f32 %v3052, %v2209
  %v3746 = vadd.f32 %v3057, %v2210
  %v3747 = vadd.f32 %v3062, %v2211
  %v3748 = vadd.f32 %v3067, %v2212
  %v3749 = vadd.f32 %v3072, %v2213
  %v3750 = vadd.f32 %v3077, %v2214
  %v3751 = vadd.f32 %v3082, %v2215
  %v3752 = vadd.f32 %v3087, %v2216
  %v3753 = vadd.f32 %v3092, %v2217
  %v3754 = vadd.f32 %v3097, %v2218
  %v3755 = vadd.f32 %v3102, %v2219
  %v3756 = vadd.f32 %v3107, %v2220
  %v3757 = vadd.f32 %v3112, %v2221
  %v3758 = vadd.f32 %v3117, %v2222
  %v3759 = vadd.f32 %v3122, %v2223
  %v3760 = vadd.f32 %v3127, %v2224
  %v3761 = vadd.f32 %v3132, %v2225
  %v3762 = vadd.f32 %v3137, %v2226
  %v3763 = vadd.f32 %v3142, %v2227
  %v3764 = vadd.f32 %v3147, %v2228
  %v3765 = vadd.f32 %v3152, %v2229
  %v3766 = vadd.f32 %v3157, %v2230
  %v3767 = vadd.f32 %v3162, %v2231
  %v3768 = vadd.f32 %v3167, %v2232
  %v3769 = vadd.f32 %v3172, %v2233
  %v3770 = vadd.f32 %v3177, %v2234
  %v3771 = vadd.f32 %v3182, %v2235
  %v3772 = vadd.f32 %v3187, %v2236
  %v3773 = vadd.f32 %v3192, %v2237
  %v3774 = vadd.f32 %v3197, %v2238
  %v3775 = vadd.f32 %v3202, %v2239
  %v3776 = vadd.f32 %v3207, %v2240
  %v3777 = vadd.f32 %v3212, %v2241
  %v3778 = vadd.f32 %v3217, %v2242
  %v3779 = vadd.f32 %v3222, %v2243
  %v3780 = vadd.f32 %v3227, %v2244
  %v3781 = vadd.f32 %v3232, %v2245
  %v3782 = vadd.f32 %v3237, %v2246
  %v3783 = vadd.f32 %v3242, %v2247
  %v3784 = vadd.f32 %v3247, %v2248
  %v3785 = vadd.f32 %v3252, %v2249
  %v3786 = vadd.f32 %v3257, %v2250
  %v3787 = vadd.f32 %v3262, %v2251
  %v3788 = vadd.f32 %v3267, %v2252
  %v3789 = vadd.f32 %v3272, %v2253
  %v3790 = vadd.f32 %v3277, %v2254
  %v3791 = vadd.f32 %v3282, %v2255
  %v3792 = vadd.f32 %v3287, %v2256
  %v3793 = vadd.f32 %v3292, %v2257
  %v3794 = vadd.f32 %v3297, %v2258
  %v3795 = vadd.f32 %v3302, %v2259
  %v3796 = vadd.f32 %v3307, %v2260
  %v3797 = vadd.f32 %v3312, %v2261
  %v3798 = vadd.f32 %v3317, %v2262
  %v3799 = vadd.f32 %v3322, %v2263
  %v3800 = vadd.f32 %v3327, %v2264
  %v3801 = vadd.f32 %v3332, %v2265
  %v3802 = vadd.f32 %v3337, %v2266
  %v3803 = vadd.f32 %v3342, %v2267
  %v3804 = vadd.f32 %v3347, %v2268
  %v3805 = vadd.f32 %v3352, %v2269
  %v3806 = vadd.f32 %v3357, %v2270
  %v3807 = vadd.f32 %v3362, %v2271
  %v3808 = vadd.f32 %v3367, %v2272
  %v3809 = vadd.f32 %v3372, %v2273
  %v3810 = vadd.f32 %v3377, %v2274
  %v3811 = vadd.f32 %v3382, %v2275
  %v3812 = vadd.f32 %v3387, %v2276
  %v3813 = vadd.f32 %v3392, %v2277
  %v3814 = vadd.f32 %v3397, %v2278
  %v3815 = vadd.f32 %v3402, %v2279
  %v3816 = vadd.f32 %v3407, %v2280
  %v3817 = vadd.f32 %v3412, %v2281
  %v3818 = vadd.f32 %v3417, %v2282
  %v3819 = vadd.f32 %v3422, %v2283
  %v3820 = vadd.f32 %v3427, %v2284
  %v3821 = vadd.f32 %v3432, %v2285
  %v3822 = vadd.f32 %v3437, %v2286
  %v3823 = vadd.f32 %v3442, %v2287
  %v3824 = vadd.f32 %v3447, %v2288
  %v3825 = vadd.f32 %v3452, %v2289
  %v3826 = vadd.f32 %v3457, %v2290
  %v3827 = vadd.f32 %v3462, %v2291
  %v3828 = vadd.f32 %v3467, %v2292
  %v3829 = vadd.f32 %v3472, %v2293
  %v3830 = vadd.f32 %v3477, %v2294
  %v3831 = vadd.f32 %v3482, %v2295
  %v3832 = vadd.f32 %v3487, %v2296
  %v3833 = vadd.f32 %v3492, %v2297
  %v3834 = vadd.f32 %v3497, %v2298
  %v3835 = vadd.f32 %v3502, %v2299
  %v3836 = vadd.f32 %v3507, %v2300
  %v3837 = vadd.f32 %v3512, %v2301
  %v3838 = vadd.f32 %v3517, %v2302
  %v3839 = vadd.f32 %v3522, %v2303
  %v3840 = vadd.f32 %v3527, %v2304
  %v3841 = vadd.f32 %v3532, %v2305
  %v3842 = vadd.f32 %v3537, %v2306
  %v3843 = vadd.f32 %v3542, %v2307
  %v3844 = vadd.f32 %v3547, %v2308
  %v3845 = vadd.f32 %v3552, %v2309
  %v3846 = vadd.f32 %v3557, %v2310
  %v3847 = vadd.f32 %v3562, %v2311
  %v3848 = vadd.f32 %v3567, %v2312
  %v3849 = vadd.f32 %v3572, %v2313
  %v3850 = vadd.f32 %v3577, %v2314
  %v3851 = vadd.f32 %v3582, %v2315
  %v3852 = vadd.f32 %v3587, %v2316
  %v3853 = vadd.f32 %v3592, %v2317
  %v3854 = vadd.f32 %v3597, %v2318
  %vm3855 = vcmp.eq.s32.totalorder %v780, 32
  %3857 = vset.pattern.permute.xlu0 0
  %3858 = vperm.xlu0 %3857, %v267
  %v3859 = vpop.permute.xlu0 %3858
  %3862 = vset.pattern.permute.xlu0 0
  %3863 = vperm.xlu0 %3862, %v268
  %v3864 = vpop.permute.xlu0 %3863
  %3867 = vset.pattern.permute.xlu0 0
  %3868 = vperm.xlu0 %3867, %v269
  %v3869 = vpop.permute.xlu0 %3868
  %3872 = vset.pattern.permute.xlu0 0
  %3873 = vperm.xlu0 %3872, %v270
  %v3874 = vpop.permute.xlu0 %3873
  %3877 = vset.pattern.permute.xlu0 0
  %3878 = vperm.xlu0 %3877, %v271
  %v3879 = vpop.permute.xlu0 %3878
  %3882 = vset.pattern.permute.xlu0 0
  %3883 = vperm.xlu0 %3882, %v272
  %v3884 = vpop.permute.xlu0 %3883
  %3887 = vset.pattern.permute.xlu0 0
  %3888 = vperm.xlu0 %3887, %v273
  %v3889 = vpop.permute.xlu0 %3888
  %3892 = vset.pattern.permute.xlu0 0
  %3893 = vperm.xlu0 %3892, %v274
  %v3894 = vpop.permute.xlu0 %3893
  %3897 = vset.pattern.permute.xlu0 0
  %3898 = vperm.xlu0 %3897, %v275
  %v3899 = vpop.permute.xlu0 %3898
  %3902 = vset.pattern.permute.xlu0 0
  %3903 = vperm.xlu0 %3902, %v276
  %v3904 = vpop.permute.xlu0 %3903
  %3907 = vset.pattern.permute.xlu0 0
  %3908 = vperm.xlu0 %3907, %v277
  %v3909 = vpop.permute.xlu0 %3908
  %3912 = vset.pattern.permute.xlu0 0
  %3913 = vperm.xlu0 %3912, %v278
  %v3914 = vpop.permute.xlu0 %3913
  %3917 = vset.pattern.permute.xlu0 0
  %3918 = vperm.xlu0 %3917, %v279
  %v3919 = vpop.permute.xlu0 %3918
  %3922 = vset.pattern.permute.xlu0 0
  %3923 = vperm.xlu0 %3922, %v280
  %v3924 = vpop.permute.xlu0 %3923
  %3927 = vset.pattern.permute.xlu0 0
  %3928 = vperm.xlu0 %3927, %v281
  %v3929 = vpop.permute.xlu0 %3928
  %3932 = vset.pattern.permute.xlu0 0
  %3933 = vperm.xlu0 %3932, %v282
  %v3934 = vpop.permute.xlu0 %3933
  %3937 = vset.pattern.permute.xlu0 0
  %3938 = vperm.xlu0 %3937, %v283
  %v3939 = vpop.permute.xlu0 %3938
  %3942 = vset.pattern.permute.xlu0 0
  %3943 = vperm.xlu0 %3942, %v284
  %v3944 = vpop.permute.xlu0 %3943
  %3947 = vset.pattern.permute.xlu0 0
  %3948 = vperm.xlu0 %3947, %v285
  %v3949 = vpop.permute.xlu0 %3948
  %3952 = vset.pattern.permute.xlu0 0
  %3953 = vperm.xlu0 %3952, %v286
  %v3954 = vpop.permute.xlu0 %3953
  %3957 = vset.pattern.permute.xlu0 0
  %3958 = vperm.xlu0 %3957, %v287
  %v3959 = vpop.permute.xlu0 %3958
  %3962 = vset.pattern.permute.xlu0 0
  %3963 = vperm.xlu0 %3962, %v288
  %v3964 = vpop.permute.xlu0 %3963
  %3967 = vset.pattern.permute.xlu0 0
  %3968 = vperm.xlu0 %3967, %v289
  %v3969 = vpop.permute.xlu0 %3968
  %3972 = vset.pattern.permute.xlu0 0
  %3973 = vperm.xlu0 %3972, %v290
  %v3974 = vpop.permute.xlu0 %3973
  %3977 = vset.pattern.permute.xlu0 0
  %3978 = vperm.xlu0 %3977, %v291
  %v3979 = vpop.permute.xlu0 %3978
  %3982 = vset.pattern.permute.xlu0 0
  %3983 = vperm.xlu0 %3982, %v292
  %v3984 = vpop.permute.xlu0 %3983
  %3987 = vset.pattern.permute.xlu0 0
  %3988 = vperm.xlu0 %3987, %v293
  %v3989 = vpop.permute.xlu0 %3988
  %3992 = vset.pattern.permute.xlu0 0
  %3993 = vperm.xlu0 %3992, %v294
  %v3994 = vpop.permute.xlu0 %3993
  %3997 = vset.pattern.permute.xlu0 0
  %3998 = vperm.xlu0 %3997, %v295
  %v3999 = vpop.permute.xlu0 %3998
  %4002 = vset.pattern.permute.xlu0 0
  %4003 = vperm.xlu0 %4002, %v296
  %v4004 = vpop.permute.xlu0 %4003
  %4007 = vset.pattern.permute.xlu0 0
  %4008 = vperm.xlu0 %4007, %v297
  %v4009 = vpop.permute.xlu0 %4008
  %4012 = vset.pattern.permute.xlu0 0
  %4013 = vperm.xlu0 %4012, %v298
  %v4014 = vpop.permute.xlu0 %4013
  %4017 = vset.pattern.permute.xlu0 0
  %4018 = vperm.xlu0 %4017, %v299
  %v4019 = vpop.permute.xlu0 %4018
  %4022 = vset.pattern.permute.xlu0 0
  %4023 = vperm.xlu0 %4022, %v300
  %v4024 = vpop.permute.xlu0 %4023
  %4027 = vset.pattern.permute.xlu0 0
  %4028 = vperm.xlu0 %4027, %v301
  %v4029 = vpop.permute.xlu0 %4028
  %4032 = vset.pattern.permute.xlu0 0
  %4033 = vperm.xlu0 %4032, %v302
  %v4034 = vpop.permute.xlu0 %4033
  %4037 = vset.pattern.permute.xlu0 0
  %4038 = vperm.xlu0 %4037, %v303
  %v4039 = vpop.permute.xlu0 %4038
  %4042 = vset.pattern.permute.xlu0 0
  %4043 = vperm.xlu0 %4042, %v304
  %v4044 = vpop.permute.xlu0 %4043
  %4047 = vset.pattern.permute.xlu0 0
  %4048 = vperm.xlu0 %4047, %v305
  %v4049 = vpop.permute.xlu0 %4048
  %4052 = vset.pattern.permute.xlu0 0
  %4053 = vperm.xlu0 %4052, %v306
  %v4054 = vpop.permute.xlu0 %4053
  %4057 = vset.pattern.permute.xlu0 0
  %4058 = vperm.xlu0 %4057, %v307
  %v4059 = vpop.permute.xlu0 %4058
  %4062 = vset.pattern.permute.xlu0 0
  %4063 = vperm.xlu0 %4062, %v308
  %v4064 = vpop.permute.xlu0 %4063
  %4067 = vset.pattern.permute.xlu0 0
  %4068 = vperm.xlu0 %4067, %v309
  %v4069 = vpop.permute.xlu0 %4068
  %4072 = vset.pattern.permute.xlu0 0
  %4073 = vperm.xlu0 %4072, %v310
  %v4074 = vpop.permute.xlu0 %4073
  %4077 = vset.pattern.permute.xlu0 0
  %4078 = vperm.xlu0 %4077, %v311
  %v4079 = vpop.permute.xlu0 %4078
  %4082 = vset.pattern.permute.xlu0 0
  %4083 = vperm.xlu0 %4082, %v312
  %v4084 = vpop.permute.xlu0 %4083
  %4087 = vset.pattern.permute.xlu0 0
  %4088 = vperm.xlu0 %4087, %v313
  %v4089 = vpop.permute.xlu0 %4088
  %4092 = vset.pattern.permute.xlu0 0
  %4093 = vperm.xlu0 %4092, %v314
  %v4094 = vpop.permute.xlu0 %4093
  %4097 = vset.pattern.permute.xlu0 0
  %4098 = vperm.xlu0 %4097, %v315
  %v4099 = vpop.permute.xlu0 %4098
  %4102 = vset.pattern.permute.xlu0 0
  %4103 = vperm.xlu0 %4102, %v316
  %v4104 = vpop.permute.xlu0 %4103
  %4107 = vset.pattern.permute.xlu0 0
  %4108 = vperm.xlu0 %4107, %v317
  %v4109 = vpop.permute.xlu0 %4108
  %4112 = vset.pattern.permute.xlu0 0
  %4113 = vperm.xlu0 %4112, %v318
  %v4114 = vpop.permute.xlu0 %4113
  %4117 = vset.pattern.permute.xlu0 0
  %4118 = vperm.xlu0 %4117, %v319
  %v4119 = vpop.permute.xlu0 %4118
  %4122 = vset.pattern.permute.xlu0 0
  %4123 = vperm.xlu0 %4122, %v320
  %v4124 = vpop.permute.xlu0 %4123
  %4127 = vset.pattern.permute.xlu0 0
  %4128 = vperm.xlu0 %4127, %v321
  %v4129 = vpop.permute.xlu0 %4128
  %4132 = vset.pattern.permute.xlu0 0
  %4133 = vperm.xlu0 %4132, %v322
  %v4134 = vpop.permute.xlu0 %4133
  %4137 = vset.pattern.permute.xlu0 0
  %4138 = vperm.xlu0 %4137, %v323
  %v4139 = vpop.permute.xlu0 %4138
  %4142 = vset.pattern.permute.xlu0 0
  %4143 = vperm.xlu0 %4142, %v324
  %v4144 = vpop.permute.xlu0 %4143
  %4147 = vset.pattern.permute.xlu0 0
  %4148 = vperm.xlu0 %4147, %v325
  %v4149 = vpop.permute.xlu0 %4148
  %4152 = vset.pattern.permute.xlu0 0
  %4153 = vperm.xlu0 %4152, %v326
  %v4154 = vpop.permute.xlu0 %4153
  %4157 = vset.pattern.permute.xlu0 0
  %4158 = vperm.xlu0 %4157, %v327
  %v4159 = vpop.permute.xlu0 %4158
  %4162 = vset.pattern.permute.xlu0 0
  %4163 = vperm.xlu0 %4162, %v328
  %v4164 = vpop.permute.xlu0 %4163
  %4167 = vset.pattern.permute.xlu0 0
  %4168 = vperm.xlu0 %4167, %v329
  %v4169 = vpop.permute.xlu0 %4168
  %4172 = vset.pattern.permute.xlu0 0
  %4173 = vperm.xlu0 %4172, %v330
  %v4174 = vpop.permute.xlu0 %4173
  %4177 = vset.pattern.permute.xlu0 0
  %4178 = vperm.xlu0 %4177, %v331
  %v4179 = vpop.permute.xlu0 %4178
  %4182 = vset.pattern.permute.xlu0 0
  %4183 = vperm.xlu0 %4182, %v332
  %v4184 = vpop.permute.xlu0 %4183
  %4187 = vset.pattern.permute.xlu0 0
  %4188 = vperm.xlu0 %4187, %v333
  %v4189 = vpop.permute.xlu0 %4188
  %4192 = vset.pattern.permute.xlu0 0
  %4193 = vperm.xlu0 %4192, %v334
  %v4194 = vpop.permute.xlu0 %4193
  %4197 = vset.pattern.permute.xlu0 0
  %4198 = vperm.xlu0 %4197, %v335
  %v4199 = vpop.permute.xlu0 %4198
  %4202 = vset.pattern.permute.xlu0 0
  %4203 = vperm.xlu0 %4202, %v336
  %v4204 = vpop.permute.xlu0 %4203
  %4207 = vset.pattern.permute.xlu0 0
  %4208 = vperm.xlu0 %4207, %v337
  %v4209 = vpop.permute.xlu0 %4208
  %4212 = vset.pattern.permute.xlu0 0
  %4213 = vperm.xlu0 %4212, %v338
  %v4214 = vpop.permute.xlu0 %4213
  %4217 = vset.pattern.permute.xlu0 0
  %4218 = vperm.xlu0 %4217, %v339
  %v4219 = vpop.permute.xlu0 %4218
  %4222 = vset.pattern.permute.xlu0 0
  %4223 = vperm.xlu0 %4222, %v340
  %v4224 = vpop.permute.xlu0 %4223
  %4227 = vset.pattern.permute.xlu0 0
  %4228 = vperm.xlu0 %4227, %v341
  %v4229 = vpop.permute.xlu0 %4228
  %4232 = vset.pattern.permute.xlu0 0
  %4233 = vperm.xlu0 %4232, %v342
  %v4234 = vpop.permute.xlu0 %4233
  %4237 = vset.pattern.permute.xlu0 0
  %4238 = vperm.xlu0 %4237, %v343
  %v4239 = vpop.permute.xlu0 %4238
  %4242 = vset.pattern.permute.xlu0 0
  %4243 = vperm.xlu0 %4242, %v344
  %v4244 = vpop.permute.xlu0 %4243
  %4247 = vset.pattern.permute.xlu0 0
  %4248 = vperm.xlu0 %4247, %v345
  %v4249 = vpop.permute.xlu0 %4248
  %4252 = vset.pattern.permute.xlu0 0
  %4253 = vperm.xlu0 %4252, %v346
  %v4254 = vpop.permute.xlu0 %4253
  %4257 = vset.pattern.permute.xlu0 0
  %4258 = vperm.xlu0 %4257, %v347
  %v4259 = vpop.permute.xlu0 %4258
  %4262 = vset.pattern.permute.xlu0 0
  %4263 = vperm.xlu0 %4262, %v348
  %v4264 = vpop.permute.xlu0 %4263
  %4267 = vset.pattern.permute.xlu0 0
  %4268 = vperm.xlu0 %4267, %v349
  %v4269 = vpop.permute.xlu0 %4268
  %4272 = vset.pattern.permute.xlu0 0
  %4273 = vperm.xlu0 %4272, %v350
  %v4274 = vpop.permute.xlu0 %4273
  %4277 = vset.pattern.permute.xlu0 0
  %4278 = vperm.xlu0 %4277, %v351
  %v4279 = vpop.permute.xlu0 %4278
  %4282 = vset.pattern.permute.xlu0 0
  %4283 = vperm.xlu0 %4282, %v352
  %v4284 = vpop.permute.xlu0 %4283
  %4287 = vset.pattern.permute.xlu0 0
  %4288 = vperm.xlu0 %4287, %v353
  %v4289 = vpop.permute.xlu0 %4288
  %4292 = vset.pattern.permute.xlu0 0
  %4293 = vperm.xlu0 %4292, %v354
  %v4294 = vpop.permute.xlu0 %4293
  %4297 = vset.pattern.permute.xlu0 0
  %4298 = vperm.xlu0 %4297, %v355
  %v4299 = vpop.permute.xlu0 %4298
  %4302 = vset.pattern.permute.xlu0 0
  %4303 = vperm.xlu0 %4302, %v356
  %v4304 = vpop.permute.xlu0 %4303
  %4307 = vset.pattern.permute.xlu0 0
  %4308 = vperm.xlu0 %4307, %v357
  %v4309 = vpop.permute.xlu0 %4308
  %4312 = vset.pattern.permute.xlu0 0
  %4313 = vperm.xlu0 %4312, %v358
  %v4314 = vpop.permute.xlu0 %4313
  %4317 = vset.pattern.permute.xlu0 0
  %4318 = vperm.xlu0 %4317, %v359
  %v4319 = vpop.permute.xlu0 %4318
  %4322 = vset.pattern.permute.xlu0 0
  %4323 = vperm.xlu0 %4322, %v360
  %v4324 = vpop.permute.xlu0 %4323
  %4327 = vset.pattern.permute.xlu0 0
  %4328 = vperm.xlu0 %4327, %v361
  %v4329 = vpop.permute.xlu0 %4328
  %4332 = vset.pattern.permute.xlu0 0
  %4333 = vperm.xlu0 %4332, %v362
  %v4334 = vpop.permute.xlu0 %4333
  %4337 = vset.pattern.permute.xlu0 0
  %4338 = vperm.xlu0 %4337, %v363
  %v4339 = vpop.permute.xlu0 %4338
  %4342 = vset.pattern.permute.xlu0 0
  %4343 = vperm.xlu0 %4342, %v364
  %v4344 = vpop.permute.xlu0 %4343
  %4347 = vset.pattern.permute.xlu0 0
  %4348 = vperm.xlu0 %4347, %v365
  %v4349 = vpop.permute.xlu0 %4348
  %4352 = vset.pattern.permute.xlu0 0
  %4353 = vperm.xlu0 %4352, %v366
  %v4354 = vpop.permute.xlu0 %4353
  %4357 = vset.pattern.permute.xlu0 0
  %4358 = vperm.xlu0 %4357, %v367
  %v4359 = vpop.permute.xlu0 %4358
  %4362 = vset.pattern.permute.xlu0 0
  %4363 = vperm.xlu0 %4362, %v368
  %v4364 = vpop.permute.xlu0 %4363
  %4367 = vset.pattern.permute.xlu0 0
  %4368 = vperm.xlu0 %4367, %v369
  %v4369 = vpop.permute.xlu0 %4368
  %4372 = vset.pattern.permute.xlu0 0
  %4373 = vperm.xlu0 %4372, %v370
  %v4374 = vpop.permute.xlu0 %4373
  %4377 = vset.pattern.permute.xlu0 0
  %4378 = vperm.xlu0 %4377, %v371
  %v4379 = vpop.permute.xlu0 %4378
  %4382 = vset.pattern.permute.xlu0 0
  %4383 = vperm.xlu0 %4382, %v372
  %v4384 = vpop.permute.xlu0 %4383
  %4387 = vset.pattern.permute.xlu0 0
  %4388 = vperm.xlu0 %4387, %v373
  %v4389 = vpop.permute.xlu0 %4388
  %4392 = vset.pattern.permute.xlu0 0
  %4393 = vperm.xlu0 %4392, %v374
  %v4394 = vpop.permute.xlu0 %4393
  %4397 = vset.pattern.permute.xlu0 0
  %4398 = vperm.xlu0 %4397, %v375
  %v4399 = vpop.permute.xlu0 %4398
  %4402 = vset.pattern.permute.xlu0 0
  %4403 = vperm.xlu0 %4402, %v376
  %v4404 = vpop.permute.xlu0 %4403
  %4407 = vset.pattern.permute.xlu0 0
  %4408 = vperm.xlu0 %4407, %v377
  %v4409 = vpop.permute.xlu0 %4408
  %4412 = vset.pattern.permute.xlu0 0
  %4413 = vperm.xlu0 %4412, %v378
  %v4414 = vpop.permute.xlu0 %4413
  %4417 = vset.pattern.permute.xlu0 0
  %4418 = vperm.xlu0 %4417, %v379
  %v4419 = vpop.permute.xlu0 %4418
  %4422 = vset.pattern.permute.xlu0 0
  %4423 = vperm.xlu0 %4422, %v380
  %v4424 = vpop.permute.xlu0 %4423
  %4427 = vset.pattern.permute.xlu0 0
  %4428 = vperm.xlu0 %4427, %v381
  %v4429 = vpop.permute.xlu0 %4428
  %4432 = vset.pattern.permute.xlu0 0
  %4433 = vperm.xlu0 %4432, %v382
  %v4434 = vpop.permute.xlu0 %4433
  %4437 = vset.pattern.permute.xlu0 0
  %4438 = vperm.xlu0 %4437, %v383
  %v4439 = vpop.permute.xlu0 %4438
  %4442 = vset.pattern.permute.xlu0 0
  %4443 = vperm.xlu0 %4442, %v384
  %v4444 = vpop.permute.xlu0 %4443
  %4447 = vset.pattern.permute.xlu0 0
  %4448 = vperm.xlu0 %4447, %v385
  %v4449 = vpop.permute.xlu0 %4448
  %4452 = vset.pattern.permute.xlu0 0
  %4453 = vperm.xlu0 %4452, %v386
  %v4454 = vpop.permute.xlu0 %4453
  %4457 = vset.pattern.permute.xlu0 0
  %4458 = vperm.xlu0 %4457, %v387
  %v4459 = vpop.permute.xlu0 %4458
  %4462 = vset.pattern.permute.xlu0 0
  %4463 = vperm.xlu0 %4462, %v388
  %v4464 = vpop.permute.xlu0 %4463
  %4467 = vset.pattern.permute.xlu0 0
  %4468 = vperm.xlu0 %4467, %v389
  %v4469 = vpop.permute.xlu0 %4468
  %4472 = vset.pattern.permute.xlu0 0
  %4473 = vperm.xlu0 %4472, %v390
  %v4474 = vpop.permute.xlu0 %4473
  %4477 = vset.pattern.permute.xlu0 0
  %4478 = vperm.xlu0 %4477, %v391
  %v4479 = vpop.permute.xlu0 %4478
  %4482 = vset.pattern.permute.xlu0 0
  %4483 = vperm.xlu0 %4482, %v392
  %v4484 = vpop.permute.xlu0 %4483
  %4487 = vset.pattern.permute.xlu0 0
  %4488 = vperm.xlu0 %4487, %v393
  %v4489 = vpop.permute.xlu0 %4488
  %4492 = vset.pattern.permute.xlu0 0
  %4493 = vperm.xlu0 %4492, %v394
  %v4494 = vpop.permute.xlu0 %4493
  %4497 = vset.pattern.permute.xlu0 0
  %4498 = vperm.xlu0 %4497, %v395
  %v4499 = vpop.permute.xlu0 %4498
  %4502 = vset.pattern.permute.xlu0 0
  %4503 = vperm.xlu0 %4502, %v396
  %v4504 = vpop.permute.xlu0 %4503
  %4507 = vset.pattern.permute.xlu0 0
  %4508 = vperm.xlu0 %4507, %v397
  %v4509 = vpop.permute.xlu0 %4508
  %4512 = vset.pattern.permute.xlu0 0
  %4513 = vperm.xlu0 %4512, %v398
  %v4514 = vpop.permute.xlu0 %4513
  %4517 = vset.pattern.permute.xlu0 0
  %4518 = vperm.xlu0 %4517, %v399
  %v4519 = vpop.permute.xlu0 %4518
  %4522 = vset.pattern.permute.xlu0 0
  %4523 = vperm.xlu0 %4522, %v400
  %v4524 = vpop.permute.xlu0 %4523
  %4527 = vset.pattern.permute.xlu0 0
  %4528 = vperm.xlu0 %4527, %v401
  %v4529 = vpop.permute.xlu0 %4528
  %4532 = vset.pattern.permute.xlu0 0
  %4533 = vperm.xlu0 %4532, %v402
  %v4534 = vpop.permute.xlu0 %4533
  %4537 = vset.pattern.permute.xlu0 0
  %4538 = vperm.xlu0 %4537, %v403
  %v4539 = vpop.permute.xlu0 %4538
  %4542 = vset.pattern.permute.xlu0 0
  %4543 = vperm.xlu0 %4542, %v404
  %v4544 = vpop.permute.xlu0 %4543
  %4547 = vset.pattern.permute.xlu0 0
  %4548 = vperm.xlu0 %4547, %v405
  %v4549 = vpop.permute.xlu0 %4548
  %4552 = vset.pattern.permute.xlu0 0
  %4553 = vperm.xlu0 %4552, %v406
  %v4554 = vpop.permute.xlu0 %4553
  %4557 = vset.pattern.permute.xlu0 0
  %4558 = vperm.xlu0 %4557, %v407
  %v4559 = vpop.permute.xlu0 %4558
  %4562 = vset.pattern.permute.xlu0 0
  %4563 = vperm.xlu0 %4562, %v408
  %v4564 = vpop.permute.xlu0 %4563
  %4567 = vset.pattern.permute.xlu0 0
  %4568 = vperm.xlu0 %4567, %v409
  %v4569 = vpop.permute.xlu0 %4568
  %4572 = vset.pattern.permute.xlu0 0
  %4573 = vperm.xlu0 %4572, %v410
  %v4574 = vpop.permute.xlu0 %4573
  %4577 = vset.pattern.permute.xlu0 0
  %4578 = vperm.xlu0 %4577, %v411
  %v4579 = vpop.permute.xlu0 %4578
  %4582 = vset.pattern.permute.xlu0 0
  %4583 = vperm.xlu0 %4582, %v412
  %v4584 = vpop.permute.xlu0 %4583
  %4587 = vset.pattern.permute.xlu0 0
  %4588 = vperm.xlu0 %4587, %v413
  %v4589 = vpop.permute.xlu0 %4588
  %4592 = vset.pattern.permute.xlu0 0
  %4593 = vperm.xlu0 %4592, %v414
  %v4594 = vpop.permute.xlu0 %4593
  %4597 = vset.pattern.permute.xlu0 0
  %4598 = vperm.xlu0 %4597, %v415
  %v4599 = vpop.permute.xlu0 %4598
  %4602 = vset.pattern.permute.xlu0 0
  %4603 = vperm.xlu0 %4602, %v416
  %v4604 = vpop.permute.xlu0 %4603
  %4607 = vset.pattern.permute.xlu0 0
  %4608 = vperm.xlu0 %4607, %v417
  %v4609 = vpop.permute.xlu0 %4608
  %4612 = vset.pattern.permute.xlu0 0
  %4613 = vperm.xlu0 %4612, %v418
  %v4614 = vpop.permute.xlu0 %4613
  %4617 = vset.pattern.permute.xlu0 0
  %4618 = vperm.xlu0 %4617, %v419
  %v4619 = vpop.permute.xlu0 %4618
  %4622 = vset.pattern.permute.xlu0 0
  %4623 = vperm.xlu0 %4622, %v420
  %v4624 = vpop.permute.xlu0 %4623
  %4627 = vset.pattern.permute.xlu0 0
  %4628 = vperm.xlu0 %4627, %v421
  %v4629 = vpop.permute.xlu0 %4628
  %4632 = vset.pattern.permute.xlu0 0
  %4633 = vperm.xlu0 %4632, %v422
  %v4634 = vpop.permute.xlu0 %4633
  %4637 = vset.pattern.permute.xlu0 0
  %4638 = vperm.xlu0 %4637, %v423
  %v4639 = vpop.permute.xlu0 %4638
  %4642 = vset.pattern.permute.xlu0 0
  %4643 = vperm.xlu0 %4642, %v424
  %v4644 = vpop.permute.xlu0 %4643
  %4647 = vset.pattern.permute.xlu0 0
  %4648 = vperm.xlu0 %4647, %v425
  %v4649 = vpop.permute.xlu0 %4648
  %4652 = vset.pattern.permute.xlu0 0
  %4653 = vperm.xlu0 %4652, %v426
  %v4654 = vpop.permute.xlu0 %4653
  %4657 = vset.pattern.permute.xlu0 0
  %4658 = vperm.xlu0 %4657, %v427
  %v4659 = vpop.permute.xlu0 %4658
  %4662 = vset.pattern.permute.xlu0 0
  %4663 = vperm.xlu0 %4662, %v428
  %v4664 = vpop.permute.xlu0 %4663
  %4667 = vset.pattern.permute.xlu0 0
  %4668 = vperm.xlu0 %4667, %v429
  %v4669 = vpop.permute.xlu0 %4668
  %4672 = vset.pattern.permute.xlu0 0
  %4673 = vperm.xlu0 %4672, %v430
  %v4674 = vpop.permute.xlu0 %4673
  %4677 = vset.pattern.permute.xlu0 0
  %4678 = vperm.xlu0 %4677, %v431
  %v4679 = vpop.permute.xlu0 %4678
  %4682 = vset.pattern.permute.xlu0 0
  %4683 = vperm.xlu0 %4682, %v432
  %v4684 = vpop.permute.xlu0 %4683
  %4687 = vset.pattern.permute.xlu0 0
  %4688 = vperm.xlu0 %4687, %v433
  %v4689 = vpop.permute.xlu0 %4688
  %4692 = vset.pattern.permute.xlu0 0
  %4693 = vperm.xlu0 %4692, %v434
  %v4694 = vpop.permute.xlu0 %4693
  %4697 = vset.pattern.permute.xlu0 0
  %4698 = vperm.xlu0 %4697, %v435
  %v4699 = vpop.permute.xlu0 %4698
  %4702 = vset.pattern.permute.xlu0 0
  %4703 = vperm.xlu0 %4702, %v436
  %v4704 = vpop.permute.xlu0 %4703
  %4707 = vset.pattern.permute.xlu0 0
  %4708 = vperm.xlu0 %4707, %v437
  %v4709 = vpop.permute.xlu0 %4708
  %4712 = vset.pattern.permute.xlu0 0
  %4713 = vperm.xlu0 %4712, %v438
  %v4714 = vpop.permute.xlu0 %4713
  %4717 = vset.pattern.permute.xlu0 0
  %4718 = vperm.xlu0 %4717, %v439
  %v4719 = vpop.permute.xlu0 %4718
  %4722 = vset.pattern.permute.xlu0 0
  %4723 = vperm.xlu0 %4722, %v440
  %v4724 = vpop.permute.xlu0 %4723
  %4727 = vset.pattern.permute.xlu0 0
  %4728 = vperm.xlu0 %4727, %v441
  %v4729 = vpop.permute.xlu0 %4728
  %4732 = vset.pattern.permute.xlu0 0
  %4733 = vperm.xlu0 %4732, %v442
  %v4734 = vpop.permute.xlu0 %4733
  %4737 = vset.pattern.permute.xlu0 0
  %4738 = vperm.xlu0 %4737, %v443
  %v4739 = vpop.permute.xlu0 %4738
  %4742 = vset.pattern.permute.xlu0 0
  %4743 = vperm.xlu0 %4742, %v444
  %v4744 = vpop.permute.xlu0 %4743
  %4747 = vset.pattern.permute.xlu0 0
  %4748 = vperm.xlu0 %4747, %v445
  %v4749 = vpop.permute.xlu0 %4748
  %4752 = vset.pattern.permute.xlu0 0
  %4753 = vperm.xlu0 %4752, %v446
  %v4754 = vpop.permute.xlu0 %4753
  %4757 = vset.pattern.permute.xlu0 0
  %4758 = vperm.xlu0 %4757, %v447
  %v4759 = vpop.permute.xlu0 %4758
  %4762 = vset.pattern.permute.xlu0 0
  %4763 = vperm.xlu0 %4762, %v448
  %v4764 = vpop.permute.xlu0 %4763
  %4767 = vset.pattern.permute.xlu0 0
  %4768 = vperm.xlu0 %4767, %v449
  %v4769 = vpop.permute.xlu0 %4768
  %4772 = vset.pattern.permute.xlu0 0
  %4773 = vperm.xlu0 %4772, %v450
  %v4774 = vpop.permute.xlu0 %4773
  %4777 = vset.pattern.permute.xlu0 0
  %4778 = vperm.xlu0 %4777, %v451
  %v4779 = vpop.permute.xlu0 %4778
  %4782 = vset.pattern.permute.xlu0 0
  %4783 = vperm.xlu0 %4782, %v452
  %v4784 = vpop.permute.xlu0 %4783
  %4787 = vset.pattern.permute.xlu0 0
  %4788 = vperm.xlu0 %4787, %v453
  %v4789 = vpop.permute.xlu0 %4788
  %4792 = vset.pattern.permute.xlu0 0
  %4793 = vperm.xlu0 %4792, %v454
  %v4794 = vpop.permute.xlu0 %4793
  %4797 = vset.pattern.permute.xlu0 0
  %4798 = vperm.xlu0 %4797, %v455
  %v4799 = vpop.permute.xlu0 %4798
  %4802 = vset.pattern.permute.xlu0 0
  %4803 = vperm.xlu0 %4802, %v456
  %v4804 = vpop.permute.xlu0 %4803
  %4807 = vset.pattern.permute.xlu0 0
  %4808 = vperm.xlu0 %4807, %v457
  %v4809 = vpop.permute.xlu0 %4808
  %4812 = vset.pattern.permute.xlu0 0
  %4813 = vperm.xlu0 %4812, %v458
  %v4814 = vpop.permute.xlu0 %4813
  %4817 = vset.pattern.permute.xlu0 0
  %4818 = vperm.xlu0 %4817, %v459
  %v4819 = vpop.permute.xlu0 %4818
  %4822 = vset.pattern.permute.xlu0 0
  %4823 = vperm.xlu0 %4822, %v460
  %v4824 = vpop.permute.xlu0 %4823
  %4827 = vset.pattern.permute.xlu0 0
  %4828 = vperm.xlu0 %4827, %v461
  %v4829 = vpop.permute.xlu0 %4828
  %4832 = vset.pattern.permute.xlu0 0
  %4833 = vperm.xlu0 %4832, %v462
  %v4834 = vpop.permute.xlu0 %4833
  %4837 = vset.pattern.permute.xlu0 0
  %4838 = vperm.xlu0 %4837, %v463
  %v4839 = vpop.permute.xlu0 %4838
  %4842 = vset.pattern.permute.xlu0 0
  %4843 = vperm.xlu0 %4842, %v464
  %v4844 = vpop.permute.xlu0 %4843
  %4847 = vset.pattern.permute.xlu0 0
  %4848 = vperm.xlu0 %4847, %v465
  %v4849 = vpop.permute.xlu0 %4848
  %4852 = vset.pattern.permute.xlu0 0
  %4853 = vperm.xlu0 %4852, %v466
  %v4854 = vpop.permute.xlu0 %4853
  %4857 = vset.pattern.permute.xlu0 0
  %4858 = vperm.xlu0 %4857, %v467
  %v4859 = vpop.permute.xlu0 %4858
  %4862 = vset.pattern.permute.xlu0 0
  %4863 = vperm.xlu0 %4862, %v468
  %v4864 = vpop.permute.xlu0 %4863
  %4867 = vset.pattern.permute.xlu0 0
  %4868 = vperm.xlu0 %4867, %v469
  %v4869 = vpop.permute.xlu0 %4868
  %4872 = vset.pattern.permute.xlu0 0
  %4873 = vperm.xlu0 %4872, %v470
  %v4874 = vpop.permute.xlu0 %4873
  %4877 = vset.pattern.permute.xlu0 0
  %4878 = vperm.xlu0 %4877, %v471
  %v4879 = vpop.permute.xlu0 %4878
  %4882 = vset.pattern.permute.xlu0 0
  %4883 = vperm.xlu0 %4882, %v472
  %v4884 = vpop.permute.xlu0 %4883
  %4887 = vset.pattern.permute.xlu0 0
  %4888 = vperm.xlu0 %4887, %v473
  %v4889 = vpop.permute.xlu0 %4888
  %4892 = vset.pattern.permute.xlu0 0
  %4893 = vperm.xlu0 %4892, %v474
  %v4894 = vpop.permute.xlu0 %4893
  %4897 = vset.pattern.permute.xlu0 0
  %4898 = vperm.xlu0 %4897, %v475
  %v4899 = vpop.permute.xlu0 %4898
  %4902 = vset.pattern.permute.xlu0 0
  %4903 = vperm.xlu0 %4902, %v476
  %v4904 = vpop.permute.xlu0 %4903
  %4907 = vset.pattern.permute.xlu0 0
  %4908 = vperm.xlu0 %4907, %v477
  %v4909 = vpop.permute.xlu0 %4908
  %4912 = vset.pattern.permute.xlu0 0
  %4913 = vperm.xlu0 %4912, %v478
  %v4914 = vpop.permute.xlu0 %4913
  %4917 = vset.pattern.permute.xlu0 0
  %4918 = vperm.xlu0 %4917, %v479
  %v4919 = vpop.permute.xlu0 %4918
  %4922 = vset.pattern.permute.xlu0 0
  %4923 = vperm.xlu0 %4922, %v480
  %v4924 = vpop.permute.xlu0 %4923
  %4927 = vset.pattern.permute.xlu0 0
  %4928 = vperm.xlu0 %4927, %v481
  %v4929 = vpop.permute.xlu0 %4928
  %4932 = vset.pattern.permute.xlu0 0
  %4933 = vperm.xlu0 %4932, %v482
  %v4934 = vpop.permute.xlu0 %4933
  %4937 = vset.pattern.permute.xlu0 0
  %4938 = vperm.xlu0 %4937, %v483
  %v4939 = vpop.permute.xlu0 %4938
  %4942 = vset.pattern.permute.xlu0 0
  %4943 = vperm.xlu0 %4942, %v484
  %v4944 = vpop.permute.xlu0 %4943
  %4947 = vset.pattern.permute.xlu0 0
  %4948 = vperm.xlu0 %4947, %v485
  %v4949 = vpop.permute.xlu0 %4948
  %4952 = vset.pattern.permute.xlu0 0
  %4953 = vperm.xlu0 %4952, %v486
  %v4954 = vpop.permute.xlu0 %4953
  %4957 = vset.pattern.permute.xlu0 0
  %4958 = vperm.xlu0 %4957, %v487
  %v4959 = vpop.permute.xlu0 %4958
  %4962 = vset.pattern.permute.xlu0 0
  %4963 = vperm.xlu0 %4962, %v488
  %v4964 = vpop.permute.xlu0 %4963
  %4967 = vset.pattern.permute.xlu0 0
  %4968 = vperm.xlu0 %4967, %v489
  %v4969 = vpop.permute.xlu0 %4968
  %4972 = vset.pattern.permute.xlu0 0
  %4973 = vperm.xlu0 %4972, %v490
  %v4974 = vpop.permute.xlu0 %4973
  %4977 = vset.pattern.permute.xlu0 0
  %4978 = vperm.xlu0 %4977, %v491
  %v4979 = vpop.permute.xlu0 %4978
  %4982 = vset.pattern.permute.xlu0 0
  %4983 = vperm.xlu0 %4982, %v492
  %v4984 = vpop.permute.xlu0 %4983
  %4987 = vset.pattern.permute.xlu0 0
  %4988 = vperm.xlu0 %4987, %v493
  %v4989 = vpop.permute.xlu0 %4988
  %4992 = vset.pattern.permute.xlu0 0
  %4993 = vperm.xlu0 %4992, %v494
  %v4994 = vpop.permute.xlu0 %4993
  %4997 = vset.pattern.permute.xlu0 0
  %4998 = vperm.xlu0 %4997, %v495
  %v4999 = vpop.permute.xlu0 %4998
  %5002 = vset.pattern.permute.xlu0 0
  %5003 = vperm.xlu0 %5002, %v496
  %v5004 = vpop.permute.xlu0 %5003
  %5007 = vset.pattern.permute.xlu0 0
  %5008 = vperm.xlu0 %5007, %v497
  %v5009 = vpop.permute.xlu0 %5008
  %5012 = vset.pattern.permute.xlu0 0
  %5013 = vperm.xlu0 %5012, %v498
  %v5014 = vpop.permute.xlu0 %5013
  %5017 = vset.pattern.permute.xlu0 0
  %5018 = vperm.xlu0 %5017, %v499
  %v5019 = vpop.permute.xlu0 %5018
  %5022 = vset.pattern.permute.xlu0 0
  %5023 = vperm.xlu0 %5022, %v500
  %v5024 = vpop.permute.xlu0 %5023
  %5027 = vset.pattern.permute.xlu0 0
  %5028 = vperm.xlu0 %5027, %v501
  %v5029 = vpop.permute.xlu0 %5028
  %5032 = vset.pattern.permute.xlu0 0
  %5033 = vperm.xlu0 %5032, %v502
  %v5034 = vpop.permute.xlu0 %5033
  %5037 = vset.pattern.permute.xlu0 0
  %5038 = vperm.xlu0 %5037, %v503
  %v5039 = vpop.permute.xlu0 %5038
  %5042 = vset.pattern.permute.xlu0 0
  %5043 = vperm.xlu0 %5042, %v504
  %v5044 = vpop.permute.xlu0 %5043
  %5047 = vset.pattern.permute.xlu0 0
  %5048 = vperm.xlu0 %5047, %v505
  %v5049 = vpop.permute.xlu0 %5048
  %5052 = vset.pattern.permute.xlu0 0
  %5053 = vperm.xlu0 %5052, %v506
  %v5054 = vpop.permute.xlu0 %5053
  %5057 = vset.pattern.permute.xlu0 0
  %5058 = vperm.xlu0 %5057, %v507
  %v5059 = vpop.permute.xlu0 %5058
  %5062 = vset.pattern.permute.xlu0 0
  %5063 = vperm.xlu0 %5062, %v508
  %v5064 = vpop.permute.xlu0 %5063
  %5067 = vset.pattern.permute.xlu0 0
  %5068 = vperm.xlu0 %5067, %v509
  %v5069 = vpop.permute.xlu0 %5068
  %5072 = vset.pattern.permute.xlu0 0
  %5073 = vperm.xlu0 %5072, %v510
  %v5074 = vpop.permute.xlu0 %5073
  %5077 = vset.pattern.permute.xlu0 0
  %5078 = vperm.xlu0 %5077, %v511
  %v5079 = vpop.permute.xlu0 %5078
  %5082 = vset.pattern.permute.xlu0 0
  %5083 = vperm.xlu0 %5082, %v512
  %v5084 = vpop.permute.xlu0 %5083
  %5087 = vset.pattern.permute.xlu0 0
  %5088 = vperm.xlu0 %5087, %v513
  %v5089 = vpop.permute.xlu0 %5088
  %5092 = vset.pattern.permute.xlu0 0
  %5093 = vperm.xlu0 %5092, %v514
  %v5094 = vpop.permute.xlu0 %5093
  %5097 = vset.pattern.permute.xlu0 0
  %5098 = vperm.xlu0 %5097, %v515
  %v5099 = vpop.permute.xlu0 %5098
  %5102 = vset.pattern.permute.xlu0 0
  %5103 = vperm.xlu0 %5102, %v516
  %v5104 = vpop.permute.xlu0 %5103
  %5107 = vset.pattern.permute.xlu0 0
  %5108 = vperm.xlu0 %5107, %v517
  %v5109 = vpop.permute.xlu0 %5108
  %5112 = vset.pattern.permute.xlu0 0
  %5113 = vperm.xlu0 %5112, %v518
  %v5114 = vpop.permute.xlu0 %5113
  %5117 = vset.pattern.permute.xlu0 0
  %5118 = vperm.xlu0 %5117, %v519
  %v5119 = vpop.permute.xlu0 %5118
  %5122 = vset.pattern.permute.xlu0 0
  %5123 = vperm.xlu0 %5122, %v520
  %v5124 = vpop.permute.xlu0 %5123
  %5127 = vset.pattern.permute.xlu0 0
  %5128 = vperm.xlu0 %5127, %v521
  %v5129 = vpop.permute.xlu0 %5128
  %5132 = vset.pattern.permute.xlu0 0
  %5133 = vperm.xlu0 %5132, %v522
  %v5134 = vpop.permute.xlu0 %5133
  %v5136 = vsel %vm3855, %v3859, %v3599
  %v5137 = vsel %vm3855, %v3864, %v3600
  %v5138 = vsel %vm3855, %v3869, %v3601
  %v5139 = vsel %vm3855, %v3874, %v3602
  %v5140 = vsel %vm3855, %v3879, %v3603
  %v5141 = vsel %vm3855, %v3884, %v3604
  %v5142 = vsel %vm3855, %v3889, %v3605
  %v5143 = vsel %vm3855, %v3894, %v3606
  %v5144 = vsel %vm3855, %v3899, %v3607
  %v5145 = vsel %vm3855, %v3904, %v3608
  %v5146 = vsel %vm3855, %v3909, %v3609
  %v5147 = vsel %vm3855, %v3914, %v3610
  %v5148 = vsel %vm3855, %v3919, %v3611
  %v5149 = vsel %vm3855, %v3924, %v3612
  %v5150 = vsel %vm3855, %v3929, %v3613
  %v5151 = vsel %vm3855, %v3934, %v3614
  %v5152 = vsel %vm3855, %v3939, %v3615
  %v5153 = vsel %vm3855, %v3944, %v3616
  %v5154 = vsel %vm3855, %v3949, %v3617
  %v5155 = vsel %vm3855, %v3954, %v3618
  %v5156 = vsel %vm3855, %v3959, %v3619
  %v5157 = vsel %vm3855, %v3964, %v3620
  %v5158 = vsel %vm3855, %v3969, %v3621
  %v5159 = vsel %vm3855, %v3974, %v3622
  %v5160 = vsel %vm3855, %v3979, %v3623
  %v5161 = vsel %vm3855, %v3984, %v3624
  %v5162 = vsel %vm3855, %v3989, %v3625
  %v5163 = vsel %vm3855, %v3994, %v3626
  %v5164 = vsel %vm3855, %v3999, %v3627
  %v5165 = vsel %vm3855, %v4004, %v3628
  %v5166 = vsel %vm3855, %v4009, %v3629
  %v5167 = vsel %vm3855, %v4014, %v3630
  %v5168 = vsel %vm3855, %v4019, %v3631
  %v5169 = vsel %vm3855, %v4024, %v3632
  %v5170 = vsel %vm3855, %v4029, %v3633
  %v5171 = vsel %vm3855, %v4034, %v3634
  %v5172 = vsel %vm3855, %v4039, %v3635
  %v5173 = vsel %vm3855, %v4044, %v3636
  %v5174 = vsel %vm3855, %v4049, %v3637
  %v5175 = vsel %vm3855, %v4054, %v3638
  %v5176 = vsel %vm3855, %v4059, %v3639
  %v5177 = vsel %vm3855, %v4064, %v3640
  %v5178 = vsel %vm3855, %v4069, %v3641
  %v5179 = vsel %vm3855, %v4074, %v3642
  %v5180 = vsel %vm3855, %v4079, %v3643
  %v5181 = vsel %vm3855, %v4084, %v3644
  %v5182 = vsel %vm3855, %v4089, %v3645
  %v5183 = vsel %vm3855, %v4094, %v3646
  %v5184 = vsel %vm3855, %v4099, %v3647
  %v5185 = vsel %vm3855, %v4104, %v3648
  %v5186 = vsel %vm3855, %v4109, %v3649
  %v5187 = vsel %vm3855, %v4114, %v3650
  %v5188 = vsel %vm3855, %v4119, %v3651
  %v5189 = vsel %vm3855, %v4124, %v3652
  %v5190 = vsel %vm3855, %v4129, %v3653
  %v5191 = vsel %vm3855, %v4134, %v3654
  %v5192 = vsel %vm3855, %v4139, %v3655
  %v5193 = vsel %vm3855, %v4144, %v3656
  %v5194 = vsel %vm3855, %v4149, %v3657
  %v5195 = vsel %vm3855, %v4154, %v3658
  %v5196 = vsel %vm3855, %v4159, %v3659
  %v5197 = vsel %vm3855, %v4164, %v3660
  %v5198 = vsel %vm3855, %v4169, %v3661
  %v5199 = vsel %vm3855, %v4174, %v3662
  %v5200 = vsel %vm3855, %v4179, %v3663
  %v5201 = vsel %vm3855, %v4184, %v3664
  %v5202 = vsel %vm3855, %v4189, %v3665
  %v5203 = vsel %vm3855, %v4194, %v3666
  %v5204 = vsel %vm3855, %v4199, %v3667
  %v5205 = vsel %vm3855, %v4204, %v3668
  %v5206 = vsel %vm3855, %v4209, %v3669
  %v5207 = vsel %vm3855, %v4214, %v3670
  %v5208 = vsel %vm3855, %v4219, %v3671
  %v5209 = vsel %vm3855, %v4224, %v3672
  %v5210 = vsel %vm3855, %v4229, %v3673
  %v5211 = vsel %vm3855, %v4234, %v3674
  %v5212 = vsel %vm3855, %v4239, %v3675
  %v5213 = vsel %vm3855, %v4244, %v3676
  %v5214 = vsel %vm3855, %v4249, %v3677
  %v5215 = vsel %vm3855, %v4254, %v3678
  %v5216 = vsel %vm3855, %v4259, %v3679
  %v5217 = vsel %vm3855, %v4264, %v3680
  %v5218 = vsel %vm3855, %v4269, %v3681
  %v5219 = vsel %vm3855, %v4274, %v3682
  %v5220 = vsel %vm3855, %v4279, %v3683
  %v5221 = vsel %vm3855, %v4284, %v3684
  %v5222 = vsel %vm3855, %v4289, %v3685
  %v5223 = vsel %vm3855, %v4294, %v3686
  %v5224 = vsel %vm3855, %v4299, %v3687
  %v5225 = vsel %vm3855, %v4304, %v3688
  %v5226 = vsel %vm3855, %v4309, %v3689
  %v5227 = vsel %vm3855, %v4314, %v3690
  %v5228 = vsel %vm3855, %v4319, %v3691
  %v5229 = vsel %vm3855, %v4324, %v3692
  %v5230 = vsel %vm3855, %v4329, %v3693
  %v5231 = vsel %vm3855, %v4334, %v3694
  %v5232 = vsel %vm3855, %v4339, %v3695
  %v5233 = vsel %vm3855, %v4344, %v3696
  %v5234 = vsel %vm3855, %v4349, %v3697
  %v5235 = vsel %vm3855, %v4354, %v3698
  %v5236 = vsel %vm3855, %v4359, %v3699
  %v5237 = vsel %vm3855, %v4364, %v3700
  %v5238 = vsel %vm3855, %v4369, %v3701
  %v5239 = vsel %vm3855, %v4374, %v3702
  %v5240 = vsel %vm3855, %v4379, %v3703
  %v5241 = vsel %vm3855, %v4384, %v3704
  %v5242 = vsel %vm3855, %v4389, %v3705
  %v5243 = vsel %vm3855, %v4394, %v3706
  %v5244 = vsel %vm3855, %v4399, %v3707
  %v5245 = vsel %vm3855, %v4404, %v3708
  %v5246 = vsel %vm3855, %v4409, %v3709
  %v5247 = vsel %vm3855, %v4414, %v3710
  %v5248 = vsel %vm3855, %v4419, %v3711
  %v5249 = vsel %vm3855, %v4424, %v3712
  %v5250 = vsel %vm3855, %v4429, %v3713
  %v5251 = vsel %vm3855, %v4434, %v3714
  %v5252 = vsel %vm3855, %v4439, %v3715
  %v5253 = vsel %vm3855, %v4444, %v3716
  %v5254 = vsel %vm3855, %v4449, %v3717
  %v5255 = vsel %vm3855, %v4454, %v3718
  %v5256 = vsel %vm3855, %v4459, %v3719
  %v5257 = vsel %vm3855, %v4464, %v3720
  %v5258 = vsel %vm3855, %v4469, %v3721
  %v5259 = vsel %vm3855, %v4474, %v3722
  %v5260 = vsel %vm3855, %v4479, %v3723
  %v5261 = vsel %vm3855, %v4484, %v3724
  %v5262 = vsel %vm3855, %v4489, %v3725
  %v5263 = vsel %vm3855, %v4494, %v3726
  %v5264 = vsel %vm3855, %v4499, %v3727
  %v5265 = vsel %vm3855, %v4504, %v3728
  %v5266 = vsel %vm3855, %v4509, %v3729
  %v5267 = vsel %vm3855, %v4514, %v3730
  %v5268 = vsel %vm3855, %v4519, %v3731
  %v5269 = vsel %vm3855, %v4524, %v3732
  %v5270 = vsel %vm3855, %v4529, %v3733
  %v5271 = vsel %vm3855, %v4534, %v3734
  %v5272 = vsel %vm3855, %v4539, %v3735
  %v5273 = vsel %vm3855, %v4544, %v3736
  %v5274 = vsel %vm3855, %v4549, %v3737
  %v5275 = vsel %vm3855, %v4554, %v3738
  %v5276 = vsel %vm3855, %v4559, %v3739
  %v5277 = vsel %vm3855, %v4564, %v3740
  %v5278 = vsel %vm3855, %v4569, %v3741
  %v5279 = vsel %vm3855, %v4574, %v3742
  %v5280 = vsel %vm3855, %v4579, %v3743
  %v5281 = vsel %vm3855, %v4584, %v3744
  %v5282 = vsel %vm3855, %v4589, %v3745
  %v5283 = vsel %vm3855, %v4594, %v3746
  %v5284 = vsel %vm3855, %v4599, %v3747
  %v5285 = vsel %vm3855, %v4604, %v3748
  %v5286 = vsel %vm3855, %v4609, %v3749
  %v5287 = vsel %vm3855, %v4614, %v3750
  %v5288 = vsel %vm3855, %v4619, %v3751
  %v5289 = vsel %vm3855, %v4624, %v3752
  %v5290 = vsel %vm3855, %v4629, %v3753
  %v5291 = vsel %vm3855, %v4634, %v3754
  %v5292 = vsel %vm3855, %v4639, %v3755
  %v5293 = vsel %vm3855, %v4644, %v3756
  %v5294 = vsel %vm3855, %v4649, %v3757
  %v5295 = vsel %vm3855, %v4654, %v3758
  %v5296 = vsel %vm3855, %v4659, %v3759
  %v5297 = vsel %vm3855, %v4664, %v3760
  %v5298 = vsel %vm3855, %v4669, %v3761
  %v5299 = vsel %vm3855, %v4674, %v3762
  %v5300 = vsel %vm3855, %v4679, %v3763
  %v5301 = vsel %vm3855, %v4684, %v3764
  %v5302 = vsel %vm3855, %v4689, %v3765
  %v5303 = vsel %vm3855, %v4694, %v3766
  %v5304 = vsel %vm3855, %v4699, %v3767
  %v5305 = vsel %vm3855, %v4704, %v3768
  %v5306 = vsel %vm3855, %v4709, %v3769
  %v5307 = vsel %vm3855, %v4714, %v3770
  %v5308 = vsel %vm3855, %v4719, %v3771
  %v5309 = vsel %vm3855, %v4724, %v3772
  %v5310 = vsel %vm3855, %v4729, %v3773
  %v5311 = vsel %vm3855, %v4734, %v3774
  %v5312 = vsel %vm3855, %v4739, %v3775
  %v5313 = vsel %vm3855, %v4744, %v3776
  %v5314 = vsel %vm3855, %v4749, %v3777
  %v5315 = vsel %vm3855, %v4754, %v3778
  %v5316 = vsel %vm3855, %v4759, %v3779
  %v5317 = vsel %vm3855, %v4764, %v3780
  %v5318 = vsel %vm3855, %v4769, %v3781
  %v5319 = vsel %vm3855, %v4774, %v3782
  %v5320 = vsel %vm3855, %v4779, %v3783
  %v5321 = vsel %vm3855, %v4784, %v3784
  %v5322 = vsel %vm3855, %v4789, %v3785
  %v5323 = vsel %vm3855, %v4794, %v3786
  %v5324 = vsel %vm3855, %v4799, %v3787
  %v5325 = vsel %vm3855, %v4804, %v3788
  %v5326 = vsel %vm3855, %v4809, %v3789
  %v5327 = vsel %vm3855, %v4814, %v3790
  %v5328 = vsel %vm3855, %v4819, %v3791
  %v5329 = vsel %vm3855, %v4824, %v3792
  %v5330 = vsel %vm3855, %v4829, %v3793
  %v5331 = vsel %vm3855, %v4834, %v3794
  %v5332 = vsel %vm3855, %v4839, %v3795
  %v5333 = vsel %vm3855, %v4844, %v3796
  %v5334 = vsel %vm3855, %v4849, %v3797
  %v5335 = vsel %vm3855, %v4854, %v3798
  %v5336 = vsel %vm3855, %v4859, %v3799
  %v5337 = vsel %vm3855, %v4864, %v3800
  %v5338 = vsel %vm3855, %v4869, %v3801
  %v5339 = vsel %vm3855, %v4874, %v3802
  %v5340 = vsel %vm3855, %v4879, %v3803
  %v5341 = vsel %vm3855, %v4884, %v3804
  %v5342 = vsel %vm3855, %v4889, %v3805
  %v5343 = vsel %vm3855, %v4894, %v3806
  %v5344 = vsel %vm3855, %v4899, %v3807
  %v5345 = vsel %vm3855, %v4904, %v3808
  %v5346 = vsel %vm3855, %v4909, %v3809
  %v5347 = vsel %vm3855, %v4914, %v3810
  %v5348 = vsel %vm3855, %v4919, %v3811
  %v5349 = vsel %vm3855, %v4924, %v3812
  %v5350 = vsel %vm3855, %v4929, %v3813
  %v5351 = vsel %vm3855, %v4934, %v3814
  %v5352 = vsel %vm3855, %v4939, %v3815
  %v5353 = vsel %vm3855, %v4944, %v3816
  %v5354 = vsel %vm3855, %v4949, %v3817
  %v5355 = vsel %vm3855, %v4954, %v3818
  %v5356 = vsel %vm3855, %v4959, %v3819
  %v5357 = vsel %vm3855, %v4964, %v3820
  %v5358 = vsel %vm3855, %v4969, %v3821
  %v5359 = vsel %vm3855, %v4974, %v3822
  %v5360 = vsel %vm3855, %v4979, %v3823
  %v5361 = vsel %vm3855, %v4984, %v3824
  %v5362 = vsel %vm3855, %v4989, %v3825
  %v5363 = vsel %vm3855, %v4994, %v3826
  %v5364 = vsel %vm3855, %v4999, %v3827
  %v5365 = vsel %vm3855, %v5004, %v3828
  %v5366 = vsel %vm3855, %v5009, %v3829
  %v5367 = vsel %vm3855, %v5014, %v3830
  %v5368 = vsel %vm3855, %v5019, %v3831
  %v5369 = vsel %vm3855, %v5024, %v3832
  %v5370 = vsel %vm3855, %v5029, %v3833
  %v5371 = vsel %vm3855, %v5034, %v3834
  %v5372 = vsel %vm3855, %v5039, %v3835
  %v5373 = vsel %vm3855, %v5044, %v3836
  %v5374 = vsel %vm3855, %v5049, %v3837
  %v5375 = vsel %vm3855, %v5054, %v3838
  %v5376 = vsel %vm3855, %v5059, %v3839
  %v5377 = vsel %vm3855, %v5064, %v3840
  %v5378 = vsel %vm3855, %v5069, %v3841
  %v5379 = vsel %vm3855, %v5074, %v3842
  %v5380 = vsel %vm3855, %v5079, %v3843
  %v5381 = vsel %vm3855, %v5084, %v3844
  %v5382 = vsel %vm3855, %v5089, %v3845
  %v5383 = vsel %vm3855, %v5094, %v3846
  %v5384 = vsel %vm3855, %v5099, %v3847
  %v5385 = vsel %vm3855, %v5104, %v3848
  %v5386 = vsel %vm3855, %v5109, %v3849
  %v5387 = vsel %vm3855, %v5114, %v3850
  %v5388 = vsel %vm3855, %v5119, %v3851
  %v5389 = vsel %vm3855, %v5124, %v3852
  %v5390 = vsel %vm3855, %v5129, %v3853
  %v5391 = vsel %vm3855, %v5134, %v3854
  %vm5392 = vcmask 269312
  %5393 = vst.msk [vmem:[%s2] sm:$0xff] %vm5392, %v5136
  %5394 = vst.msk [vmem:[%s2 + $0x8] sm:$0xff] %vm5392, %v5137
  %5395 = vst.msk [vmem:[%s2 + $0x10] sm:$0xff] %vm5392, %v5138
  %5396 = vst.msk [vmem:[%s2 + $0x18] sm:$0xff] %vm5392, %v5139
  %5397 = vst.msk [vmem:[%s2 + $0x20] sm:$0xff] %vm5392, %v5140
  %5398 = vst.msk [vmem:[%s2 + $0x28] sm:$0xff] %vm5392, %v5141
  %5399 = vst.msk [vmem:[%s2 + $0x30] sm:$0xff] %vm5392, %v5142
  %5400 = vst.msk [vmem:[%s2 + $0x38] sm:$0xff] %vm5392, %v5143
  %5401 = vst.msk [vmem:[%s2 + $0x40] sm:$0xff] %vm5392, %v5144
  %5402 = vst.msk [vmem:[%s2 + $0x48] sm:$0xff] %vm5392, %v5145
  %5403 = vst.msk [vmem:[%s2 + $0x50] sm:$0xff] %vm5392, %v5146
  %5404 = vst.msk [vmem:[%s2 + $0x58] sm:$0xff] %vm5392, %v5147
  %5405 = vst.msk [vmem:[%s2 + $0x60] sm:$0xff] %vm5392, %v5148
  %5406 = vst.msk [vmem:[%s2 + $0x68] sm:$0xff] %vm5392, %v5149
  %5407 = vst.msk [vmem:[%s2 + $0x70] sm:$0xff] %vm5392, %v5150
  %5408 = vst.msk [vmem:[%s2 + $0x78] sm:$0xff] %vm5392, %v5151
  %5409 = vst.msk [vmem:[%s2 + $0x80] sm:$0xff] %vm5392, %v5152
  %5410 = vst.msk [vmem:[%s2 + $0x88] sm:$0xff] %vm5392, %v5153
  %5411 = vst.msk [vmem:[%s2 + $0x90] sm:$0xff] %vm5392, %v5154
  %5412 = vst.msk [vmem:[%s2 + $0x98] sm:$0xff] %vm5392, %v5155
  %5413 = vst.msk [vmem:[%s2 + $0xa0] sm:$0xff] %vm5392, %v5156
  %5414 = vst.msk [vmem:[%s2 + $0xa8] sm:$0xff] %vm5392, %v5157
  %5415 = vst.msk [vmem:[%s2 + $0xb0] sm:$0xff] %vm5392, %v5158
  %5416 = vst.msk [vmem:[%s2 + $0xb8] sm:$0xff] %vm5392, %v5159
  %5417 = vst.msk [vmem:[%s2 + $0xc0] sm:$0xff] %vm5392, %v5160
  %5418 = vst.msk [vmem:[%s2 + $0xc8] sm:$0xff] %vm5392, %v5161
  %5419 = vst.msk [vmem:[%s2 + $0xd0] sm:$0xff] %vm5392, %v5162
  %5420 = vst.msk [vmem:[%s2 + $0xd8] sm:$0xff] %vm5392, %v5163
  %5421 = vst.msk [vmem:[%s2 + $0xe0] sm:$0xff] %vm5392, %v5164
  %5422 = vst.msk [vmem:[%s2 + $0xe8] sm:$0xff] %vm5392, %v5165
  %5423 = vst.msk [vmem:[%s2 + $0xf0] sm:$0xff] %vm5392, %v5166
  %5424 = vst.msk [vmem:[%s2 + $0xf8] sm:$0xff] %vm5392, %v5167
  %5425 = vst.msk [vmem:[%s2 + $0x100] sm:$0xff] %vm5392, %v5168
  %5426 = vst.msk [vmem:[%s2 + $0x108] sm:$0xff] %vm5392, %v5169
  %5427 = vst.msk [vmem:[%s2 + $0x110] sm:$0xff] %vm5392, %v5170
  %5428 = vst.msk [vmem:[%s2 + $0x118] sm:$0xff] %vm5392, %v5171
  %5429 = vst.msk [vmem:[%s2 + $0x120] sm:$0xff] %vm5392, %v5172
  %5430 = vst.msk [vmem:[%s2 + $0x128] sm:$0xff] %vm5392, %v5173
  %5431 = vst.msk [vmem:[%s2 + $0x130] sm:$0xff] %vm5392, %v5174
  %5432 = vst.msk [vmem:[%s2 + $0x138] sm:$0xff] %vm5392, %v5175
  %5433 = vst.msk [vmem:[%s2 + $0x140] sm:$0xff] %vm5392, %v5176
  %5434 = vst.msk [vmem:[%s2 + $0x148] sm:$0xff] %vm5392, %v5177
  %5435 = vst.msk [vmem:[%s2 + $0x150] sm:$0xff] %vm5392, %v5178
  %5436 = vst.msk [vmem:[%s2 + $0x158] sm:$0xff] %vm5392, %v5179
  %5437 = vst.msk [vmem:[%s2 + $0x160] sm:$0xff] %vm5392, %v5180
  %5438 = vst.msk [vmem:[%s2 + $0x168] sm:$0xff] %vm5392, %v5181
  %5439 = vst.msk [vmem:[%s2 + $0x170] sm:$0xff] %vm5392, %v5182
  %5440 = vst.msk [vmem:[%s2 + $0x178] sm:$0xff] %vm5392, %v5183
  %5441 = vst.msk [vmem:[%s2 + $0x180] sm:$0xff] %vm5392, %v5184
  %5442 = vst.msk [vmem:[%s2 + $0x188] sm:$0xff] %vm5392, %v5185
  %5443 = vst.msk [vmem:[%s2 + $0x190] sm:$0xff] %vm5392, %v5186
  %5444 = vst.msk [vmem:[%s2 + $0x198] sm:$0xff] %vm5392, %v5187
  %5445 = vst.msk [vmem:[%s2 + $0x1a0] sm:$0xff] %vm5392, %v5188
  %5446 = vst.msk [vmem:[%s2 + $0x1a8] sm:$0xff] %vm5392, %v5189
  %5447 = vst.msk [vmem:[%s2 + $0x1b0] sm:$0xff] %vm5392, %v5190
  %5448 = vst.msk [vmem:[%s2 + $0x1b8] sm:$0xff] %vm5392, %v5191
  %5449 = vst.msk [vmem:[%s2 + $0x1c0] sm:$0xff] %vm5392, %v5192
  %5450 = vst.msk [vmem:[%s2 + $0x1c8] sm:$0xff] %vm5392, %v5193
  %5451 = vst.msk [vmem:[%s2 + $0x1d0] sm:$0xff] %vm5392, %v5194
  %5452 = vst.msk [vmem:[%s2 + $0x1d8] sm:$0xff] %vm5392, %v5195
  %5453 = vst.msk [vmem:[%s2 + $0x1e0] sm:$0xff] %vm5392, %v5196
  %5454 = vst.msk [vmem:[%s2 + $0x1e8] sm:$0xff] %vm5392, %v5197
  %5455 = vst.msk [vmem:[%s2 + $0x1f0] sm:$0xff] %vm5392, %v5198
  %5456 = vst.msk [vmem:[%s2 + $0x1f8] sm:$0xff] %vm5392, %v5199
  %5457 = vst.msk [vmem:[%s2 + $0x200] sm:$0xff] %vm5392, %v5200
  %5458 = vst.msk [vmem:[%s2 + $0x208] sm:$0xff] %vm5392, %v5201
  %5459 = vst.msk [vmem:[%s2 + $0x210] sm:$0xff] %vm5392, %v5202
  %5460 = vst.msk [vmem:[%s2 + $0x218] sm:$0xff] %vm5392, %v5203
  %5461 = vst.msk [vmem:[%s2 + $0x220] sm:$0xff] %vm5392, %v5204
  %5462 = vst.msk [vmem:[%s2 + $0x228] sm:$0xff] %vm5392, %v5205
  %5463 = vst.msk [vmem:[%s2 + $0x230] sm:$0xff] %vm5392, %v5206
  %5464 = vst.msk [vmem:[%s2 + $0x238] sm:$0xff] %vm5392, %v5207
  %5465 = vst.msk [vmem:[%s2 + $0x240] sm:$0xff] %vm5392, %v5208
  %5466 = vst.msk [vmem:[%s2 + $0x248] sm:$0xff] %vm5392, %v5209
  %5467 = vst.msk [vmem:[%s2 + $0x250] sm:$0xff] %vm5392, %v5210
  %5468 = vst.msk [vmem:[%s2 + $0x258] sm:$0xff] %vm5392, %v5211
  %5469 = vst.msk [vmem:[%s2 + $0x260] sm:$0xff] %vm5392, %v5212
  %5470 = vst.msk [vmem:[%s2 + $0x268] sm:$0xff] %vm5392, %v5213
  %5471 = vst.msk [vmem:[%s2 + $0x270] sm:$0xff] %vm5392, %v5214
  %5472 = vst.msk [vmem:[%s2 + $0x278] sm:$0xff] %vm5392, %v5215
  %5473 = vst.msk [vmem:[%s2 + $0x280] sm:$0xff] %vm5392, %v5216
  %5474 = vst.msk [vmem:[%s2 + $0x288] sm:$0xff] %vm5392, %v5217
  %5475 = vst.msk [vmem:[%s2 + $0x290] sm:$0xff] %vm5392, %v5218
  %5476 = vst.msk [vmem:[%s2 + $0x298] sm:$0xff] %vm5392, %v5219
  %5477 = vst.msk [vmem:[%s2 + $0x2a0] sm:$0xff] %vm5392, %v5220
  %5478 = vst.msk [vmem:[%s2 + $0x2a8] sm:$0xff] %vm5392, %v5221
  %5479 = vst.msk [vmem:[%s2 + $0x2b0] sm:$0xff] %vm5392, %v5222
  %5480 = vst.msk [vmem:[%s2 + $0x2b8] sm:$0xff] %vm5392, %v5223
  %5481 = vst.msk [vmem:[%s2 + $0x2c0] sm:$0xff] %vm5392, %v5224
  %5482 = vst.msk [vmem:[%s2 + $0x2c8] sm:$0xff] %vm5392, %v5225
  %5483 = vst.msk [vmem:[%s2 + $0x2d0] sm:$0xff] %vm5392, %v5226
  %5484 = vst.msk [vmem:[%s2 + $0x2d8] sm:$0xff] %vm5392, %v5227
  %5485 = vst.msk [vmem:[%s2 + $0x2e0] sm:$0xff] %vm5392, %v5228
  %5486 = vst.msk [vmem:[%s2 + $0x2e8] sm:$0xff] %vm5392, %v5229
  %5487 = vst.msk [vmem:[%s2 + $0x2f0] sm:$0xff] %vm5392, %v5230
  %5488 = vst.msk [vmem:[%s2 + $0x2f8] sm:$0xff] %vm5392, %v5231
  %5489 = vst.msk [vmem:[%s2 + $0x300] sm:$0xff] %vm5392, %v5232
  %5490 = vst.msk [vmem:[%s2 + $0x308] sm:$0xff] %vm5392, %v5233
  %5491 = vst.msk [vmem:[%s2 + $0x310] sm:$0xff] %vm5392, %v5234
  %5492 = vst.msk [vmem:[%s2 + $0x318] sm:$0xff] %vm5392, %v5235
  %5493 = vst.msk [vmem:[%s2 + $0x320] sm:$0xff] %vm5392, %v5236
  %5494 = vst.msk [vmem:[%s2 + $0x328] sm:$0xff] %vm5392, %v5237
  %5495 = vst.msk [vmem:[%s2 + $0x330] sm:$0xff] %vm5392, %v5238
  %5496 = vst.msk [vmem:[%s2 + $0x338] sm:$0xff] %vm5392, %v5239
  %5497 = vst.msk [vmem:[%s2 + $0x340] sm:$0xff] %vm5392, %v5240
  %5498 = vst.msk [vmem:[%s2 + $0x348] sm:$0xff] %vm5392, %v5241
  %5499 = vst.msk [vmem:[%s2 + $0x350] sm:$0xff] %vm5392, %v5242
  %5500 = vst.msk [vmem:[%s2 + $0x358] sm:$0xff] %vm5392, %v5243
  %5501 = vst.msk [vmem:[%s2 + $0x360] sm:$0xff] %vm5392, %v5244
  %5502 = vst.msk [vmem:[%s2 + $0x368] sm:$0xff] %vm5392, %v5245
  %5503 = vst.msk [vmem:[%s2 + $0x370] sm:$0xff] %vm5392, %v5246
  %5504 = vst.msk [vmem:[%s2 + $0x378] sm:$0xff] %vm5392, %v5247
  %5505 = vst.msk [vmem:[%s2 + $0x380] sm:$0xff] %vm5392, %v5248
  %5506 = vst.msk [vmem:[%s2 + $0x388] sm:$0xff] %vm5392, %v5249
  %5507 = vst.msk [vmem:[%s2 + $0x390] sm:$0xff] %vm5392, %v5250
  %5508 = vst.msk [vmem:[%s2 + $0x398] sm:$0xff] %vm5392, %v5251
  %5509 = vst.msk [vmem:[%s2 + $0x3a0] sm:$0xff] %vm5392, %v5252
  %5510 = vst.msk [vmem:[%s2 + $0x3a8] sm:$0xff] %vm5392, %v5253
  %5511 = vst.msk [vmem:[%s2 + $0x3b0] sm:$0xff] %vm5392, %v5254
  %5512 = vst.msk [vmem:[%s2 + $0x3b8] sm:$0xff] %vm5392, %v5255
  %5513 = vst.msk [vmem:[%s2 + $0x3c0] sm:$0xff] %vm5392, %v5256
  %5514 = vst.msk [vmem:[%s2 + $0x3c8] sm:$0xff] %vm5392, %v5257
  %5515 = vst.msk [vmem:[%s2 + $0x3d0] sm:$0xff] %vm5392, %v5258
  %5516 = vst.msk [vmem:[%s2 + $0x3d8] sm:$0xff] %vm5392, %v5259
  %5517 = vst.msk [vmem:[%s2 + $0x3e0] sm:$0xff] %vm5392, %v5260
  %5518 = vst.msk [vmem:[%s2 + $0x3e8] sm:$0xff] %vm5392, %v5261
  %5519 = vst.msk [vmem:[%s2 + $0x3f0] sm:$0xff] %vm5392, %v5262
  %5520 = vst.msk [vmem:[%s2 + $0x3f8] sm:$0xff] %vm5392, %v5263
  %5521 = vst.msk [vmem:[%s2 + $0x400] sm:$0xff] %vm5392, %v5264
  %5522 = vst.msk [vmem:[%s2 + $0x408] sm:$0xff] %vm5392, %v5265
  %5523 = vst.msk [vmem:[%s2 + $0x410] sm:$0xff] %vm5392, %v5266
  %5524 = vst.msk [vmem:[%s2 + $0x418] sm:$0xff] %vm5392, %v5267
  %5525 = vst.msk [vmem:[%s2 + $0x420] sm:$0xff] %vm5392, %v5268
  %5526 = vst.msk [vmem:[%s2 + $0x428] sm:$0xff] %vm5392, %v5269
  %5527 = vst.msk [vmem:[%s2 + $0x430] sm:$0xff] %vm5392, %v5270
  %5528 = vst.msk [vmem:[%s2 + $0x438] sm:$0xff] %vm5392, %v5271
  %5529 = vst.msk [vmem:[%s2 + $0x440] sm:$0xff] %vm5392, %v5272
  %5530 = vst.msk [vmem:[%s2 + $0x448] sm:$0xff] %vm5392, %v5273
  %5531 = vst.msk [vmem:[%s2 + $0x450] sm:$0xff] %vm5392, %v5274
  %5532 = vst.msk [vmem:[%s2 + $0x458] sm:$0xff] %vm5392, %v5275
  %5533 = vst.msk [vmem:[%s2 + $0x460] sm:$0xff] %vm5392, %v5276
  %5534 = vst.msk [vmem:[%s2 + $0x468] sm:$0xff] %vm5392, %v5277
  %5535 = vst.msk [vmem:[%s2 + $0x470] sm:$0xff] %vm5392, %v5278
  %5536 = vst.msk [vmem:[%s2 + $0x478] sm:$0xff] %vm5392, %v5279
  %5537 = vst.msk [vmem:[%s2 + $0x480] sm:$0xff] %vm5392, %v5280
  %5538 = vst.msk [vmem:[%s2 + $0x488] sm:$0xff] %vm5392, %v5281
  %5539 = vst.msk [vmem:[%s2 + $0x490] sm:$0xff] %vm5392, %v5282
  %5540 = vst.msk [vmem:[%s2 + $0x498] sm:$0xff] %vm5392, %v5283
  %5541 = vst.msk [vmem:[%s2 + $0x4a0] sm:$0xff] %vm5392, %v5284
  %5542 = vst.msk [vmem:[%s2 + $0x4a8] sm:$0xff] %vm5392, %v5285
  %5543 = vst.msk [vmem:[%s2 + $0x4b0] sm:$0xff] %vm5392, %v5286
  %5544 = vst.msk [vmem:[%s2 + $0x4b8] sm:$0xff] %vm5392, %v5287
  %5545 = vst.msk [vmem:[%s2 + $0x4c0] sm:$0xff] %vm5392, %v5288
  %5546 = vst.msk [vmem:[%s2 + $0x4c8] sm:$0xff] %vm5392, %v5289
  %5547 = vst.msk [vmem:[%s2 + $0x4d0] sm:$0xff] %vm5392, %v5290
  %5548 = vst.msk [vmem:[%s2 + $0x4d8] sm:$0xff] %vm5392, %v5291
  %5549 = vst.msk [vmem:[%s2 + $0x4e0] sm:$0xff] %vm5392, %v5292
  %5550 = vst.msk [vmem:[%s2 + $0x4e8] sm:$0xff] %vm5392, %v5293
  %5551 = vst.msk [vmem:[%s2 + $0x4f0] sm:$0xff] %vm5392, %v5294
  %5552 = vst.msk [vmem:[%s2 + $0x4f8] sm:$0xff] %vm5392, %v5295
  %5553 = vst.msk [vmem:[%s2 + $0x500] sm:$0xff] %vm5392, %v5296
  %5554 = vst.msk [vmem:[%s2 + $0x508] sm:$0xff] %vm5392, %v5297
  %5555 = vst.msk [vmem:[%s2 + $0x510] sm:$0xff] %vm5392, %v5298
  %5556 = vst.msk [vmem:[%s2 + $0x518] sm:$0xff] %vm5392, %v5299
  %5557 = vst.msk [vmem:[%s2 + $0x520] sm:$0xff] %vm5392, %v5300
  %5558 = vst.msk [vmem:[%s2 + $0x528] sm:$0xff] %vm5392, %v5301
  %5559 = vst.msk [vmem:[%s2 + $0x530] sm:$0xff] %vm5392, %v5302
  %5560 = vst.msk [vmem:[%s2 + $0x538] sm:$0xff] %vm5392, %v5303
  %5561 = vst.msk [vmem:[%s2 + $0x540] sm:$0xff] %vm5392, %v5304
  %5562 = vst.msk [vmem:[%s2 + $0x548] sm:$0xff] %vm5392, %v5305
  %5563 = vst.msk [vmem:[%s2 + $0x550] sm:$0xff] %vm5392, %v5306
  %5564 = vst.msk [vmem:[%s2 + $0x558] sm:$0xff] %vm5392, %v5307
  %5565 = vst.msk [vmem:[%s2 + $0x560] sm:$0xff] %vm5392, %v5308
  %5566 = vst.msk [vmem:[%s2 + $0x568] sm:$0xff] %vm5392, %v5309
  %5567 = vst.msk [vmem:[%s2 + $0x570] sm:$0xff] %vm5392, %v5310
  %5568 = vst.msk [vmem:[%s2 + $0x578] sm:$0xff] %vm5392, %v5311
  %5569 = vst.msk [vmem:[%s2 + $0x580] sm:$0xff] %vm5392, %v5312
  %5570 = vst.msk [vmem:[%s2 + $0x588] sm:$0xff] %vm5392, %v5313
  %5571 = vst.msk [vmem:[%s2 + $0x590] sm:$0xff] %vm5392, %v5314
  %5572 = vst.msk [vmem:[%s2 + $0x598] sm:$0xff] %vm5392, %v5315
  %5573 = vst.msk [vmem:[%s2 + $0x5a0] sm:$0xff] %vm5392, %v5316
  %5574 = vst.msk [vmem:[%s2 + $0x5a8] sm:$0xff] %vm5392, %v5317
  %5575 = vst.msk [vmem:[%s2 + $0x5b0] sm:$0xff] %vm5392, %v5318
  %5576 = vst.msk [vmem:[%s2 + $0x5b8] sm:$0xff] %vm5392, %v5319
  %5577 = vst.msk [vmem:[%s2 + $0x5c0] sm:$0xff] %vm5392, %v5320
  %5578 = vst.msk [vmem:[%s2 + $0x5c8] sm:$0xff] %vm5392, %v5321
  %5579 = vst.msk [vmem:[%s2 + $0x5d0] sm:$0xff] %vm5392, %v5322
  %5580 = vst.msk [vmem:[%s2 + $0x5d8] sm:$0xff] %vm5392, %v5323
  %5581 = vst.msk [vmem:[%s2 + $0x5e0] sm:$0xff] %vm5392, %v5324
  %5582 = vst.msk [vmem:[%s2 + $0x5e8] sm:$0xff] %vm5392, %v5325
  %5583 = vst.msk [vmem:[%s2 + $0x5f0] sm:$0xff] %vm5392, %v5326
  %5584 = vst.msk [vmem:[%s2 + $0x5f8] sm:$0xff] %vm5392, %v5327
  %5585 = vst.msk [vmem:[%s2 + $0x600] sm:$0xff] %vm5392, %v5328
  %5586 = vst.msk [vmem:[%s2 + $0x608] sm:$0xff] %vm5392, %v5329
  %5587 = vst.msk [vmem:[%s2 + $0x610] sm:$0xff] %vm5392, %v5330
  %5588 = vst.msk [vmem:[%s2 + $0x618] sm:$0xff] %vm5392, %v5331
  %5589 = vst.msk [vmem:[%s2 + $0x620] sm:$0xff] %vm5392, %v5332
  %5590 = vst.msk [vmem:[%s2 + $0x628] sm:$0xff] %vm5392, %v5333
  %5591 = vst.msk [vmem:[%s2 + $0x630] sm:$0xff] %vm5392, %v5334
  %5592 = vst.msk [vmem:[%s2 + $0x638] sm:$0xff] %vm5392, %v5335
  %5593 = vst.msk [vmem:[%s2 + $0x640] sm:$0xff] %vm5392, %v5336
  %5594 = vst.msk [vmem:[%s2 + $0x648] sm:$0xff] %vm5392, %v5337
  %5595 = vst.msk [vmem:[%s2 + $0x650] sm:$0xff] %vm5392, %v5338
  %5596 = vst.msk [vmem:[%s2 + $0x658] sm:$0xff] %vm5392, %v5339
  %5597 = vst.msk [vmem:[%s2 + $0x660] sm:$0xff] %vm5392, %v5340
  %5598 = vst.msk [vmem:[%s2 + $0x668] sm:$0xff] %vm5392, %v5341
  %5599 = vst.msk [vmem:[%s2 + $0x670] sm:$0xff] %vm5392, %v5342
  %5600 = vst.msk [vmem:[%s2 + $0x678] sm:$0xff] %vm5392, %v5343
  %5601 = vst.msk [vmem:[%s2 + $0x680] sm:$0xff] %vm5392, %v5344
  %5602 = vst.msk [vmem:[%s2 + $0x688] sm:$0xff] %vm5392, %v5345
  %5603 = vst.msk [vmem:[%s2 + $0x690] sm:$0xff] %vm5392, %v5346
  %5604 = vst.msk [vmem:[%s2 + $0x698] sm:$0xff] %vm5392, %v5347
  %5605 = vst.msk [vmem:[%s2 + $0x6a0] sm:$0xff] %vm5392, %v5348
  %5606 = vst.msk [vmem:[%s2 + $0x6a8] sm:$0xff] %vm5392, %v5349
  %5607 = vst.msk [vmem:[%s2 + $0x6b0] sm:$0xff] %vm5392, %v5350
  %5608 = vst.msk [vmem:[%s2 + $0x6b8] sm:$0xff] %vm5392, %v5351
  %5609 = vst.msk [vmem:[%s2 + $0x6c0] sm:$0xff] %vm5392, %v5352
  %5610 = vst.msk [vmem:[%s2 + $0x6c8] sm:$0xff] %vm5392, %v5353
  %5611 = vst.msk [vmem:[%s2 + $0x6d0] sm:$0xff] %vm5392, %v5354
  %5612 = vst.msk [vmem:[%s2 + $0x6d8] sm:$0xff] %vm5392, %v5355
  %5613 = vst.msk [vmem:[%s2 + $0x6e0] sm:$0xff] %vm5392, %v5356
  %5614 = vst.msk [vmem:[%s2 + $0x6e8] sm:$0xff] %vm5392, %v5357
  %5615 = vst.msk [vmem:[%s2 + $0x6f0] sm:$0xff] %vm5392, %v5358
  %5616 = vst.msk [vmem:[%s2 + $0x6f8] sm:$0xff] %vm5392, %v5359
  %5617 = vst.msk [vmem:[%s2 + $0x700] sm:$0xff] %vm5392, %v5360
  %5618 = vst.msk [vmem:[%s2 + $0x708] sm:$0xff] %vm5392, %v5361
  %5619 = vst.msk [vmem:[%s2 + $0x710] sm:$0xff] %vm5392, %v5362
  %5620 = vst.msk [vmem:[%s2 + $0x718] sm:$0xff] %vm5392, %v5363
  %5621 = vst.msk [vmem:[%s2 + $0x720] sm:$0xff] %vm5392, %v5364
  %5622 = vst.msk [vmem:[%s2 + $0x728] sm:$0xff] %vm5392, %v5365
  %5623 = vst.msk [vmem:[%s2 + $0x730] sm:$0xff] %vm5392, %v5366
  %5624 = vst.msk [vmem:[%s2 + $0x738] sm:$0xff] %vm5392, %v5367
  %5625 = vst.msk [vmem:[%s2 + $0x740] sm:$0xff] %vm5392, %v5368
  %5626 = vst.msk [vmem:[%s2 + $0x748] sm:$0xff] %vm5392, %v5369
  %5627 = vst.msk [vmem:[%s2 + $0x750] sm:$0xff] %vm5392, %v5370
  %5628 = vst.msk [vmem:[%s2 + $0x758] sm:$0xff] %vm5392, %v5371
  %5629 = vst.msk [vmem:[%s2 + $0x760] sm:$0xff] %vm5392, %v5372
  %5630 = vst.msk [vmem:[%s2 + $0x768] sm:$0xff] %vm5392, %v5373
  %5631 = vst.msk [vmem:[%s2 + $0x770] sm:$0xff] %vm5392, %v5374
  %5632 = vst.msk [vmem:[%s2 + $0x778] sm:$0xff] %vm5392, %v5375
  %5633 = vst.msk [vmem:[%s2 + $0x780] sm:$0xff] %vm5392, %v5376
  %5634 = vst.msk [vmem:[%s2 + $0x788] sm:$0xff] %vm5392, %v5377
  %5635 = vst.msk [vmem:[%s2 + $0x790] sm:$0xff] %vm5392, %v5378
  %5636 = vst.msk [vmem:[%s2 + $0x798] sm:$0xff] %vm5392, %v5379
  %5637 = vst.msk [vmem:[%s2 + $0x7a0] sm:$0xff] %vm5392, %v5380
  %5638 = vst.msk [vmem:[%s2 + $0x7a8] sm:$0xff] %vm5392, %v5381
  %5639 = vst.msk [vmem:[%s2 + $0x7b0] sm:$0xff] %vm5392, %v5382
  %5640 = vst.msk [vmem:[%s2 + $0x7b8] sm:$0xff] %vm5392, %v5383
  %5641 = vst.msk [vmem:[%s2 + $0x7c0] sm:$0xff] %vm5392, %v5384
  %5642 = vst.msk [vmem:[%s2 + $0x7c8] sm:$0xff] %vm5392, %v5385
  %5643 = vst.msk [vmem:[%s2 + $0x7d0] sm:$0xff] %vm5392, %v5386
  %5644 = vst.msk [vmem:[%s2 + $0x7d8] sm:$0xff] %vm5392, %v5387
  %5645 = vst.msk [vmem:[%s2 + $0x7e0] sm:$0xff] %vm5392, %v5388
  %5646 = vst.msk [vmem:[%s2 + $0x7e8] sm:$0xff] %vm5392, %v5389
  %5647 = vst.msk [vmem:[%s2 + $0x7f0] sm:$0xff] %vm5392, %v5390
  %5648 = vst.msk [vmem:[%s2 + $0x7f8] sm:$0xff] %vm5392, %v5391
  // Predicated region
  $region10: #{tpu_custom_call.1} parent=0 // pred_check
    _
  $region11: #{tpu_custom_call.1} parent=0 // pred_check_branch
    %5650 = sbr.rel (0) target = $region13
  $region12: #{tpu_custom_call.1} parent=0 // pred_region
    _
  $region13: #{tpu_custom_call.1} parent=0 // pred_fallthru
    _
  // Predicated region
  $region14: #{tpu_custom_call.1} parent=0 // pred_check
    _
  $region15: #{tpu_custom_call.1} parent=0 // pred_check_branch
    %5652 = sbr.rel (0) target = $region17
  $region16: #{tpu_custom_call.1} parent=0 // pred_region
    _
  $region17: #{tpu_custom_call.1} parent=0 // pred_fallthru
    _

</llo_original>
